<compile_context>
chip_gen: v6e
topology: v6e:2x2x1
jax: 0.10.0
libtpu: 0.0.40
codegen_flags: <defaults>
</compile_context>

<pallas_src>
import functools
import math

import jax
import jax.numpy as jnp
from jax.experimental import pallas as pl
from jax.experimental.pallas import tpu as pltpu

HP = 128   # lane-padded hidden size
IP = 128   # lane-padded intermediate size
OUT_PAD = 128  # lane-dense QA-head output width


def _vmem():
    return pl.BlockSpec(memory_space=pltpu.MemorySpace.VMEM)


# ----------------------------- Pallas kernel --------------------------------

def bert_fused_kernel(
    x_ref, mask_ref,
    emb_g_ref, emb_b_ref,
    wqkv_ref, bqkv_ref, wo_ref, bo_ref, ln1_g_ref, ln1_b_ref,
    wi_ref, bi_ref, wo2_ref, bo2_ref, ln2_g_ref, ln2_b_ref,
    qa_w_ref, qa_b_ref,
    out_ref,
    *, H, num_heads, num_layers, eps):
    """Full BERT forward (embedding LN + encoder stack + QA head), one kernel.

    Shapes (M = B*S, padded dims = 128):
      x: (M, HP) pre-summed word+type+pos embeddings, lane-padded with zeros
      mask: (1, M, M) additive (-10000 for padded keys and cross-batch pairs)
      wqkv: (L, HP, 3*nh*128) head-slabbed   wo: (L, nh*128, HP)
      wi:   (L, HP, IP)                      wo2: (L, IP, HP)
      qa_w: (HP, 128) zero-padded            out: (M, 128)
    """
    f32 = jnp.float32
    bf16 = jnp.bfloat16
    nh = num_heads
    dh = H // nh
    slab = nh * 128
    scale = 1.0 / math.sqrt(dh)
    inv_h = 1.0 / H

    # lane mask selecting the real (unpadded) hidden columns
    lane_mask = (jax.lax.broadcasted_iota(jnp.int32, (1, HP), 1) < H).astype(f32)

    def layer_norm(x, g, b):
        mu = jnp.sum(x * lane_mask, axis=-1, keepdims=True) * inv_h
        d = (x - mu) * lane_mask
        var = jnp.sum(d * d, axis=-1, keepdims=True) * inv_h
        return d * jax.lax.rsqrt(var + eps) * g + b

    def gelu(x):
        # TODO(synk): exact erf-based GELU of the reference BERT; tanh
        # approximation used for portable Mosaic lowering (EUP tanh).
        c = math.sqrt(2.0 / math.pi)
        return 0.5 * x * (1.0 + jnp.tanh(c * (x + 0.044715 * x * x * x)))

    amask = mask_ref[...]                                     # (1, M, M)

    # ---- BertEmbeddings LayerNorm (word+type+pos sum precomputed in XLA) ----
    h = layer_norm(x_ref[...], emb_g_ref[...], emb_b_ref[...])  # (M, HP) f32

    # ---- encoder layers (all weights VMEM-resident at this toy config) ----
    # TODO(synk): at real BERT sizes (H>=768, L>=12) switch the layer index to
    # a grid axis (BlockSpec index_map lambda l: (l, 0, 0) on the stacked
    # weights, h as a resident accumulator, dimension_semantics 'arbitrary')
    # and add a 'parallel' M-tile axis so v7x's second TensorCore is used and
    # stacked weights never exceed the 64 MiB VMEM budget.
    for l in range(num_layers):
        hb = h.astype(bf16)

        # fused, head-slabbed QKV projection: (M, HP) @ (HP, 3*nh*128)
        qkv = jnp.dot(hb, wqkv_ref[l],
                      preferred_element_type=f32) + bqkv_ref[l]

        # head-batched q/k/v: (nh, M, 128), built from 128-aligned lane slices
        q = jnp.stack([qkv[:, 0 * slab + i * 128: 0 * slab + (i + 1) * 128]
                       for i in range(nh)], axis=0)
        k = jnp.stack([qkv[:, 1 * slab + i * 128: 1 * slab + (i + 1) * 128]
                       for i in range(nh)], axis=0)
        v = jnp.stack([qkv[:, 2 * slab + i * 128: 2 * slab + (i + 1) * 128]
                       for i in range(nh)], axis=0)

        # batched attention: one scores contraction + one context contraction
        s = jnp.einsum('nqd,nkd->nqk', q, k,
                       preferred_element_type=f32) * scale + amask
        s = s - jnp.max(s, axis=-1, keepdims=True)
        p = jnp.exp(s)
        p = p * pl.reciprocal(jnp.sum(p, axis=-1, keepdims=True), approx=True)
        ctx = jnp.einsum('nqk,nkd->nqd', p, v,
                         preferred_element_type=f32)          # (nh, M, 128)

        # context stays in vregs: lane-concat heads, then output projection
        ctx_cat = jnp.concatenate([ctx[i] for i in range(nh)], axis=-1)
        attn = jnp.dot(ctx_cat.astype(bf16), wo_ref[l],
                       preferred_element_type=f32) + bo_ref[l]
        h = layer_norm(attn + h, ln1_g_ref[l], ln1_b_ref[l])

        # feed-forward: up-proj + GELU + down-proj + residual + LayerNorm
        inter = gelu(jnp.dot(h.astype(bf16), wi_ref[l],
                             preferred_element_type=f32) + bi_ref[l])
        ffn = jnp.dot(inter.astype(bf16), wo2_ref[l],
                      preferred_element_type=f32) + bo2_ref[l]
        h = layer_norm(ffn + h, ln2_g_ref[l], ln2_b_ref[l])

    # ---- QA_Outputs head, lane-dense 128-wide output (unmasked stores) ----
    logits = jnp.dot(h.astype(bf16), qa_w_ref[...],
                     preferred_element_type=f32) + qa_b_ref[...]
    out_ref[...] = logits.astype(out_ref.dtype)


# --------------------------- parameter creation -----------------------------

def init_params(key, *, vocab=64, max_pos=64, type_vocab=2,
                hidden=32, intermediate=64, num_layers=2):
    """Deterministic stand-in for the torch checkpoint (logical shapes)."""
    def nrm(k, shape, scale=0.02):
        return scale * jax.random.normal(k, shape, dtype=jnp.float32)

    H, I, L = hidden, intermediate, num_layers
    keys = iter(jax.random.split(key, 16))
    f32 = jnp.float32
    return {
        "word_emb": nrm(next(keys), (vocab, H)),
        "pos_emb": nrm(next(keys), (max_pos, H)),
        "type_emb": nrm(next(keys), (type_vocab, H)),
        "emb_ln_g": jnp.ones((H,), f32), "emb_ln_b": jnp.zeros((H,), f32),
        "wq": nrm(next(keys), (L, H, H)), "bq": jnp.zeros((L, H), f32),
        "wk": nrm(next(keys), (L, H, H)), "bk": jnp.zeros((L, H), f32),
        "wv": nrm(next(keys), (L, H, H)), "bv": jnp.zeros((L, H), f32),
        "wo": nrm(next(keys), (L, H, H)), "bo": jnp.zeros((L, H), f32),
        "ln1_g": jnp.ones((L, H), f32), "ln1_b": jnp.zeros((L, H), f32),
        "wi": nrm(next(keys), (L, H, I)), "bi": jnp.zeros((L, I), f32),
        "wo2": nrm(next(keys), (L, I, H)), "bo2": jnp.zeros((L, H), f32),
        "ln2_g": jnp.ones((L, H), f32), "ln2_b": jnp.zeros((L, H), f32),
        "qa_w": nrm(next(keys), (H, 2)), "qa_b": jnp.zeros((2,), f32),
    }


def prepare_kernel_params(p, *, num_heads):
    """One-time re-layout of logical params into lane-aligned kernel slabs:
    per-head 128-lane Q/K/V/Wo slabs, hidden/intermediate zero-padded to 128,
    bf16 matmul weights, f32 biases / LayerNorm params."""
    f32, bf16 = jnp.float32, jnp.bfloat16
    H = p["word_emb"].shape[1]
    L, _, I = p["wi"].shape
    nh = num_heads
    dh = H // nh
    slab = nh * 128

    wqkv = jnp.zeros((L, HP, 3 * slab), f32)
    bqkv = jnp.zeros((L, 1, 3 * slab), f32)
    for t, (wn, bn) in enumerate([("wq", "bq"), ("wk", "bk"), ("wv", "bv")]):
        w, b = p[wn], p[bn]
        for hd in range(nh):
            c0 = t * slab + hd * 128
            wqkv = wqkv.at[:, :H, c0:c0 + dh].set(w[:, :, hd * dh:(hd + 1) * dh])
            bqkv = bqkv.at[:, 0, c0:c0 + dh].set(b[:, hd * dh:(hd + 1) * dh])

    wo = jnp.zeros((L, slab, HP), f32)
    for hd in range(nh):
        r0 = hd * 128
        wo = wo.at[:, r0:r0 + dh, :H].set(p["wo"][:, hd * dh:(hd + 1) * dh, :])

    def pad_vec(v, width):                      # (L, n) -> (L, 1, width)
        return jnp.zeros((v.shape[0], 1, width), f32).at[:, 0, :v.shape[1]].set(v)

    wi = jnp.zeros((L, HP, IP), f32).at[:, :H, :I].set(p["wi"])
    wo2 = jnp.zeros((L, IP, HP), f32).at[:, :I, :H].set(p["wo2"])

    return {
        # raw embedding tables (gather + pos add happen in XLA, not in-kernel)
        "word_emb": p["word_emb"], "pos_emb": p["pos_emb"],
        "type_emb": p["type_emb"],
        "emb_ln_g": jnp.zeros((1, HP), f32).at[0, :H].set(p["emb_ln_g"]),
        "emb_ln_b": jnp.zeros((1, HP), f32).at[0, :H].set(p["emb_ln_b"]),
        "wqkv": wqkv.astype(bf16), "bqkv": bqkv,
        "wo": wo.astype(bf16), "bo": pad_vec(p["bo"], HP),
        "ln1_g": pad_vec(p["ln1_g"], HP), "ln1_b": pad_vec(p["ln1_b"], HP),
        "wi": wi.astype(bf16), "bi": pad_vec(p["bi"], IP),
        "wo2": wo2.astype(bf16), "bo2": pad_vec(p["bo2"], HP),
        "ln2_g": pad_vec(p["ln2_g"], HP), "ln2_b": pad_vec(p["ln2_b"], HP),
        "qa_w": jnp.zeros((HP, OUT_PAD), f32).at[:H, :2].set(p["qa_w"]).astype(bf16),
        "qa_b": jnp.zeros((1, OUT_PAD), f32).at[0, :2].set(p["qa_b"]),
    }


# ------------------------------- forward pass -------------------------------

def pipeline_parallel_bert_forward(kp, input_ids, token_type_ids,
                                   attention_mask, *, num_heads):
    """Mirrors PipelineParallelBert.forward with a single pipeline stage:
    BertEmbeddings -> BertLayer * L -> QA_Outputs."""
    B, S = input_ids.shape
    H = kp["word_emb"].shape[1]
    L = kp["wqkv"].shape[0]
    M = B * S

    # ---- embedding gathers + pos add fused in XLA, lane-padded to (M, HP) ----
    emb = (kp["word_emb"][input_ids] + kp["type_emb"][token_type_ids]
           + kp["pos_emb"][:S][None, :, :])                    # (B, S, H)
    x = jnp.pad(emb.reshape(M, H), ((0, 0), (0, HP - H)))      # (M, HP)

    # ---- additive attention mask, block-diagonal over batch: (1, M, M) ----
    # within batch: (1 - mask) * -10000 per key (reference semantics);
    # cross-batch pairs: -10000 (exp underflows to exactly 0 after softmax).
    key_valid = attention_mask.astype(jnp.float32).reshape(1, M)
    batch_ids = jnp.repeat(jnp.arange(B), S)
    same_batch = batch_ids[:, None] == batch_ids[None, :]
    add_mask = jnp.where(same_batch, (1.0 - key_valid) * -10000.0, -10000.0)
    add_mask = add_mask[None].astype(jnp.float32)              # (1, M, M)

    kernel = functools.partial(bert_fused_kernel, H=H, num_heads=num_heads,
                               num_layers=L, eps=1e-12)

    logits_pad = pl.pallas_call(
        kernel,
        out_shape=jax.ShapeDtypeStruct((M, OUT_PAD), jnp.float32),
        in_specs=[_vmem()] * 18,
        out_specs=_vmem(),
    )(x, add_mask,
      kp["emb_ln_g"], kp["emb_ln_b"],
      kp["wqkv"], kp["bqkv"], kp["wo"], kp["bo"], kp["ln1_g"], kp["ln1_b"],
      kp["wi"], kp["bi"], kp["wo2"], kp["bo2"], kp["ln2_g"], kp["ln2_b"],
      kp["qa_w"], kp["qa_b"])

    # split(1, dim=-1) + squeeze(-1) semantics of QA_Outputs
    start_logits = logits_pad[:, 0].reshape(B, S)
    end_logits = logits_pad[:, 1].reshape(B, S)
    return start_logits, end_logits


# ----------------------------------- main ------------------------------------

if __name__ == "__main__":
    B, S = 2, 8
    VOCAB, TYPE_VOCAB, MAX_POS = 64, 2, 64
    HIDDEN, NUM_HEADS, INTERMEDIATE, NUM_LAYERS = 32, 4, 64, 2

    key = jax.random.PRNGKey(0)
    kparam, ki, kt, km = jax.random.split(key, 4)

    params = init_params(kparam, vocab=VOCAB, max_pos=MAX_POS,
                         type_vocab=TYPE_VOCAB, hidden=HIDDEN,
                         intermediate=INTERMEDIATE, num_layers=NUM_LAYERS)
    kparams = prepare_kernel_params(params, num_heads=NUM_HEADS)

    input_ids = jax.random.randint(ki, (B, S), 1, VOCAB, dtype=jnp.int32)
    token_type_ids = jax.random.randint(kt, (B, S), 0, TYPE_VOCAB,
                                        dtype=jnp.int32)
    # mostly-ones attention mask with a few padded positions
    attention_mask = (jax.random.uniform(km, (B, S)) > 0.2).astype(jnp.int32)
    attention_mask = attention_mask.at[:, 0].set(1)

    # num_heads is static model config (NOT a traced argument).
    fwd = jax.jit(functools.partial(pipeline_parallel_bert_forward,
                                    num_heads=NUM_HEADS))

    start_logits, end_logits = fwd(kparams, input_ids, token_type_ids,
                                   attention_mask)
    jax.block_until_ready((start_logits, end_logits))

    assert start_logits.shape == (B, S) and end_logits.shape == (B, S)
    assert start_logits.dtype == jnp.float32
    assert bool(jnp.all(jnp.isfinite(start_logits)))
    assert bool(jnp.all(jnp.isfinite(end_logits)))
    print("KERNEL_OK")
</pallas_src>

<mosaic_0001>
module attributes {stable_mosaic.version = 11 : i64} {
  func.func @bert_fused_kernel(%arg0: memref<16x128xf32, #tpu.memory_space<vmem>>, %arg1: memref<1x16x16xf32, #tpu.memory_space<vmem>>, %arg2: memref<1x128xf32, #tpu.memory_space<vmem>>, %arg3: memref<1x128xf32, #tpu.memory_space<vmem>>, %arg4: memref<2x128x1536xbf16, #tpu.memory_space<vmem>>, %arg5: memref<2x1x1536xf32, #tpu.memory_space<vmem>>, %arg6: memref<2x512x128xbf16, #tpu.memory_space<vmem>>, %arg7: memref<2x1x128xf32, #tpu.memory_space<vmem>>, %arg8: memref<2x1x128xf32, #tpu.memory_space<vmem>>, %arg9: memref<2x1x128xf32, #tpu.memory_space<vmem>>, %arg10: memref<2x128x128xbf16, #tpu.memory_space<vmem>>, %arg11: memref<2x1x128xf32, #tpu.memory_space<vmem>>, %arg12: memref<2x128x128xbf16, #tpu.memory_space<vmem>>, %arg13: memref<2x1x128xf32, #tpu.memory_space<vmem>>, %arg14: memref<2x1x128xf32, #tpu.memory_space<vmem>>, %arg15: memref<2x1x128xf32, #tpu.memory_space<vmem>>, %arg16: memref<128x128xbf16, #tpu.memory_space<vmem>>, %arg17: memref<1x128xf32, #tpu.memory_space<vmem>>, %arg18: memref<16x128xf32, #tpu.memory_space<vmem>>) attributes {dimension_semantics = [], scalar_prefetch = 0 : i64, scratch_operands = 0 : i64, tpu.core_type = #tpu.core_type<tc>} {
    %0 = tpu.iota {dimensions = array<i32: 1>} : vector<1x128xi32>
    %c32_i32 = arith.constant 32 : i32
    %1 = vector.broadcast %c32_i32 : i32 to vector<1x128xi32>
    %2 = arith.cmpi slt, %0, %1 : vector<1x128xi32>
    %3 = arith.extui %2 : vector<1x128xi1> to vector<1x128xi32>
    %4 = arith.sitofp %3 : vector<1x128xi32> to vector<1x128xf32>
    %c0 = arith.constant 0 : index
    %c0_0 = arith.constant 0 : index
    %c0_1 = arith.constant 0 : index
    %5 = vector.load %arg1[%c0, %c0_0, %c0_1] : memref<1x16x16xf32, #tpu.memory_space<vmem>>, vector<1x16x16xf32>
    %c0_2 = arith.constant 0 : index
    %c0_3 = arith.constant 0 : index
    %6 = vector.load %arg0[%c0_2, %c0_3] : memref<16x128xf32, #tpu.memory_space<vmem>>, vector<16x128xf32>
    %c0_4 = arith.constant 0 : index
    %c0_5 = arith.constant 0 : index
    %7 = vector.load %arg2[%c0_4, %c0_5] : memref<1x128xf32, #tpu.memory_space<vmem>>, vector<1x128xf32>
    %c0_6 = arith.constant 0 : index
    %c0_7 = arith.constant 0 : index
    %8 = vector.load %arg3[%c0_6, %c0_7] : memref<1x128xf32, #tpu.memory_space<vmem>>, vector<1x128xf32>
    %9 = vector.broadcast %4 : vector<1x128xf32> to vector<16x128xf32>
    %10 = arith.mulf %6, %9 : vector<16x128xf32>
    %cst = arith.constant dense<0.000000e+00> : vector<16xf32>
    %11 = vector.multi_reduction <add>, %10, %cst [1] : vector<16x128xf32> to vector<16xf32>
    %12 = vector.shape_cast %11 : vector<16xf32> to vector<16x1xf32>
    %cst_8 = arith.constant 3.125000e-02 : f32
    %13 = vector.broadcast %cst_8 : f32 to vector<16x1xf32>
    %14 = arith.mulf %12, %13 : vector<16x1xf32>
    %15 = vector.broadcast %14 : vector<16x1xf32> to vector<16x128xf32>
    %16 = arith.subf %6, %15 : vector<16x128xf32>
    %17 = vector.broadcast %4 : vector<1x128xf32> to vector<16x128xf32>
    %18 = arith.mulf %16, %17 : vector<16x128xf32>
    %19 = arith.mulf %18, %18 : vector<16x128xf32>
    %cst_9 = arith.constant dense<0.000000e+00> : vector<16xf32>
    %20 = vector.multi_reduction <add>, %19, %cst_9 [1] : vector<16x128xf32> to vector<16xf32>
    %21 = vector.shape_cast %20 : vector<16xf32> to vector<16x1xf32>
    %cst_10 = arith.constant 3.125000e-02 : f32
    %22 = vector.broadcast %cst_10 : f32 to vector<16x1xf32>
    %23 = arith.mulf %21, %22 : vector<16x1xf32>
    %cst_11 = arith.constant 9.99999996E-13 : f32
    %24 = vector.broadcast %cst_11 : f32 to vector<16x1xf32>
    %25 = arith.addf %23, %24 : vector<16x1xf32>
    %26 = math.rsqrt %25 : vector<16x1xf32>
    %27 = vector.broadcast %26 : vector<16x1xf32> to vector<16x128xf32>
    %28 = arith.mulf %18, %27 : vector<16x128xf32>
    %29 = vector.broadcast %7 : vector<1x128xf32> to vector<16x128xf32>
    %30 = arith.mulf %28, %29 : vector<16x128xf32>
    %31 = vector.broadcast %8 : vector<1x128xf32> to vector<16x128xf32>
    %32 = arith.addf %30, %31 : vector<16x128xf32>
    %33 = arith.truncf %32 : vector<16x128xf32> to vector<16x128xbf16>
    %c0_12 = arith.constant 0 : index
    %c0_13 = arith.constant 0 : index
    %c0_14 = arith.constant 0 : index
    %34 = vector.load %arg4[%c0_12, %c0_13, %c0_14] : memref<2x128x1536xbf16, #tpu.memory_space<vmem>>, vector<1x128x1536xbf16>
    %35 = vector.shape_cast %34 : vector<1x128x1536xbf16> to vector<128x1536xbf16>
    %cst_15 = arith.constant dense<0.000000e+00> : vector<16x1536xf32>
    %36 = tpu.matmul %33, %35, %cst_15 {dimension_numbers = #tpu.dot_dimension_numbers<[1], [0], [0], [1], [0, 0, 1, 1], [], []>} : vector<16x128xbf16>, vector<128x1536xbf16>, vector<16x1536xf32> -> vector<16x1536xf32>
    %c0_16 = arith.constant 0 : index
    %c0_17 = arith.constant 0 : index
    %c0_18 = arith.constant 0 : index
    %37 = vector.load %arg5[%c0_16, %c0_17, %c0_18] : memref<2x1x1536xf32, #tpu.memory_space<vmem>>, vector<1x1x1536xf32>
    %38 = vector.shape_cast %37 : vector<1x1x1536xf32> to vector<1x1536xf32>
    %39 = vector.broadcast %38 : vector<1x1536xf32> to vector<16x1536xf32>
    %40 = arith.addf %36, %39 : vector<16x1536xf32>
    %41 = vector.extract_strided_slice %40 {offsets = [0, 0], sizes = [16, 128], strides = [1, 1]} : vector<16x1536xf32> to vector<16x128xf32>
    %42 = vector.extract_strided_slice %40 {offsets = [0, 128], sizes = [16, 128], strides = [1, 1]} : vector<16x1536xf32> to vector<16x128xf32>
    %43 = vector.extract_strided_slice %40 {offsets = [0, 256], sizes = [16, 128], strides = [1, 1]} : vector<16x1536xf32> to vector<16x128xf32>
    %44 = vector.extract_strided_slice %40 {offsets = [0, 384], sizes = [16, 128], strides = [1, 1]} : vector<16x1536xf32> to vector<16x128xf32>
    %45 = vector.shape_cast %41 : vector<16x128xf32> to vector<1x16x128xf32>
    %46 = vector.shape_cast %42 : vector<16x128xf32> to vector<1x16x128xf32>
    %47 = vector.shape_cast %43 : vector<16x128xf32> to vector<1x16x128xf32>
    %48 = vector.shape_cast %44 : vector<16x128xf32> to vector<1x16x128xf32>
    %49 = tpu.concatenate %45, %46, %47, %48 in 0 : vector<1x16x128xf32>, vector<1x16x128xf32>, vector<1x16x128xf32>, vector<1x16x128xf32> -> vector<4x16x128xf32>
    %50 = vector.extract_strided_slice %40 {offsets = [0, 512], sizes = [16, 128], strides = [1, 1]} : vector<16x1536xf32> to vector<16x128xf32>
    %51 = vector.extract_strided_slice %40 {offsets = [0, 640], sizes = [16, 128], strides = [1, 1]} : vector<16x1536xf32> to vector<16x128xf32>
    %52 = vector.extract_strided_slice %40 {offsets = [0, 768], sizes = [16, 128], strides = [1, 1]} : vector<16x1536xf32> to vector<16x128xf32>
    %53 = vector.extract_strided_slice %40 {offsets = [0, 896], sizes = [16, 128], strides = [1, 1]} : vector<16x1536xf32> to vector<16x128xf32>
    %54 = vector.shape_cast %50 : vector<16x128xf32> to vector<1x16x128xf32>
    %55 = vector.shape_cast %51 : vector<16x128xf32> to vector<1x16x128xf32>
    %56 = vector.shape_cast %52 : vector<16x128xf32> to vector<1x16x128xf32>
    %57 = vector.shape_cast %53 : vector<16x128xf32> to vector<1x16x128xf32>
    %58 = tpu.concatenate %54, %55, %56, %57 in 0 : vector<1x16x128xf32>, vector<1x16x128xf32>, vector<1x16x128xf32>, vector<1x16x128xf32> -> vector<4x16x128xf32>
    %59 = vector.extract_strided_slice %40 {offsets = [0, 1024], sizes = [16, 128], strides = [1, 1]} : vector<16x1536xf32> to vector<16x128xf32>
    %60 = vector.extract_strided_slice %40 {offsets = [0, 1152], sizes = [16, 128], strides = [1, 1]} : vector<16x1536xf32> to vector<16x128xf32>
    %61 = vector.extract_strided_slice %40 {offsets = [0, 1280], sizes = [16, 128], strides = [1, 1]} : vector<16x1536xf32> to vector<16x128xf32>
    %62 = vector.extract_strided_slice %40 {offsets = [0, 1408], sizes = [16, 128], strides = [1, 1]} : vector<16x1536xf32> to vector<16x128xf32>
    %63 = vector.shape_cast %59 : vector<16x128xf32> to vector<1x16x128xf32>
    %64 = vector.shape_cast %60 : vector<16x128xf32> to vector<1x16x128xf32>
    %65 = vector.shape_cast %61 : vector<16x128xf32> to vector<1x16x128xf32>
    %66 = vector.shape_cast %62 : vector<16x128xf32> to vector<1x16x128xf32>
    %67 = tpu.concatenate %63, %64, %65, %66 in 0 : vector<1x16x128xf32>, vector<1x16x128xf32>, vector<1x16x128xf32>, vector<1x16x128xf32> -> vector<4x16x128xf32>
    "tpu.trace_start"() <{level = 10 : i32, message = "nqd,nkd->nqk"}> : () -> ()
    %cst_19 = arith.constant dense<0.000000e+00> : vector<4x16x16xf32>
    %68 = tpu.matmul %49, %58, %cst_19 {dimension_numbers = #tpu.dot_dimension_numbers<[2], [2], [1], [1], [0, 0, 0, 1, 1, 1], [0], [0]>} : vector<4x16x128xf32>, vector<4x16x128xf32>, vector<4x16x16xf32> -> vector<4x16x16xf32>
    "tpu.trace_stop"() : () -> ()
    %cst_20 = arith.constant 0.353553385 : f32
    %69 = vector.broadcast %cst_20 : f32 to vector<4x16x16xf32>
    %70 = arith.mulf %68, %69 : vector<4x16x16xf32>
    %71 = vector.broadcast %5 : vector<1x16x16xf32> to vector<4x16x16xf32>
    %72 = arith.addf %70, %71 : vector<4x16x16xf32>
    %cst_21 = arith.constant dense<0xFF800000> : vector<4x16xf32>
    %73 = vector.multi_reduction <maximumf>, %72, %cst_21 [2] : vector<4x16x16xf32> to vector<4x16xf32>
    %74 = vector.shape_cast %73 : vector<4x16xf32> to vector<4x16x1xf32>
    %75 = vector.broadcast %74 : vector<4x16x1xf32> to vector<4x16x16xf32>
    %76 = arith.subf %72, %75 : vector<4x16x16xf32>
    %77 = math.exp %76 : vector<4x16x16xf32>
    %cst_22 = arith.constant dense<0.000000e+00> : vector<4x16xf32>
    %78 = vector.multi_reduction <add>, %77, %cst_22 [2] : vector<4x16x16xf32> to vector<4x16xf32>
    %79 = vector.shape_cast %78 : vector<4x16xf32> to vector<4x16x1xf32>
    %80 = tpu.reciprocal %79 {approx = true} : vector<4x16x1xf32> -> vector<4x16x1xf32>
    %81 = vector.broadcast %80 : vector<4x16x1xf32> to vector<4x16x16xf32>
    %82 = arith.mulf %77, %81 : vector<4x16x16xf32>
    "tpu.trace_start"() <{level = 10 : i32, message = "nqk,nkd->nqd"}> : () -> ()
    %cst_23 = arith.constant dense<0.000000e+00> : vector<4x16x128xf32>
    %83 = tpu.matmul %82, %67, %cst_23 {dimension_numbers = #tpu.dot_dimension_numbers<[2], [1], [1], [2], [0, 0, 0, 1, 1, 2], [0], [0]>} : vector<4x16x16xf32>, vector<4x16x128xf32>, vector<4x16x128xf32> -> vector<4x16x128xf32>
    "tpu.trace_stop"() : () -> ()
    %84 = vector.extract_strided_slice %83 {offsets = [0, 0, 0], sizes = [1, 16, 128], strides = [1, 1, 1]} : vector<4x16x128xf32> to vector<1x16x128xf32>
    %85 = vector.shape_cast %84 : vector<1x16x128xf32> to vector<16x128xf32>
    %86 = vector.extract_strided_slice %83 {offsets = [1, 0, 0], sizes = [1, 16, 128], strides = [1, 1, 1]} : vector<4x16x128xf32> to vector<1x16x128xf32>
    %87 = vector.shape_cast %86 : vector<1x16x128xf32> to vector<16x128xf32>
    %88 = vector.extract_strided_slice %83 {offsets = [2, 0, 0], sizes = [1, 16, 128], strides = [1, 1, 1]} : vector<4x16x128xf32> to vector<1x16x128xf32>
    %89 = vector.shape_cast %88 : vector<1x16x128xf32> to vector<16x128xf32>
    %90 = vector.extract_strided_slice %83 {offsets = [3, 0, 0], sizes = [1, 16, 128], strides = [1, 1, 1]} : vector<4x16x128xf32> to vector<1x16x128xf32>
    %91 = vector.shape_cast %90 : vector<1x16x128xf32> to vector<16x128xf32>
    %92 = tpu.concatenate %85, %87, %89, %91 in 1 : vector<16x128xf32>, vector<16x128xf32>, vector<16x128xf32>, vector<16x128xf32> -> vector<16x512xf32>
    %93 = arith.truncf %92 : vector<16x512xf32> to vector<16x512xbf16>
    %c0_24 = arith.constant 0 : index
    %c0_25 = arith.constant 0 : index
    %c0_26 = arith.constant 0 : index
    %94 = vector.load %arg6[%c0_24, %c0_25, %c0_26] : memref<2x512x128xbf16, #tpu.memory_space<vmem>>, vector<1x512x128xbf16>
    %95 = vector.shape_cast %94 : vector<1x512x128xbf16> to vector<512x128xbf16>
    %cst_27 = arith.constant dense<0.000000e+00> : vector<16x128xf32>
    %96 = tpu.matmul %93, %95, %cst_27 {dimension_numbers = #tpu.dot_dimension_numbers<[1], [0], [0], [1], [0, 0, 1, 1], [], []>} : vector<16x512xbf16>, vector<512x128xbf16>, vector<16x128xf32> -> vector<16x128xf32>
    %c0_28 = arith.constant 0 : index
    %c0_29 = arith.constant 0 : index
    %c0_30 = arith.constant 0 : index
    %97 = vector.load %arg7[%c0_28, %c0_29, %c0_30] : memref<2x1x128xf32, #tpu.memory_space<vmem>>, vector<1x1x128xf32>
    %98 = vector.shape_cast %97 : vector<1x1x128xf32> to vector<1x128xf32>
    %99 = vector.broadcast %98 : vector<1x128xf32> to vector<16x128xf32>
    %100 = arith.addf %96, %99 : vector<16x128xf32>
    %101 = arith.addf %100, %32 : vector<16x128xf32>
    %c0_31 = arith.constant 0 : index
    %c0_32 = arith.constant 0 : index
    %c0_33 = arith.constant 0 : index
    %102 = vector.load %arg8[%c0_31, %c0_32, %c0_33] : memref<2x1x128xf32, #tpu.memory_space<vmem>>, vector<1x1x128xf32>
    %103 = vector.shape_cast %102 : vector<1x1x128xf32> to vector<1x128xf32>
    %c0_34 = arith.constant 0 : index
    %c0_35 = arith.constant 0 : index
    %c0_36 = arith.constant 0 : index
    %104 = vector.load %arg9[%c0_34, %c0_35, %c0_36] : memref<2x1x128xf32, #tpu.memory_space<vmem>>, vector<1x1x128xf32>
    %105 = vector.shape_cast %104 : vector<1x1x128xf32> to vector<1x128xf32>
    %106 = vector.broadcast %4 : vector<1x128xf32> to vector<16x128xf32>
    %107 = arith.mulf %101, %106 : vector<16x128xf32>
    %cst_37 = arith.constant dense<0.000000e+00> : vector<16xf32>
    %108 = vector.multi_reduction <add>, %107, %cst_37 [1] : vector<16x128xf32> to vector<16xf32>
    %109 = vector.shape_cast %108 : vector<16xf32> to vector<16x1xf32>
    %cst_38 = arith.constant 3.125000e-02 : f32
    %110 = vector.broadcast %cst_38 : f32 to vector<16x1xf32>
    %111 = arith.mulf %109, %110 : vector<16x1xf32>
    %112 = vector.broadcast %111 : vector<16x1xf32> to vector<16x128xf32>
    %113 = arith.subf %101, %112 : vector<16x128xf32>
    %114 = vector.broadcast %4 : vector<1x128xf32> to vector<16x128xf32>
    %115 = arith.mulf %113, %114 : vector<16x128xf32>
    %116 = arith.mulf %115, %115 : vector<16x128xf32>
    %cst_39 = arith.constant dense<0.000000e+00> : vector<16xf32>
    %117 = vector.multi_reduction <add>, %116, %cst_39 [1] : vector<16x128xf32> to vector<16xf32>
    %118 = vector.shape_cast %117 : vector<16xf32> to vector<16x1xf32>
    %cst_40 = arith.constant 3.125000e-02 : f32
    %119 = vector.broadcast %cst_40 : f32 to vector<16x1xf32>
    %120 = arith.mulf %118, %119 : vector<16x1xf32>
    %cst_41 = arith.constant 9.99999996E-13 : f32
    %121 = vector.broadcast %cst_41 : f32 to vector<16x1xf32>
    %122 = arith.addf %120, %121 : vector<16x1xf32>
    %123 = math.rsqrt %122 : vector<16x1xf32>
    %124 = vector.broadcast %123 : vector<16x1xf32> to vector<16x128xf32>
    %125 = arith.mulf %115, %124 : vector<16x128xf32>
    %126 = vector.broadcast %103 : vector<1x128xf32> to vector<16x128xf32>
    %127 = arith.mulf %125, %126 : vector<16x128xf32>
    %128 = vector.broadcast %105 : vector<1x128xf32> to vector<16x128xf32>
    %129 = arith.addf %127, %128 : vector<16x128xf32>
    %130 = arith.truncf %129 : vector<16x128xf32> to vector<16x128xbf16>
    %c0_42 = arith.constant 0 : index
    %c0_43 = arith.constant 0 : index
    %c0_44 = arith.constant 0 : index
    %131 = vector.load %arg10[%c0_42, %c0_43, %c0_44] : memref<2x128x128xbf16, #tpu.memory_space<vmem>>, vector<1x128x128xbf16>
    %132 = vector.shape_cast %131 : vector<1x128x128xbf16> to vector<128x128xbf16>
    %cst_45 = arith.constant dense<0.000000e+00> : vector<16x128xf32>
    %133 = tpu.matmul %130, %132, %cst_45 {dimension_numbers = #tpu.dot_dimension_numbers<[1], [0], [0], [1], [0, 0, 1, 1], [], []>} : vector<16x128xbf16>, vector<128x128xbf16>, vector<16x128xf32> -> vector<16x128xf32>
    %c0_46 = arith.constant 0 : index
    %c0_47 = arith.constant 0 : index
    %c0_48 = arith.constant 0 : index
    %134 = vector.load %arg11[%c0_46, %c0_47, %c0_48] : memref<2x1x128xf32, #tpu.memory_space<vmem>>, vector<1x1x128xf32>
    %135 = vector.shape_cast %134 : vector<1x1x128xf32> to vector<1x128xf32>
    %136 = vector.broadcast %135 : vector<1x128xf32> to vector<16x128xf32>
    %137 = arith.addf %133, %136 : vector<16x128xf32>
    %cst_49 = arith.constant 5.000000e-01 : f32
    %138 = vector.broadcast %cst_49 : f32 to vector<16x128xf32>
    %139 = arith.mulf %138, %137 : vector<16x128xf32>
    %cst_50 = arith.constant 4.471500e-02 : f32
    %140 = vector.broadcast %cst_50 : f32 to vector<16x128xf32>
    %141 = arith.mulf %140, %137 : vector<16x128xf32>
    %142 = arith.mulf %141, %137 : vector<16x128xf32>
    %143 = arith.mulf %142, %137 : vector<16x128xf32>
    %144 = arith.addf %137, %143 : vector<16x128xf32>
    %cst_51 = arith.constant 0.797884583 : f32
    %145 = vector.broadcast %cst_51 : f32 to vector<16x128xf32>
    %146 = arith.mulf %145, %144 : vector<16x128xf32>
    %147 = math.tanh %146 : vector<16x128xf32>
    %cst_52 = arith.constant 1.000000e+00 : f32
    %148 = vector.broadcast %cst_52 : f32 to vector<16x128xf32>
    %149 = arith.addf %148, %147 : vector<16x128xf32>
    %150 = arith.mulf %139, %149 : vector<16x128xf32>
    %151 = arith.truncf %150 : vector<16x128xf32> to vector<16x128xbf16>
    %c0_53 = arith.constant 0 : index
    %c0_54 = arith.constant 0 : index
    %c0_55 = arith.constant 0 : index
    %152 = vector.load %arg12[%c0_53, %c0_54, %c0_55] : memref<2x128x128xbf16, #tpu.memory_space<vmem>>, vector<1x128x128xbf16>
    %153 = vector.shape_cast %152 : vector<1x128x128xbf16> to vector<128x128xbf16>
    %cst_56 = arith.constant dense<0.000000e+00> : vector<16x128xf32>
    %154 = tpu.matmul %151, %153, %cst_56 {dimension_numbers = #tpu.dot_dimension_numbers<[1], [0], [0], [1], [0, 0, 1, 1], [], []>} : vector<16x128xbf16>, vector<128x128xbf16>, vector<16x128xf32> -> vector<16x128xf32>
    %c0_57 = arith.constant 0 : index
    %c0_58 = arith.constant 0 : index
    %c0_59 = arith.constant 0 : index
    %155 = vector.load %arg13[%c0_57, %c0_58, %c0_59] : memref<2x1x128xf32, #tpu.memory_space<vmem>>, vector<1x1x128xf32>
    %156 = vector.shape_cast %155 : vector<1x1x128xf32> to vector<1x128xf32>
    %157 = vector.broadcast %156 : vector<1x128xf32> to vector<16x128xf32>
    %158 = arith.addf %154, %157 : vector<16x128xf32>
    %159 = arith.addf %158, %129 : vector<16x128xf32>
    %c0_60 = arith.constant 0 : index
    %c0_61 = arith.constant 0 : index
    %c0_62 = arith.constant 0 : index
    %160 = vector.load %arg14[%c0_60, %c0_61, %c0_62] : memref<2x1x128xf32, #tpu.memory_space<vmem>>, vector<1x1x128xf32>
    %161 = vector.shape_cast %160 : vector<1x1x128xf32> to vector<1x128xf32>
    %c0_63 = arith.constant 0 : index
    %c0_64 = arith.constant 0 : index
    %c0_65 = arith.constant 0 : index
    %162 = vector.load %arg15[%c0_63, %c0_64, %c0_65] : memref<2x1x128xf32, #tpu.memory_space<vmem>>, vector<1x1x128xf32>
    %163 = vector.shape_cast %162 : vector<1x1x128xf32> to vector<1x128xf32>
    %164 = vector.broadcast %4 : vector<1x128xf32> to vector<16x128xf32>
    %165 = arith.mulf %159, %164 : vector<16x128xf32>
    %cst_66 = arith.constant dense<0.000000e+00> : vector<16xf32>
    %166 = vector.multi_reduction <add>, %165, %cst_66 [1] : vector<16x128xf32> to vector<16xf32>
    %167 = vector.shape_cast %166 : vector<16xf32> to vector<16x1xf32>
    %cst_67 = arith.constant 3.125000e-02 : f32
    %168 = vector.broadcast %cst_67 : f32 to vector<16x1xf32>
    %169 = arith.mulf %167, %168 : vector<16x1xf32>
    %170 = vector.broadcast %169 : vector<16x1xf32> to vector<16x128xf32>
    %171 = arith.subf %159, %170 : vector<16x128xf32>
    %172 = vector.broadcast %4 : vector<1x128xf32> to vector<16x128xf32>
    %173 = arith.mulf %171, %172 : vector<16x128xf32>
    %174 = arith.mulf %173, %173 : vector<16x128xf32>
    %cst_68 = arith.constant dense<0.000000e+00> : vector<16xf32>
    %175 = vector.multi_reduction <add>, %174, %cst_68 [1] : vector<16x128xf32> to vector<16xf32>
    %176 = vector.shape_cast %175 : vector<16xf32> to vector<16x1xf32>
    %cst_69 = arith.constant 3.125000e-02 : f32
    %177 = vector.broadcast %cst_69 : f32 to vector<16x1xf32>
    %178 = arith.mulf %176, %177 : vector<16x1xf32>
    %cst_70 = arith.constant 9.99999996E-13 : f32
    %179 = vector.broadcast %cst_70 : f32 to vector<16x1xf32>
    %180 = arith.addf %178, %179 : vector<16x1xf32>
    %181 = math.rsqrt %180 : vector<16x1xf32>
    %182 = vector.broadcast %181 : vector<16x1xf32> to vector<16x128xf32>
    %183 = arith.mulf %173, %182 : vector<16x128xf32>
    %184 = vector.broadcast %161 : vector<1x128xf32> to vector<16x128xf32>
    %185 = arith.mulf %183, %184 : vector<16x128xf32>
    %186 = vector.broadcast %163 : vector<1x128xf32> to vector<16x128xf32>
    %187 = arith.addf %185, %186 : vector<16x128xf32>
    %188 = arith.truncf %187 : vector<16x128xf32> to vector<16x128xbf16>
    %c1 = arith.constant 1 : index
    %c0_71 = arith.constant 0 : index
    %c0_72 = arith.constant 0 : index
    %189 = vector.load %arg4[%c1, %c0_71, %c0_72] : memref<2x128x1536xbf16, #tpu.memory_space<vmem>>, vector<1x128x1536xbf16>
    %190 = vector.shape_cast %189 : vector<1x128x1536xbf16> to vector<128x1536xbf16>
    %cst_73 = arith.constant dense<0.000000e+00> : vector<16x1536xf32>
    %191 = tpu.matmul %188, %190, %cst_73 {dimension_numbers = #tpu.dot_dimension_numbers<[1], [0], [0], [1], [0, 0, 1, 1], [], []>} : vector<16x128xbf16>, vector<128x1536xbf16>, vector<16x1536xf32> -> vector<16x1536xf32>
    %c1_74 = arith.constant 1 : index
    %c0_75 = arith.constant 0 : index
    %c0_76 = arith.constant 0 : index
    %192 = vector.load %arg5[%c1_74, %c0_75, %c0_76] : memref<2x1x1536xf32, #tpu.memory_space<vmem>>, vector<1x1x1536xf32>
    %193 = vector.shape_cast %192 : vector<1x1x1536xf32> to vector<1x1536xf32>
    %194 = vector.broadcast %193 : vector<1x1536xf32> to vector<16x1536xf32>
    %195 = arith.addf %191, %194 : vector<16x1536xf32>
    %196 = vector.extract_strided_slice %195 {offsets = [0, 0], sizes = [16, 128], strides = [1, 1]} : vector<16x1536xf32> to vector<16x128xf32>
    %197 = vector.extract_strided_slice %195 {offsets = [0, 128], sizes = [16, 128], strides = [1, 1]} : vector<16x1536xf32> to vector<16x128xf32>
    %198 = vector.extract_strided_slice %195 {offsets = [0, 256], sizes = [16, 128], strides = [1, 1]} : vector<16x1536xf32> to vector<16x128xf32>
    %199 = vector.extract_strided_slice %195 {offsets = [0, 384], sizes = [16, 128], strides = [1, 1]} : vector<16x1536xf32> to vector<16x128xf32>
    %200 = vector.shape_cast %196 : vector<16x128xf32> to vector<1x16x128xf32>
    %201 = vector.shape_cast %197 : vector<16x128xf32> to vector<1x16x128xf32>
    %202 = vector.shape_cast %198 : vector<16x128xf32> to vector<1x16x128xf32>
    %203 = vector.shape_cast %199 : vector<16x128xf32> to vector<1x16x128xf32>
    %204 = tpu.concatenate %200, %201, %202, %203 in 0 : vector<1x16x128xf32>, vector<1x16x128xf32>, vector<1x16x128xf32>, vector<1x16x128xf32> -> vector<4x16x128xf32>
    %205 = vector.extract_strided_slice %195 {offsets = [0, 512], sizes = [16, 128], strides = [1, 1]} : vector<16x1536xf32> to vector<16x128xf32>
    %206 = vector.extract_strided_slice %195 {offsets = [0, 640], sizes = [16, 128], strides = [1, 1]} : vector<16x1536xf32> to vector<16x128xf32>
    %207 = vector.extract_strided_slice %195 {offsets = [0, 768], sizes = [16, 128], strides = [1, 1]} : vector<16x1536xf32> to vector<16x128xf32>
    %208 = vector.extract_strided_slice %195 {offsets = [0, 896], sizes = [16, 128], strides = [1, 1]} : vector<16x1536xf32> to vector<16x128xf32>
    %209 = vector.shape_cast %205 : vector<16x128xf32> to vector<1x16x128xf32>
    %210 = vector.shape_cast %206 : vector<16x128xf32> to vector<1x16x128xf32>
    %211 = vector.shape_cast %207 : vector<16x128xf32> to vector<1x16x128xf32>
    %212 = vector.shape_cast %208 : vector<16x128xf32> to vector<1x16x128xf32>
    %213 = tpu.concatenate %209, %210, %211, %212 in 0 : vector<1x16x128xf32>, vector<1x16x128xf32>, vector<1x16x128xf32>, vector<1x16x128xf32> -> vector<4x16x128xf32>
    %214 = vector.extract_strided_slice %195 {offsets = [0, 1024], sizes = [16, 128], strides = [1, 1]} : vector<16x1536xf32> to vector<16x128xf32>
    %215 = vector.extract_strided_slice %195 {offsets = [0, 1152], sizes = [16, 128], strides = [1, 1]} : vector<16x1536xf32> to vector<16x128xf32>
    %216 = vector.extract_strided_slice %195 {offsets = [0, 1280], sizes = [16, 128], strides = [1, 1]} : vector<16x1536xf32> to vector<16x128xf32>
    %217 = vector.extract_strided_slice %195 {offsets = [0, 1408], sizes = [16, 128], strides = [1, 1]} : vector<16x1536xf32> to vector<16x128xf32>
    %218 = vector.shape_cast %214 : vector<16x128xf32> to vector<1x16x128xf32>
    %219 = vector.shape_cast %215 : vector<16x128xf32> to vector<1x16x128xf32>
    %220 = vector.shape_cast %216 : vector<16x128xf32> to vector<1x16x128xf32>
    %221 = vector.shape_cast %217 : vector<16x128xf32> to vector<1x16x128xf32>
    %222 = tpu.concatenate %218, %219, %220, %221 in 0 : vector<1x16x128xf32>, vector<1x16x128xf32>, vector<1x16x128xf32>, vector<1x16x128xf32> -> vector<4x16x128xf32>
    "tpu.trace_start"() <{level = 10 : i32, message = "nqd,nkd->nqk"}> : () -> ()
    %cst_77 = arith.constant dense<0.000000e+00> : vector<4x16x16xf32>
    %223 = tpu.matmul %204, %213, %cst_77 {dimension_numbers = #tpu.dot_dimension_numbers<[2], [2], [1], [1], [0, 0, 0, 1, 1, 1], [0], [0]>} : vector<4x16x128xf32>, vector<4x16x128xf32>, vector<4x16x16xf32> -> vector<4x16x16xf32>
    "tpu.trace_stop"() : () -> ()
    %cst_78 = arith.constant 0.353553385 : f32
    %224 = vector.broadcast %cst_78 : f32 to vector<4x16x16xf32>
    %225 = arith.mulf %223, %224 : vector<4x16x16xf32>
    %226 = vector.broadcast %5 : vector<1x16x16xf32> to vector<4x16x16xf32>
    %227 = arith.addf %225, %226 : vector<4x16x16xf32>
    %cst_79 = arith.constant dense<0xFF800000> : vector<4x16xf32>
    %228 = vector.multi_reduction <maximumf>, %227, %cst_79 [2] : vector<4x16x16xf32> to vector<4x16xf32>
    %229 = vector.shape_cast %228 : vector<4x16xf32> to vector<4x16x1xf32>
    %230 = vector.broadcast %229 : vector<4x16x1xf32> to vector<4x16x16xf32>
    %231 = arith.subf %227, %230 : vector<4x16x16xf32>
    %232 = math.exp %231 : vector<4x16x16xf32>
    %cst_80 = arith.constant dense<0.000000e+00> : vector<4x16xf32>
    %233 = vector.multi_reduction <add>, %232, %cst_80 [2] : vector<4x16x16xf32> to vector<4x16xf32>
    %234 = vector.shape_cast %233 : vector<4x16xf32> to vector<4x16x1xf32>
    %235 = tpu.reciprocal %234 {approx = true} : vector<4x16x1xf32> -> vector<4x16x1xf32>
    %236 = vector.broadcast %235 : vector<4x16x1xf32> to vector<4x16x16xf32>
    %237 = arith.mulf %232, %236 : vector<4x16x16xf32>
    "tpu.trace_start"() <{level = 10 : i32, message = "nqk,nkd->nqd"}> : () -> ()
    %cst_81 = arith.constant dense<0.000000e+00> : vector<4x16x128xf32>
    %238 = tpu.matmul %237, %222, %cst_81 {dimension_numbers = #tpu.dot_dimension_numbers<[2], [1], [1], [2], [0, 0, 0, 1, 1, 2], [0], [0]>} : vector<4x16x16xf32>, vector<4x16x128xf32>, vector<4x16x128xf32> -> vector<4x16x128xf32>
    "tpu.trace_stop"() : () -> ()
    %239 = vector.extract_strided_slice %238 {offsets = [0, 0, 0], sizes = [1, 16, 128], strides = [1, 1, 1]} : vector<4x16x128xf32> to vector<1x16x128xf32>
    %240 = vector.shape_cast %239 : vector<1x16x128xf32> to vector<16x128xf32>
    %241 = vector.extract_strided_slice %238 {offsets = [1, 0, 0], sizes = [1, 16, 128], strides = [1, 1, 1]} : vector<4x16x128xf32> to vector<1x16x128xf32>
    %242 = vector.shape_cast %241 : vector<1x16x128xf32> to vector<16x128xf32>
    %243 = vector.extract_strided_slice %238 {offsets = [2, 0, 0], sizes = [1, 16, 128], strides = [1, 1, 1]} : vector<4x16x128xf32> to vector<1x16x128xf32>
    %244 = vector.shape_cast %243 : vector<1x16x128xf32> to vector<16x128xf32>
    %245 = vector.extract_strided_slice %238 {offsets = [3, 0, 0], sizes = [1, 16, 128], strides = [1, 1, 1]} : vector<4x16x128xf32> to vector<1x16x128xf32>
    %246 = vector.shape_cast %245 : vector<1x16x128xf32> to vector<16x128xf32>
    %247 = tpu.concatenate %240, %242, %244, %246 in 1 : vector<16x128xf32>, vector<16x128xf32>, vector<16x128xf32>, vector<16x128xf32> -> vector<16x512xf32>
    %248 = arith.truncf %247 : vector<16x512xf32> to vector<16x512xbf16>
    %c1_82 = arith.constant 1 : index
    %c0_83 = arith.constant 0 : index
    %c0_84 = arith.constant 0 : index
    %249 = vector.load %arg6[%c1_82, %c0_83, %c0_84] : memref<2x512x128xbf16, #tpu.memory_space<vmem>>, vector<1x512x128xbf16>
    %250 = vector.shape_cast %249 : vector<1x512x128xbf16> to vector<512x128xbf16>
    %cst_85 = arith.constant dense<0.000000e+00> : vector<16x128xf32>
    %251 = tpu.matmul %248, %250, %cst_85 {dimension_numbers = #tpu.dot_dimension_numbers<[1], [0], [0], [1], [0, 0, 1, 1], [], []>} : vector<16x512xbf16>, vector<512x128xbf16>, vector<16x128xf32> -> vector<16x128xf32>
    %c1_86 = arith.constant 1 : index
    %c0_87 = arith.constant 0 : index
    %c0_88 = arith.constant 0 : index
    %252 = vector.load %arg7[%c1_86, %c0_87, %c0_88] : memref<2x1x128xf32, #tpu.memory_space<vmem>>, vector<1x1x128xf32>
    %253 = vector.shape_cast %252 : vector<1x1x128xf32> to vector<1x128xf32>
    %254 = vector.broadcast %253 : vector<1x128xf32> to vector<16x128xf32>
    %255 = arith.addf %251, %254 : vector<16x128xf32>
    %256 = arith.addf %255, %187 : vector<16x128xf32>
    %c1_89 = arith.constant 1 : index
    %c0_90 = arith.constant 0 : index
    %c0_91 = arith.constant 0 : index
    %257 = vector.load %arg8[%c1_89, %c0_90, %c0_91] : memref<2x1x128xf32, #tpu.memory_space<vmem>>, vector<1x1x128xf32>
    %258 = vector.shape_cast %257 : vector<1x1x128xf32> to vector<1x128xf32>
    %c1_92 = arith.constant 1 : index
    %c0_93 = arith.constant 0 : index
    %c0_94 = arith.constant 0 : index
    %259 = vector.load %arg9[%c1_92, %c0_93, %c0_94] : memref<2x1x128xf32, #tpu.memory_space<vmem>>, vector<1x1x128xf32>
    %260 = vector.shape_cast %259 : vector<1x1x128xf32> to vector<1x128xf32>
    %261 = vector.broadcast %4 : vector<1x128xf32> to vector<16x128xf32>
    %262 = arith.mulf %256, %261 : vector<16x128xf32>
    %cst_95 = arith.constant dense<0.000000e+00> : vector<16xf32>
    %263 = vector.multi_reduction <add>, %262, %cst_95 [1] : vector<16x128xf32> to vector<16xf32>
    %264 = vector.shape_cast %263 : vector<16xf32> to vector<16x1xf32>
    %cst_96 = arith.constant 3.125000e-02 : f32
    %265 = vector.broadcast %cst_96 : f32 to vector<16x1xf32>
    %266 = arith.mulf %264, %265 : vector<16x1xf32>
    %267 = vector.broadcast %266 : vector<16x1xf32> to vector<16x128xf32>
    %268 = arith.subf %256, %267 : vector<16x128xf32>
    %269 = vector.broadcast %4 : vector<1x128xf32> to vector<16x128xf32>
    %270 = arith.mulf %268, %269 : vector<16x128xf32>
    %271 = arith.mulf %270, %270 : vector<16x128xf32>
    %cst_97 = arith.constant dense<0.000000e+00> : vector<16xf32>
    %272 = vector.multi_reduction <add>, %271, %cst_97 [1] : vector<16x128xf32> to vector<16xf32>
    %273 = vector.shape_cast %272 : vector<16xf32> to vector<16x1xf32>
    %cst_98 = arith.constant 3.125000e-02 : f32
    %274 = vector.broadcast %cst_98 : f32 to vector<16x1xf32>
    %275 = arith.mulf %273, %274 : vector<16x1xf32>
    %cst_99 = arith.constant 9.99999996E-13 : f32
    %276 = vector.broadcast %cst_99 : f32 to vector<16x1xf32>
    %277 = arith.addf %275, %276 : vector<16x1xf32>
    %278 = math.rsqrt %277 : vector<16x1xf32>
    %279 = vector.broadcast %278 : vector<16x1xf32> to vector<16x128xf32>
    %280 = arith.mulf %270, %279 : vector<16x128xf32>
    %281 = vector.broadcast %258 : vector<1x128xf32> to vector<16x128xf32>
    %282 = arith.mulf %280, %281 : vector<16x128xf32>
    %283 = vector.broadcast %260 : vector<1x128xf32> to vector<16x128xf32>
    %284 = arith.addf %282, %283 : vector<16x128xf32>
    %285 = arith.truncf %284 : vector<16x128xf32> to vector<16x128xbf16>
    %c1_100 = arith.constant 1 : index
    %c0_101 = arith.constant 0 : index
    %c0_102 = arith.constant 0 : index
    %286 = vector.load %arg10[%c1_100, %c0_101, %c0_102] : memref<2x128x128xbf16, #tpu.memory_space<vmem>>, vector<1x128x128xbf16>
    %287 = vector.shape_cast %286 : vector<1x128x128xbf16> to vector<128x128xbf16>
    %cst_103 = arith.constant dense<0.000000e+00> : vector<16x128xf32>
    %288 = tpu.matmul %285, %287, %cst_103 {dimension_numbers = #tpu.dot_dimension_numbers<[1], [0], [0], [1], [0, 0, 1, 1], [], []>} : vector<16x128xbf16>, vector<128x128xbf16>, vector<16x128xf32> -> vector<16x128xf32>
    %c1_104 = arith.constant 1 : index
    %c0_105 = arith.constant 0 : index
    %c0_106 = arith.constant 0 : index
    %289 = vector.load %arg11[%c1_104, %c0_105, %c0_106] : memref<2x1x128xf32, #tpu.memory_space<vmem>>, vector<1x1x128xf32>
    %290 = vector.shape_cast %289 : vector<1x1x128xf32> to vector<1x128xf32>
    %291 = vector.broadcast %290 : vector<1x128xf32> to vector<16x128xf32>
    %292 = arith.addf %288, %291 : vector<16x128xf32>
    %cst_107 = arith.constant 5.000000e-01 : f32
    %293 = vector.broadcast %cst_107 : f32 to vector<16x128xf32>
    %294 = arith.mulf %293, %292 : vector<16x128xf32>
    %cst_108 = arith.constant 4.471500e-02 : f32
    %295 = vector.broadcast %cst_108 : f32 to vector<16x128xf32>
    %296 = arith.mulf %295, %292 : vector<16x128xf32>
    %297 = arith.mulf %296, %292 : vector<16x128xf32>
    %298 = arith.mulf %297, %292 : vector<16x128xf32>
    %299 = arith.addf %292, %298 : vector<16x128xf32>
    %cst_109 = arith.constant 0.797884583 : f32
    %300 = vector.broadcast %cst_109 : f32 to vector<16x128xf32>
    %301 = arith.mulf %300, %299 : vector<16x128xf32>
    %302 = math.tanh %301 : vector<16x128xf32>
    %cst_110 = arith.constant 1.000000e+00 : f32
    %303 = vector.broadcast %cst_110 : f32 to vector<16x128xf32>
    %304 = arith.addf %303, %302 : vector<16x128xf32>
    %305 = arith.mulf %294, %304 : vector<16x128xf32>
    %306 = arith.truncf %305 : vector<16x128xf32> to vector<16x128xbf16>
    %c1_111 = arith.constant 1 : index
    %c0_112 = arith.constant 0 : index
    %c0_113 = arith.constant 0 : index
    %307 = vector.load %arg12[%c1_111, %c0_112, %c0_113] : memref<2x128x128xbf16, #tpu.memory_space<vmem>>, vector<1x128x128xbf16>
    %308 = vector.shape_cast %307 : vector<1x128x128xbf16> to vector<128x128xbf16>
    %cst_114 = arith.constant dense<0.000000e+00> : vector<16x128xf32>
    %309 = tpu.matmul %306, %308, %cst_114 {dimension_numbers = #tpu.dot_dimension_numbers<[1], [0], [0], [1], [0, 0, 1, 1], [], []>} : vector<16x128xbf16>, vector<128x128xbf16>, vector<16x128xf32> -> vector<16x128xf32>
    %c1_115 = arith.constant 1 : index
    %c0_116 = arith.constant 0 : index
    %c0_117 = arith.constant 0 : index
    %310 = vector.load %arg13[%c1_115, %c0_116, %c0_117] : memref<2x1x128xf32, #tpu.memory_space<vmem>>, vector<1x1x128xf32>
    %311 = vector.shape_cast %310 : vector<1x1x128xf32> to vector<1x128xf32>
    %312 = vector.broadcast %311 : vector<1x128xf32> to vector<16x128xf32>
    %313 = arith.addf %309, %312 : vector<16x128xf32>
    %314 = arith.addf %313, %284 : vector<16x128xf32>
    %c1_118 = arith.constant 1 : index
    %c0_119 = arith.constant 0 : index
    %c0_120 = arith.constant 0 : index
    %315 = vector.load %arg14[%c1_118, %c0_119, %c0_120] : memref<2x1x128xf32, #tpu.memory_space<vmem>>, vector<1x1x128xf32>
    %316 = vector.shape_cast %315 : vector<1x1x128xf32> to vector<1x128xf32>
    %c1_121 = arith.constant 1 : index
    %c0_122 = arith.constant 0 : index
    %c0_123 = arith.constant 0 : index
    %317 = vector.load %arg15[%c1_121, %c0_122, %c0_123] : memref<2x1x128xf32, #tpu.memory_space<vmem>>, vector<1x1x128xf32>
    %318 = vector.shape_cast %317 : vector<1x1x128xf32> to vector<1x128xf32>
    %319 = vector.broadcast %4 : vector<1x128xf32> to vector<16x128xf32>
    %320 = arith.mulf %314, %319 : vector<16x128xf32>
    %cst_124 = arith.constant dense<0.000000e+00> : vector<16xf32>
    %321 = vector.multi_reduction <add>, %320, %cst_124 [1] : vector<16x128xf32> to vector<16xf32>
    %322 = vector.shape_cast %321 : vector<16xf32> to vector<16x1xf32>
    %cst_125 = arith.constant 3.125000e-02 : f32
    %323 = vector.broadcast %cst_125 : f32 to vector<16x1xf32>
    %324 = arith.mulf %322, %323 : vector<16x1xf32>
    %325 = vector.broadcast %324 : vector<16x1xf32> to vector<16x128xf32>
    %326 = arith.subf %314, %325 : vector<16x128xf32>
    %327 = vector.broadcast %4 : vector<1x128xf32> to vector<16x128xf32>
    %328 = arith.mulf %326, %327 : vector<16x128xf32>
    %329 = arith.mulf %328, %328 : vector<16x128xf32>
    %cst_126 = arith.constant dense<0.000000e+00> : vector<16xf32>
    %330 = vector.multi_reduction <add>, %329, %cst_126 [1] : vector<16x128xf32> to vector<16xf32>
    %331 = vector.shape_cast %330 : vector<16xf32> to vector<16x1xf32>
    %cst_127 = arith.constant 3.125000e-02 : f32
    %332 = vector.broadcast %cst_127 : f32 to vector<16x1xf32>
    %333 = arith.mulf %331, %332 : vector<16x1xf32>
    %cst_128 = arith.constant 9.99999996E-13 : f32
    %334 = vector.broadcast %cst_128 : f32 to vector<16x1xf32>
    %335 = arith.addf %333, %334 : vector<16x1xf32>
    %336 = math.rsqrt %335 : vector<16x1xf32>
    %337 = vector.broadcast %336 : vector<16x1xf32> to vector<16x128xf32>
    %338 = arith.mulf %328, %337 : vector<16x128xf32>
    %339 = vector.broadcast %316 : vector<1x128xf32> to vector<16x128xf32>
    %340 = arith.mulf %338, %339 : vector<16x128xf32>
    %341 = vector.broadcast %318 : vector<1x128xf32> to vector<16x128xf32>
    %342 = arith.addf %340, %341 : vector<16x128xf32>
    %343 = arith.truncf %342 : vector<16x128xf32> to vector<16x128xbf16>
    %c0_129 = arith.constant 0 : index
    %c0_130 = arith.constant 0 : index
    %344 = vector.load %arg16[%c0_129, %c0_130] : memref<128x128xbf16, #tpu.memory_space<vmem>>, vector<128x128xbf16>
    %cst_131 = arith.constant dense<0.000000e+00> : vector<16x128xf32>
    %345 = tpu.matmul %343, %344, %cst_131 {dimension_numbers = #tpu.dot_dimension_numbers<[1], [0], [0], [1], [0, 0, 1, 1], [], []>} : vector<16x128xbf16>, vector<128x128xbf16>, vector<16x128xf32> -> vector<16x128xf32>
    %c0_132 = arith.constant 0 : index
    %c0_133 = arith.constant 0 : index
    %346 = vector.load %arg17[%c0_132, %c0_133] : memref<1x128xf32, #tpu.memory_space<vmem>>, vector<1x128xf32>
    %347 = vector.broadcast %346 : vector<1x128xf32> to vector<16x128xf32>
    %348 = arith.addf %345, %347 : vector<16x128xf32>
    %c0_134 = arith.constant 0 : index
    %c0_135 = arith.constant 0 : index
    %349 = vector.load %arg18[%c0_134, %c0_135] : memref<16x128xf32, #tpu.memory_space<vmem>>, vector<16x128xf32>
    tpu.vector_store %arg18[%c0_134, %c0_135], %348 {strides = array<i32>} : memref<16x128xf32, #tpu.memory_space<vmem>>, vector<16x128xf32>,
    return
  }
}

</mosaic_0001>

<llo_original>
// kernel: squeeze.2
$region0: #{squeeze.2}
  %s0 = inlined_call_operand.vmem [shape: f32[16], index: 0, kind: input, shape index: {}]
  %s1 = inlined_call_operand.hbm [shape: f32[2,8], index: 1, kind: output, shape index: {}]
  $region1: #{squeeze.2} parent=0
    #allocation0 [shape = 'u8[1024]{0}', space=vmem, size = 0x400, scoped, tag = 'operand span for operand 1']
    #allocation1 [shape = 's32[1]{0}', space=sflag, size = 0x4, scoped, tag = 'scoped memory for squeeze.2']
    #allocation2 [shape = 'u8[4096]{0}', space=vmem, size = 0x1000, scoped, tag = 'scoped mem for output reshape']
    #allocation3 [shape = 'u8[4096]{0}', space=vmem, size = 0x1000, scoped, tag = 'scoped mem for input reshape']
    %2 = vsyncpa [#allocation1], 0
    %s4 = sshll.u32 1, 1
    %s5 = ssub.s32 %s4, 1
    %v6 = vld [vmem:[%s0] sm:%s5]
    %7 = vst [vmem:[#allocation3] sm:%s5] %v6
    %v8 = vld [vmem:[#allocation3] sm:$0x1]
    %vm9 = vcmask 64512
    %10 = vst.msk [vmem:[#allocation2] sm:$0x1] %vm9, %v8
    %v11 = vld [vmem:[#allocation3] sm:$0x1]
    %12 = vrot.lane.b32.xlu0 %v11, 120
    %v13 = vpop.permute.xlu0 %12
    %vm14 = vcmask 64512
    %s15 = scalar_lea.vmem [#allocation2], 1
    %16 = vst.msk [vmem:[%s15] sm:$0x1] %vm14, %v13
    %s18 = sshll.u32 1, 2
    %s19 = ssub.s32 %s18, 1
    %v21 = vld [vmem:[#allocation2] sm:%s19]
    %s22 = sshll.u32 1, 2
    %s23 = ssub.s32 %s22, 1
    %24 = vst [vmem:[#allocation0] sm:%s23] %v21
    %s26 = ssub.s32 32, 32
    %27 = vsyncadd [#allocation1], %s26
    %s29 = sshll.u32 [#allocation0], 4
    %s30 = int_to_ptr.vmem [resolvable:$true] %s29
    %32 = dma.vmem_to_hbm [thread:$0]  %s30, 32, %s1, [#allocation1]
    %33 = dma.done [#allocation1], 32
    %34 = vsyncpa [#allocation1], 1

// kernel: pipeline_parallel_bert_forward.1
$region0: #{pipeline_parallel_bert_forward.1}
  #allocation0 [shape = 'u32[]', space=smem, size = 0x4, offset = 0x4, fixed_abs, tag = 'smem constant byte address 0x4 - core index']
  #allocation1 [shape = 'u32[144,128]{1,0:T(1,128)}', space=vmem, size = 0x12000, scoped, tag = 'internal scratch']
  %s0 = inlined_call_operand.vmem [shape: f32[16,128], index: 0, kind: input, shape index: {}]
  %s1 = inlined_call_operand.vmem [shape: f32[1,16,16], index: 1, kind: input, shape index: {}]
  %s2 = inlined_call_operand.vmem [shape: f32[1,128], index: 2, kind: input, shape index: {}]
  %s3 = inlined_call_operand.hbm [shape: f32[1,128], index: 3, kind: input, shape index: {}]
  %s4 = inlined_call_operand.hbm [shape: bf16[2,128,1536], index: 4, kind: input, shape index: {}]
  %s5 = inlined_call_operand.hbm [shape: f32[2,1,1536], index: 5, kind: input, shape index: {}]
  %s6 = inlined_call_operand.vmem [shape: bf16[2,512,128], index: 6, kind: input, shape index: {}]
  %s7 = inlined_call_operand.hbm [shape: f32[2,1,128], index: 7, kind: input, shape index: {}]
  %s8 = inlined_call_operand.hbm [shape: f32[2,1,128], index: 8, kind: input, shape index: {}]
  %s9 = inlined_call_operand.hbm [shape: f32[2,1,128], index: 9, kind: input, shape index: {}]
  %s10 = inlined_call_operand.hbm [shape: bf16[2,128,128], index: 10, kind: input, shape index: {}]
  %s11 = inlined_call_operand.hbm [shape: f32[2,1,128], index: 11, kind: input, shape index: {}]
  %s12 = inlined_call_operand.hbm [shape: bf16[2,128,128], index: 12, kind: input, shape index: {}]
  %s13 = inlined_call_operand.hbm [shape: f32[2,1,128], index: 13, kind: input, shape index: {}]
  %s14 = inlined_call_operand.hbm [shape: f32[2,1,128], index: 14, kind: input, shape index: {}]
  %s15 = inlined_call_operand.hbm [shape: f32[2,1,128], index: 15, kind: input, shape index: {}]
  %s16 = inlined_call_operand.vmem [shape: bf16[128,128], index: 16, kind: input, shape index: {}]
  %s17 = inlined_call_operand.hbm [shape: f32[1,128], index: 17, kind: input, shape index: {}]
  %s18 = inlined_call_operand.vmem [shape: f32[16,128], index: 18, kind: output, shape index: {}]
  %s19 = sld [smem:[#allocation0]]
  $region134: #{pipeline_parallel_bert_forward.1} parent=0
    _
  %s21 = ssub.s32 1, %s19
  %s22 = scalar_select 0, %s21, %s19
  $region1: #{pipeline_parallel_bert_forward.1} parent=0
    #allocation2 [shape = 'u8[512]{0}', space=vmem, size = 0x400, scoped, tag = 'input window, operand 3, single buffered']
    #allocation3 [shape = 's32[1]{0}', space=sflag, size = 0x4, scoped, tag = 'scoped memory for pipeline_parallel_bert_forward.1']
    #allocation4 [shape = 'u8[786432]{0}', space=vmem, size = 0xc0000, scoped, tag = 'input window, operand 4, single buffered']
    #allocation5 [shape = 's32[1]{0}', space=sflag, size = 0x4, scoped, tag = 'scoped memory for pipeline_parallel_bert_forward.1']
    #allocation6 [shape = 'u8[12288]{0}', space=vmem, size = 0x3000, scoped, tag = 'input window, operand 5, single buffered']
    #allocation7 [shape = 'u8[1024]{0}', space=vmem, size = 0x400, scoped, tag = 'input window, operand 7, single buffered']
    #allocation8 [shape = 's32[1]{0}', space=sflag, size = 0x4, scoped, tag = 'scoped memory for pipeline_parallel_bert_forward.1']
    #allocation9 [shape = 'u8[1024]{0}', space=vmem, size = 0x400, scoped, tag = 'input window, operand 8, single buffered']
    #allocation10 [shape = 'u8[1024]{0}', space=vmem, size = 0x400, scoped, tag = 'input window, operand 9, single buffered']
    #allocation11 [shape = 's32[1]{0}', space=sflag, size = 0x4, scoped, tag = 'scoped memory for pipeline_parallel_bert_forward.1']
    #allocation12 [shape = 'u8[65536]{0}', space=vmem, size = 0x10000, scoped, tag = 'input window, operand 10, single buffered']
    #allocation13 [shape = 'u8[1024]{0}', space=vmem, size = 0x400, scoped, tag = 'input window, operand 11, single buffered']
    #allocation14 [shape = 's32[1]{0}', space=sflag, size = 0x4, scoped, tag = 'scoped memory for pipeline_parallel_bert_forward.1']
    #allocation15 [shape = 'u8[65536]{0}', space=vmem, size = 0x10000, scoped, tag = 'input window, operand 12, single buffered']
    #allocation16 [shape = 'u8[1024]{0}', space=vmem, size = 0x400, scoped, tag = 'input window, operand 13, single buffered']
    #allocation17 [shape = 's32[1]{0}', space=sflag, size = 0x4, scoped, tag = 'scoped memory for pipeline_parallel_bert_forward.1']
    #allocation18 [shape = 'u8[1024]{0}', space=vmem, size = 0x400, scoped, tag = 'input window, operand 14, single buffered']
    #allocation19 [shape = 'u8[1024]{0}', space=vmem, size = 0x400, scoped, tag = 'input window, operand 15, single buffered']
    #allocation20 [shape = 's32[1]{0}', space=sflag, size = 0x4, scoped, tag = 'scoped memory for pipeline_parallel_bert_forward.1']
    #allocation21 [shape = 'u8[512]{0}', space=vmem, size = 0x400, scoped, tag = 'input window, operand 17, single buffered']
    %23 = vsyncpa [#allocation3], 0
    %24 = vsyncpa [#allocation5], 0
    %25 = vsyncpa [#allocation8], 0
    %26 = vsyncpa [#allocation11], 0
    %27 = vsyncpa [#allocation14], 0
    %28 = vsyncpa [#allocation17], 0
    %29 = vsyncpa [#allocation20], 0
    // Predicated region
    $region2: #{pipeline_parallel_bert_forward.1} parent=1 // pred_check
      _
    $region3: #{pipeline_parallel_bert_forward.1} parent=1 // pred_check_branch
      %31 = sbr.rel (0) target = $region5
    $region4: #{pipeline_parallel_bert_forward.1} parent=1 // pred_region
      _
    $region5: #{pipeline_parallel_bert_forward.1} parent=1 // pred_fallthru
      _
    // Predicated region
    $region6: #{pipeline_parallel_bert_forward.1} parent=1 // pred_check
      _
    $region7: #{pipeline_parallel_bert_forward.1} parent=1 // pred_check_branch
      %33 = sbr.rel (0) target = $region9
    $region8: #{pipeline_parallel_bert_forward.1} parent=1 // pred_region
      _
    $region9: #{pipeline_parallel_bert_forward.1} parent=1 // pred_fallthru
      _
    // Predicated region
    $region10: #{pipeline_parallel_bert_forward.1} parent=1 // pred_check
      _
    $region11: #{pipeline_parallel_bert_forward.1} parent=1 // pred_check_branch
      %35 = sbr.rel (0) target = $region13
    $region12: #{pipeline_parallel_bert_forward.1} parent=1 // pred_region
      _
    $region13: #{pipeline_parallel_bert_forward.1} parent=1 // pred_fallthru
      _
    // Predicated region
    $region14: #{pipeline_parallel_bert_forward.1} parent=1 // pred_check
      _
    $region15: #{pipeline_parallel_bert_forward.1} parent=1 // pred_check_branch
      %37 = sbr.rel (0) target = $region17
    $region16: #{pipeline_parallel_bert_forward.1} parent=1 // pred_region
      %s39 = ssub.s32 16, 16
      %40 = vsyncadd [#allocation3], %s39
      %s42 = sshll.u32 [#allocation2], 4
      %s43 = int_to_ptr.vmem [resolvable:$true] %s42
      %45 = dma.hbm_to_vmem [thread:$0]  %s3, 16, %s43, [#allocation3]
    $region17: #{pipeline_parallel_bert_forward.1} parent=1 // pred_fallthru
      _
    // Predicated region
    $region18: #{pipeline_parallel_bert_forward.1} parent=1 // pred_check
      _
    $region19: #{pipeline_parallel_bert_forward.1} parent=1 // pred_check_branch
      %47 = sbr.rel (0) target = $region21
    $region20: #{pipeline_parallel_bert_forward.1} parent=1 // pred_region
      %s49 = ssub.s32 24576, 24576
      %50 = vsyncadd [#allocation5], %s49
      %s51 = sshll.u32 [#allocation4], 4
      %s52 = int_to_ptr.vmem [resolvable:$true] %s51
      %57 = dma.hbm_to_vmem [thread:$0]  %s4, 24576, %s52, [#allocation5], 768, 768, 48
    $region21: #{pipeline_parallel_bert_forward.1} parent=1 // pred_fallthru
      _
    // Predicated region
    $region22: #{pipeline_parallel_bert_forward.1} parent=1 // pred_check
      _
    $region23: #{pipeline_parallel_bert_forward.1} parent=1 // pred_check_branch
      %59 = sbr.rel (0) target = $region25
    $region24: #{pipeline_parallel_bert_forward.1} parent=1 // pred_region
      %s61 = ssub.s32 384, 384
      %62 = vsyncadd [#allocation5], %s61
      %s63 = sshll.u32 [#allocation6], 4
      %s64 = int_to_ptr.vmem [resolvable:$true] %s63
      %69 = dma.hbm_to_vmem [thread:$0]  %s5, 384, %s64, [#allocation5], 192, 192, 12
    $region25: #{pipeline_parallel_bert_forward.1} parent=1 // pred_fallthru
      _
    // Predicated region
    $region26: #{pipeline_parallel_bert_forward.1} parent=1 // pred_check
      _
    $region27: #{pipeline_parallel_bert_forward.1} parent=1 // pred_check_branch
      %71 = sbr.rel (0) target = $region29
    $region28: #{pipeline_parallel_bert_forward.1} parent=1 // pred_region
      _
    $region29: #{pipeline_parallel_bert_forward.1} parent=1 // pred_fallthru
      _
    // Predicated region
    $region30: #{pipeline_parallel_bert_forward.1} parent=1 // pred_check
      _
    $region31: #{pipeline_parallel_bert_forward.1} parent=1 // pred_check_branch
      %73 = sbr.rel (0) target = $region33
    $region32: #{pipeline_parallel_bert_forward.1} parent=1 // pred_region
      %s75 = ssub.s32 32, 32
      %76 = vsyncadd [#allocation8], %s75
      %s77 = sshll.u32 [#allocation7], 4
      %s78 = int_to_ptr.vmem [resolvable:$true] %s77
      %83 = dma.hbm_to_vmem [thread:$0]  %s7, 32, %s78, [#allocation8], 16, 16, 1
    $region33: #{pipeline_parallel_bert_forward.1} parent=1 // pred_fallthru
      _
    // Predicated region
    $region34: #{pipeline_parallel_bert_forward.1} parent=1 // pred_check
      _
    $region35: #{pipeline_parallel_bert_forward.1} parent=1 // pred_check_branch
      %85 = sbr.rel (0) target = $region37
    $region36: #{pipeline_parallel_bert_forward.1} parent=1 // pred_region
      %s87 = ssub.s32 32, 32
      %88 = vsyncadd [#allocation8], %s87
      %s89 = sshll.u32 [#allocation9], 4
      %s90 = int_to_ptr.vmem [resolvable:$true] %s89
      %95 = dma.hbm_to_vmem [thread:$0]  %s8, 32, %s90, [#allocation8], 16, 16, 1
    $region37: #{pipeline_parallel_bert_forward.1} parent=1 // pred_fallthru
      _
    // Predicated region
    $region38: #{pipeline_parallel_bert_forward.1} parent=1 // pred_check
      _
    $region39: #{pipeline_parallel_bert_forward.1} parent=1 // pred_check_branch
      %97 = sbr.rel (0) target = $region41
    $region40: #{pipeline_parallel_bert_forward.1} parent=1 // pred_region
      %s99 = ssub.s32 32, 32
      %100 = vsyncadd [#allocation11], %s99
      %s101 = sshll.u32 [#allocation10], 4
      %s102 = int_to_ptr.vmem [resolvable:$true] %s101
      %107 = dma.hbm_to_vmem [thread:$0]  %s9, 32, %s102, [#allocation11], 16, 16, 1
    $region41: #{pipeline_parallel_bert_forward.1} parent=1 // pred_fallthru
      _
    // Predicated region
    $region42: #{pipeline_parallel_bert_forward.1} parent=1 // pred_check
      _
    $region43: #{pipeline_parallel_bert_forward.1} parent=1 // pred_check_branch
      %109 = sbr.rel (0) target = $region45
    $region44: #{pipeline_parallel_bert_forward.1} parent=1 // pred_region
      %s111 = ssub.s32 2048, 2048
      %112 = vsyncadd [#allocation11], %s111
      %s113 = sshll.u32 [#allocation12], 4
      %s114 = int_to_ptr.vmem [resolvable:$true] %s113
      %119 = dma.hbm_to_vmem [thread:$0]  %s10, 2048, %s114, [#allocation11], 64, 64, 4
    $region45: #{pipeline_parallel_bert_forward.1} parent=1 // pred_fallthru
      _
    // Predicated region
    $region46: #{pipeline_parallel_bert_forward.1} parent=1 // pred_check
      _
    $region47: #{pipeline_parallel_bert_forward.1} parent=1 // pred_check_branch
      %121 = sbr.rel (0) target = $region49
    $region48: #{pipeline_parallel_bert_forward.1} parent=1 // pred_region
      %s123 = ssub.s32 32, 32
      %124 = vsyncadd [#allocation14], %s123
      %s125 = sshll.u32 [#allocation13], 4
      %s126 = int_to_ptr.vmem [resolvable:$true] %s125
      %131 = dma.hbm_to_vmem [thread:$0]  %s11, 32, %s126, [#allocation14], 16, 16, 1
    $region49: #{pipeline_parallel_bert_forward.1} parent=1 // pred_fallthru
      _
    // Predicated region
    $region50: #{pipeline_parallel_bert_forward.1} parent=1 // pred_check
      _
    $region51: #{pipeline_parallel_bert_forward.1} parent=1 // pred_check_branch
      %133 = sbr.rel (0) target = $region53
    $region52: #{pipeline_parallel_bert_forward.1} parent=1 // pred_region
      %s135 = ssub.s32 2048, 2048
      %136 = vsyncadd [#allocation14], %s135
      %s137 = sshll.u32 [#allocation15], 4
      %s138 = int_to_ptr.vmem [resolvable:$true] %s137
      %143 = dma.hbm_to_vmem [thread:$0]  %s12, 2048, %s138, [#allocation14], 64, 64, 4
    $region53: #{pipeline_parallel_bert_forward.1} parent=1 // pred_fallthru
      _
    // Predicated region
    $region54: #{pipeline_parallel_bert_forward.1} parent=1 // pred_check
      _
    $region55: #{pipeline_parallel_bert_forward.1} parent=1 // pred_check_branch
      %145 = sbr.rel (0) target = $region57
    $region56: #{pipeline_parallel_bert_forward.1} parent=1 // pred_region
      %s147 = ssub.s32 32, 32
      %148 = vsyncadd [#allocation17], %s147
      %s149 = sshll.u32 [#allocation16], 4
      %s150 = int_to_ptr.vmem [resolvable:$true] %s149
      %155 = dma.hbm_to_vmem [thread:$0]  %s13, 32, %s150, [#allocation17], 16, 16, 1
    $region57: #{pipeline_parallel_bert_forward.1} parent=1 // pred_fallthru
      _
    // Predicated region
    $region58: #{pipeline_parallel_bert_forward.1} parent=1 // pred_check
      _
    $region59: #{pipeline_parallel_bert_forward.1} parent=1 // pred_check_branch
      %157 = sbr.rel (0) target = $region61
    $region60: #{pipeline_parallel_bert_forward.1} parent=1 // pred_region
      %s159 = ssub.s32 32, 32
      %160 = vsyncadd [#allocation17], %s159
      %s161 = sshll.u32 [#allocation18], 4
      %s162 = int_to_ptr.vmem [resolvable:$true] %s161
      %167 = dma.hbm_to_vmem [thread:$0]  %s14, 32, %s162, [#allocation17], 16, 16, 1
    $region61: #{pipeline_parallel_bert_forward.1} parent=1 // pred_fallthru
      _
    // Predicated region
    $region62: #{pipeline_parallel_bert_forward.1} parent=1 // pred_check
      _
    $region63: #{pipeline_parallel_bert_forward.1} parent=1 // pred_check_branch
      %169 = sbr.rel (0) target = $region65
    $region64: #{pipeline_parallel_bert_forward.1} parent=1 // pred_region
      %s171 = ssub.s32 32, 32
      %172 = vsyncadd [#allocation20], %s171
      %s173 = sshll.u32 [#allocation19], 4
      %s174 = int_to_ptr.vmem [resolvable:$true] %s173
      %179 = dma.hbm_to_vmem [thread:$0]  %s15, 32, %s174, [#allocation20], 16, 16, 1
    $region65: #{pipeline_parallel_bert_forward.1} parent=1 // pred_fallthru
      _
    // Predicated region
    $region66: #{pipeline_parallel_bert_forward.1} parent=1 // pred_check
      _
    $region67: #{pipeline_parallel_bert_forward.1} parent=1 // pred_check_branch
      %181 = sbr.rel (0) target = $region69
    $region68: #{pipeline_parallel_bert_forward.1} parent=1 // pred_region
      _
    $region69: #{pipeline_parallel_bert_forward.1} parent=1 // pred_fallthru
      _
    // Predicated region
    $region70: #{pipeline_parallel_bert_forward.1} parent=1 // pred_check
      _
    $region71: #{pipeline_parallel_bert_forward.1} parent=1 // pred_check_branch
      %183 = sbr.rel (0) target = $region73
    $region72: #{pipeline_parallel_bert_forward.1} parent=1 // pred_region
      %s185 = ssub.s32 16, 16
      %186 = vsyncadd [#allocation20], %s185
      %s188 = sshll.u32 [#allocation21], 4
      %s189 = int_to_ptr.vmem [resolvable:$true] %s188
      %191 = dma.hbm_to_vmem [thread:$0]  %s17, 16, %s189, [#allocation20]
    $region73: #{pipeline_parallel_bert_forward.1} parent=1 // pred_fallthru
      _
    // Predicated region
    $region74: #{pipeline_parallel_bert_forward.1} parent=1 // pred_check
      _
    $region75: #{pipeline_parallel_bert_forward.1} parent=1 // pred_check_branch
      %193 = sbr.rel (0) target = $region77
    $region76: #{pipeline_parallel_bert_forward.1} parent=1 // pred_region
      %194 = dma.done [#allocation3], 16
    $region77: #{pipeline_parallel_bert_forward.1} parent=1 // pred_fallthru
      _
    // Predicated region
    $region78: #{pipeline_parallel_bert_forward.1} parent=1 // pred_check
      _
    $region79: #{pipeline_parallel_bert_forward.1} parent=1 // pred_check_branch
      %196 = sbr.rel (0) target = $region81
    $region80: #{pipeline_parallel_bert_forward.1} parent=1 // pred_region
      %197 = dma.done [#allocation5], 24576
    $region81: #{pipeline_parallel_bert_forward.1} parent=1 // pred_fallthru
      _
    // Predicated region
    $region82: #{pipeline_parallel_bert_forward.1} parent=1 // pred_check
      _
    $region83: #{pipeline_parallel_bert_forward.1} parent=1 // pred_check_branch
      %199 = sbr.rel (0) target = $region85
    $region84: #{pipeline_parallel_bert_forward.1} parent=1 // pred_region
      %200 = dma.done [#allocation5], 384
    $region85: #{pipeline_parallel_bert_forward.1} parent=1 // pred_fallthru
      _
    // Predicated region
    $region86: #{pipeline_parallel_bert_forward.1} parent=1 // pred_check
      _
    $region87: #{pipeline_parallel_bert_forward.1} parent=1 // pred_check_branch
      %202 = sbr.rel (0) target = $region89
    $region88: #{pipeline_parallel_bert_forward.1} parent=1 // pred_region
      %203 = dma.done [#allocation8], 32
    $region89: #{pipeline_parallel_bert_forward.1} parent=1 // pred_fallthru
      _
    // Predicated region
    $region90: #{pipeline_parallel_bert_forward.1} parent=1 // pred_check
      _
    $region91: #{pipeline_parallel_bert_forward.1} parent=1 // pred_check_branch
      %205 = sbr.rel (0) target = $region93
    $region92: #{pipeline_parallel_bert_forward.1} parent=1 // pred_region
      %206 = dma.done [#allocation8], 32
    $region93: #{pipeline_parallel_bert_forward.1} parent=1 // pred_fallthru
      _
    // Predicated region
    $region94: #{pipeline_parallel_bert_forward.1} parent=1 // pred_check
      _
    $region95: #{pipeline_parallel_bert_forward.1} parent=1 // pred_check_branch
      %208 = sbr.rel (0) target = $region97
    $region96: #{pipeline_parallel_bert_forward.1} parent=1 // pred_region
      %209 = dma.done [#allocation11], 32
    $region97: #{pipeline_parallel_bert_forward.1} parent=1 // pred_fallthru
      _
    // Predicated region
    $region98: #{pipeline_parallel_bert_forward.1} parent=1 // pred_check
      _
    $region99: #{pipeline_parallel_bert_forward.1} parent=1 // pred_check_branch
      %211 = sbr.rel (0) target = $region101
    $region100: #{pipeline_parallel_bert_forward.1} parent=1 // pred_region
      %212 = dma.done [#allocation11], 2048
    $region101: #{pipeline_parallel_bert_forward.1} parent=1 // pred_fallthru
      _
    // Predicated region
    $region102: #{pipeline_parallel_bert_forward.1} parent=1 // pred_check
      _
    $region103: #{pipeline_parallel_bert_forward.1} parent=1 // pred_check_branch
      %214 = sbr.rel (0) target = $region105
    $region104: #{pipeline_parallel_bert_forward.1} parent=1 // pred_region
      %215 = dma.done [#allocation14], 32
    $region105: #{pipeline_parallel_bert_forward.1} parent=1 // pred_fallthru
      _
    // Predicated region
    $region106: #{pipeline_parallel_bert_forward.1} parent=1 // pred_check
      _
    $region107: #{pipeline_parallel_bert_forward.1} parent=1 // pred_check_branch
      %217 = sbr.rel (0) target = $region109
    $region108: #{pipeline_parallel_bert_forward.1} parent=1 // pred_region
      %218 = dma.done [#allocation14], 2048
    $region109: #{pipeline_parallel_bert_forward.1} parent=1 // pred_fallthru
      _
    // Predicated region
    $region110: #{pipeline_parallel_bert_forward.1} parent=1 // pred_check
      _
    $region111: #{pipeline_parallel_bert_forward.1} parent=1 // pred_check_branch
      %220 = sbr.rel (0) target = $region113
    $region112: #{pipeline_parallel_bert_forward.1} parent=1 // pred_region
      %221 = dma.done [#allocation17], 32
    $region113: #{pipeline_parallel_bert_forward.1} parent=1 // pred_fallthru
      _
    // Predicated region
    $region114: #{pipeline_parallel_bert_forward.1} parent=1 // pred_check
      _
    $region115: #{pipeline_parallel_bert_forward.1} parent=1 // pred_check_branch
      %223 = sbr.rel (0) target = $region117
    $region116: #{pipeline_parallel_bert_forward.1} parent=1 // pred_region
      %224 = dma.done [#allocation17], 32
    $region117: #{pipeline_parallel_bert_forward.1} parent=1 // pred_fallthru
      _
    // Predicated region
    $region118: #{pipeline_parallel_bert_forward.1} parent=1 // pred_check
      _
    $region119: #{pipeline_parallel_bert_forward.1} parent=1 // pred_check_branch
      %226 = sbr.rel (0) target = $region121
    $region120: #{pipeline_parallel_bert_forward.1} parent=1 // pred_region
      %227 = dma.done [#allocation20], 32
    $region121: #{pipeline_parallel_bert_forward.1} parent=1 // pred_fallthru
      _
    // Predicated region
    $region122: #{pipeline_parallel_bert_forward.1} parent=1 // pred_check
      _
    $region123: #{pipeline_parallel_bert_forward.1} parent=1 // pred_check_branch
      %229 = sbr.rel (0) target = $region125
    $region124: #{pipeline_parallel_bert_forward.1} parent=1 // pred_region
      %230 = dma.done [#allocation20], 16
    $region125: #{pipeline_parallel_bert_forward.1} parent=1 // pred_fallthru
      _
    %v232 = vlaneseq
    %v233 = vand.u32 %v232, 127
    %vm234 = vcmp.lt.s32.totalorder %v233, 32
    %v235 = vsel %vm234, 1, 0
    %v236 = vcvt.s32.f32 %v235
    %v237 = vld [vmem:[%s1] sm:$0xff]
    %v238 = vld [vmem:[%s1 + $0x8] sm:$0xff]
    %v239 = vld [vmem:[%s0] sm:$0xff]
    %v240 = vld [vmem:[%s0 + $0x8] sm:$0xff]
    %v241 = vld [vmem:[%s2] sm:$0x1]
    %v242 = vld [vmem:[#allocation2] sm:$0x1]
    %v243 = vmul.f32 %v239, %v236
    %v244 = vmul.f32 %v240, %v236
    %245 = vadd.xlane.f32.xlu0 %v243
    %v246 = vpop.xlane.xlu0 %245
    %247 = vadd.xlane.f32.xlu0 %v244
    %v248 = vpop.xlane.xlu0 %247
    %v249 = vmul.f32 %v246, 0.03125
    %v250 = vmul.f32 %v248, 0.03125
    %v251 = vsub.f32 %v239, %v249
    %v252 = vsub.f32 %v240, %v250
    %v253 = vmul.f32 %v251, %v236
    %v254 = vmul.f32 %v252, %v236
    %v255 = vmul.f32 %v253, %v253
    %v256 = vmul.f32 %v254, %v254
    %257 = vadd.xlane.f32.xlu0 %v255
    %v258 = vpop.xlane.xlu0 %257
    %259 = vadd.xlane.f32.xlu0 %v256
    %v260 = vpop.xlane.xlu0 %259
    %v261 = vmul.f32 %v258, 0.03125
    %v262 = vmul.f32 %v260, 0.03125
    %v263 = vadd.f32 %v261, 1e-12
    %v264 = vadd.f32 %v262, 1e-12
    %v265 = vrsqrt.pop %v263
    %v266 = vrsqrt.pop %v264
    %v267 = vmul.f32 %v253, %v265
    %v268 = vmul.f32 %v254, %v266
    %v270 = vlaneseq
    %v271 = vshrl.u32 %v270, 7
    %v272 = vsub.s32 0, %v271
    %v273 = vrot.slane %v241, %v272
    %v275 = vmul.f32 %v267, %v273
    %v276 = vmul.f32 %v268, %v273
    %v278 = vlaneseq
    %v279 = vshrl.u32 %v278, 7
    %v280 = vsub.s32 0, %v279
    %v281 = vrot.slane %v242, %v280
    %v283 = vadd.f32 %v275, %v281
    %v284 = vadd.f32 %v276, %v281
    %v285 = vpack.c.bf16 %v284, %v283
    %v286 = vld [vmem:[#allocation4] sm:$0xff]
    %v287 = vld [vmem:[#allocation4 + $0x8] sm:$0xff]
    %v288 = vld [vmem:[#allocation4 + $0x10] sm:$0xff]
    %v289 = vld [vmem:[#allocation4 + $0x18] sm:$0xff]
    %v290 = vld [vmem:[#allocation4 + $0x20] sm:$0xff]
    %v291 = vld [vmem:[#allocation4 + $0x28] sm:$0xff]
    %v292 = vld [vmem:[#allocation4 + $0x30] sm:$0xff]
    %v293 = vld [vmem:[#allocation4 + $0x38] sm:$0xff]
    %v294 = vld [vmem:[#allocation4 + $0x40] sm:$0xff]
    %v295 = vld [vmem:[#allocation4 + $0x48] sm:$0xff]
    %v296 = vld [vmem:[#allocation4 + $0x50] sm:$0xff]
    %v297 = vld [vmem:[#allocation4 + $0x58] sm:$0xff]
    %v298 = vld [vmem:[#allocation4 + $0x60] sm:$0xff]
    %v299 = vld [vmem:[#allocation4 + $0x68] sm:$0xff]
    %v300 = vld [vmem:[#allocation4 + $0x70] sm:$0xff]
    %v301 = vld [vmem:[#allocation4 + $0x78] sm:$0xff]
    %v302 = vld [vmem:[#allocation4 + $0x80] sm:$0xff]
    %v303 = vld [vmem:[#allocation4 + $0x88] sm:$0xff]
    %v304 = vld [vmem:[#allocation4 + $0x90] sm:$0xff]
    %v305 = vld [vmem:[#allocation4 + $0x98] sm:$0xff]
    %v306 = vld [vmem:[#allocation4 + $0xa0] sm:$0xff]
    %v307 = vld [vmem:[#allocation4 + $0xa8] sm:$0xff]
    %v308 = vld [vmem:[#allocation4 + $0xb0] sm:$0xff]
    %v309 = vld [vmem:[#allocation4 + $0xb8] sm:$0xff]
    %v310 = vld [vmem:[#allocation4 + $0xc0] sm:$0xff]
    %v311 = vld [vmem:[#allocation4 + $0xc8] sm:$0xff]
    %v312 = vld [vmem:[#allocation4 + $0xd0] sm:$0xff]
    %v313 = vld [vmem:[#allocation4 + $0xd8] sm:$0xff]
    %v314 = vld [vmem:[#allocation4 + $0xe0] sm:$0xff]
    %v315 = vld [vmem:[#allocation4 + $0xe8] sm:$0xff]
    %v316 = vld [vmem:[#allocation4 + $0xf0] sm:$0xff]
    %v317 = vld [vmem:[#allocation4 + $0xf8] sm:$0xff]
    %v318 = vld [vmem:[#allocation4 + $0x100] sm:$0xff]
    %v319 = vld [vmem:[#allocation4 + $0x108] sm:$0xff]
    %v320 = vld [vmem:[#allocation4 + $0x110] sm:$0xff]
    %v321 = vld [vmem:[#allocation4 + $0x118] sm:$0xff]
    %v322 = vld [vmem:[#allocation4 + $0x120] sm:$0xff]
    %v323 = vld [vmem:[#allocation4 + $0x128] sm:$0xff]
    %v324 = vld [vmem:[#allocation4 + $0x130] sm:$0xff]
    %v325 = vld [vmem:[#allocation4 + $0x138] sm:$0xff]
    %v326 = vld [vmem:[#allocation4 + $0x140] sm:$0xff]
    %v327 = vld [vmem:[#allocation4 + $0x148] sm:$0xff]
    %v328 = vld [vmem:[#allocation4 + $0x150] sm:$0xff]
    %v329 = vld [vmem:[#allocation4 + $0x158] sm:$0xff]
    %v330 = vld [vmem:[#allocation4 + $0x160] sm:$0xff]
    %v331 = vld [vmem:[#allocation4 + $0x168] sm:$0xff]
    %v332 = vld [vmem:[#allocation4 + $0x170] sm:$0xff]
    %v333 = vld [vmem:[#allocation4 + $0x178] sm:$0xff]
    %v334 = vld [vmem:[#allocation4 + $0x180] sm:$0xff]
    %v335 = vld [vmem:[#allocation4 + $0x188] sm:$0xff]
    %v336 = vld [vmem:[#allocation4 + $0x190] sm:$0xff]
    %v337 = vld [vmem:[#allocation4 + $0x198] sm:$0xff]
    %v338 = vld [vmem:[#allocation4 + $0x1a0] sm:$0xff]
    %v339 = vld [vmem:[#allocation4 + $0x1a8] sm:$0xff]
    %v340 = vld [vmem:[#allocation4 + $0x1b0] sm:$0xff]
    %v341 = vld [vmem:[#allocation4 + $0x1b8] sm:$0xff]
    %v342 = vld [vmem:[#allocation4 + $0x1c0] sm:$0xff]
    %v343 = vld [vmem:[#allocation4 + $0x1c8] sm:$0xff]
    %v344 = vld [vmem:[#allocation4 + $0x1d0] sm:$0xff]
    %v345 = vld [vmem:[#allocation4 + $0x1d8] sm:$0xff]
    %v346 = vld [vmem:[#allocation4 + $0x1e0] sm:$0xff]
    %v347 = vld [vmem:[#allocation4 + $0x1e8] sm:$0xff]
    %v348 = vld [vmem:[#allocation4 + $0x1f0] sm:$0xff]
    %v349 = vld [vmem:[#allocation4 + $0x1f8] sm:$0xff]
    %v350 = vld [vmem:[#allocation4 + $0x200] sm:$0xff]
    %v351 = vld [vmem:[#allocation4 + $0x208] sm:$0xff]
    %v352 = vld [vmem:[#allocation4 + $0x210] sm:$0xff]
    %v353 = vld [vmem:[#allocation4 + $0x218] sm:$0xff]
    %v354 = vld [vmem:[#allocation4 + $0x220] sm:$0xff]
    %v355 = vld [vmem:[#allocation4 + $0x228] sm:$0xff]
    %v356 = vld [vmem:[#allocation4 + $0x230] sm:$0xff]
    %v357 = vld [vmem:[#allocation4 + $0x238] sm:$0xff]
    %v358 = vld [vmem:[#allocation4 + $0x240] sm:$0xff]
    %v359 = vld [vmem:[#allocation4 + $0x248] sm:$0xff]
    %v360 = vld [vmem:[#allocation4 + $0x250] sm:$0xff]
    %v361 = vld [vmem:[#allocation4 + $0x258] sm:$0xff]
    %v362 = vld [vmem:[#allocation4 + $0x260] sm:$0xff]
    %v363 = vld [vmem:[#allocation4 + $0x268] sm:$0xff]
    %v364 = vld [vmem:[#allocation4 + $0x270] sm:$0xff]
    %v365 = vld [vmem:[#allocation4 + $0x278] sm:$0xff]
    %v366 = vld [vmem:[#allocation4 + $0x280] sm:$0xff]
    %v367 = vld [vmem:[#allocation4 + $0x288] sm:$0xff]
    %v368 = vld [vmem:[#allocation4 + $0x290] sm:$0xff]
    %v369 = vld [vmem:[#allocation4 + $0x298] sm:$0xff]
    %v370 = vld [vmem:[#allocation4 + $0x2a0] sm:$0xff]
    %v371 = vld [vmem:[#allocation4 + $0x2a8] sm:$0xff]
    %v372 = vld [vmem:[#allocation4 + $0x2b0] sm:$0xff]
    %v373 = vld [vmem:[#allocation4 + $0x2b8] sm:$0xff]
    %v374 = vld [vmem:[#allocation4 + $0x2c0] sm:$0xff]
    %v375 = vld [vmem:[#allocation4 + $0x2c8] sm:$0xff]
    %v376 = vld [vmem:[#allocation4 + $0x2d0] sm:$0xff]
    %v377 = vld [vmem:[#allocation4 + $0x2d8] sm:$0xff]
    %v378 = vld [vmem:[#allocation4 + $0x2e0] sm:$0xff]
    %v379 = vld [vmem:[#allocation4 + $0x2e8] sm:$0xff]
    %v380 = vld [vmem:[#allocation4 + $0x2f0] sm:$0xff]
    %v381 = vld [vmem:[#allocation4 + $0x2f8] sm:$0xff]
    %v382 = vld [vmem:[#allocation6] sm:$0xff]
    %v383 = vld [vmem:[#allocation6 + $0x8] sm:$0xf]
    %v386 = vlaneseq
    %v387 = vshrl.u32 %v386, 7
    %v388 = vsub.s32 0, %v387
    %v389 = vrot.slane %v382, %v388
    %v390 = vlaneseq
    %v391 = vshrl.u32 %v390, 7
    %v392 = vsub.s32 1, %v391
    %v393 = vrot.slane %v382, %v392
    %v394 = vlaneseq
    %v395 = vshrl.u32 %v394, 7
    %v396 = vsub.s32 2, %v395
    %v397 = vrot.slane %v382, %v396
    %v398 = vlaneseq
    %v399 = vshrl.u32 %v398, 7
    %v400 = vsub.s32 3, %v399
    %v401 = vrot.slane %v382, %v400
    %v402 = vlaneseq
    %v403 = vshrl.u32 %v402, 7
    %v404 = vsub.s32 4, %v403
    %v405 = vrot.slane %v382, %v404
    %v406 = vlaneseq
    %v407 = vshrl.u32 %v406, 7
    %v408 = vsub.s32 5, %v407
    %v409 = vrot.slane %v382, %v408
    %v410 = vlaneseq
    %v411 = vshrl.u32 %v410, 7
    %v412 = vsub.s32 6, %v411
    %v413 = vrot.slane %v382, %v412
    %v414 = vlaneseq
    %v415 = vshrl.u32 %v414, 7
    %v416 = vsub.s32 7, %v415
    %v417 = vrot.slane %v382, %v416
    %v418 = vlaneseq
    %v419 = vshrl.u32 %v418, 7
    %v420 = vsub.s32 0, %v419
    %v421 = vrot.slane %v383, %v420
    %v422 = vlaneseq
    %v423 = vshrl.u32 %v422, 7
    %v424 = vsub.s32 1, %v423
    %v425 = vrot.slane %v383, %v424
    %v426 = vlaneseq
    %v427 = vshrl.u32 %v426, 7
    %v428 = vsub.s32 2, %v427
    %v429 = vrot.slane %v383, %v428
    %v430 = vlaneseq
    %v431 = vshrl.u32 %v430, 7
    %v432 = vsub.s32 3, %v431
    %v433 = vrot.slane %v383, %v432
    %v542 = vunpack.c.l.b16 %v286
    %v543 = vunpack.c.h.b16 %v286
    %v544 = vunpack.c.l.b16 %v287
    %v545 = vunpack.c.h.b16 %v287
    %v546 = vunpack.c.l.b16 %v288
    %v547 = vunpack.c.h.b16 %v288
    %v548 = vunpack.c.l.b16 %v289
    %v549 = vunpack.c.h.b16 %v289
    %v550 = vunpack.c.l.b16 %v290
    %v551 = vunpack.c.h.b16 %v290
    %v552 = vunpack.c.l.b16 %v291
    %v553 = vunpack.c.h.b16 %v291
    %v554 = vunpack.c.l.b16 %v292
    %v555 = vunpack.c.h.b16 %v292
    %v556 = vunpack.c.l.b16 %v293
    %v557 = vunpack.c.h.b16 %v293
    %v558 = vunpack.c.l.b16 %v294
    %v559 = vunpack.c.h.b16 %v294
    %v560 = vunpack.c.l.b16 %v295
    %v561 = vunpack.c.h.b16 %v295
    %v562 = vunpack.c.l.b16 %v296
    %v563 = vunpack.c.h.b16 %v296
    %v564 = vunpack.c.l.b16 %v297
    %v565 = vunpack.c.h.b16 %v297
    %v566 = vunpack.c.l.b16 %v298
    %v567 = vunpack.c.h.b16 %v298
    %v568 = vunpack.c.l.b16 %v299
    %v569 = vunpack.c.h.b16 %v299
    %v570 = vunpack.c.l.b16 %v300
    %v571 = vunpack.c.h.b16 %v300
    %v572 = vunpack.c.l.b16 %v301
    %v573 = vunpack.c.h.b16 %v301
    %v574 = vunpack.c.l.b16 %v302
    %v575 = vunpack.c.h.b16 %v302
    %v576 = vunpack.c.l.b16 %v303
    %v577 = vunpack.c.h.b16 %v303
    %v578 = vunpack.c.l.b16 %v304
    %v579 = vunpack.c.h.b16 %v304
    %v580 = vunpack.c.l.b16 %v305
    %v581 = vunpack.c.h.b16 %v305
    %v582 = vunpack.c.l.b16 %v306
    %v583 = vunpack.c.h.b16 %v306
    %v584 = vunpack.c.l.b16 %v307
    %v585 = vunpack.c.h.b16 %v307
    %v586 = vunpack.c.l.b16 %v308
    %v587 = vunpack.c.h.b16 %v308
    %v588 = vunpack.c.l.b16 %v309
    %v589 = vunpack.c.h.b16 %v309
    %v590 = vunpack.c.l.b16 %v310
    %v591 = vunpack.c.h.b16 %v310
    %v592 = vunpack.c.l.b16 %v311
    %v593 = vunpack.c.h.b16 %v311
    %v594 = vunpack.c.l.b16 %v312
    %v595 = vunpack.c.h.b16 %v312
    %v596 = vunpack.c.l.b16 %v313
    %v597 = vunpack.c.h.b16 %v313
    %v598 = vunpack.c.l.b16 %v314
    %v599 = vunpack.c.h.b16 %v314
    %v600 = vunpack.c.l.b16 %v315
    %v601 = vunpack.c.h.b16 %v315
    %v602 = vunpack.c.l.b16 %v316
    %v603 = vunpack.c.h.b16 %v316
    %v604 = vunpack.c.l.b16 %v317
    %v605 = vunpack.c.h.b16 %v317
    %v606 = vunpack.c.l.b16 %v318
    %v607 = vunpack.c.h.b16 %v318
    %v608 = vunpack.c.l.b16 %v319
    %v609 = vunpack.c.h.b16 %v319
    %v610 = vunpack.c.l.b16 %v320
    %v611 = vunpack.c.h.b16 %v320
    %v612 = vunpack.c.l.b16 %v321
    %v613 = vunpack.c.h.b16 %v321
    %v614 = vunpack.c.l.b16 %v322
    %v615 = vunpack.c.h.b16 %v322
    %v616 = vunpack.c.l.b16 %v323
    %v617 = vunpack.c.h.b16 %v323
    %v618 = vunpack.c.l.b16 %v324
    %v619 = vunpack.c.h.b16 %v324
    %v620 = vunpack.c.l.b16 %v325
    %v621 = vunpack.c.h.b16 %v325
    %v622 = vunpack.c.l.b16 %v326
    %v623 = vunpack.c.h.b16 %v326
    %v624 = vunpack.c.l.b16 %v327
    %v625 = vunpack.c.h.b16 %v327
    %v626 = vunpack.c.l.b16 %v328
    %v627 = vunpack.c.h.b16 %v328
    %v628 = vunpack.c.l.b16 %v329
    %v629 = vunpack.c.h.b16 %v329
    %v630 = vunpack.c.l.b16 %v330
    %v631 = vunpack.c.h.b16 %v330
    %v632 = vunpack.c.l.b16 %v331
    %v633 = vunpack.c.h.b16 %v331
    %v634 = vunpack.c.l.b16 %v332
    %v635 = vunpack.c.h.b16 %v332
    %v636 = vunpack.c.l.b16 %v333
    %v637 = vunpack.c.h.b16 %v333
    %v638 = vunpack.c.l.b16 %v334
    %v639 = vunpack.c.h.b16 %v334
    %v640 = vunpack.c.l.b16 %v335
    %v641 = vunpack.c.h.b16 %v335
    %v642 = vunpack.c.l.b16 %v336
    %v643 = vunpack.c.h.b16 %v336
    %v644 = vunpack.c.l.b16 %v337
    %v645 = vunpack.c.h.b16 %v337
    %v646 = vunpack.c.l.b16 %v338
    %v647 = vunpack.c.h.b16 %v338
    %v648 = vunpack.c.l.b16 %v339
    %v649 = vunpack.c.h.b16 %v339
    %v650 = vunpack.c.l.b16 %v340
    %v651 = vunpack.c.h.b16 %v340
    %v652 = vunpack.c.l.b16 %v341
    %v653 = vunpack.c.h.b16 %v341
    %v654 = vunpack.c.l.b16 %v342
    %v655 = vunpack.c.h.b16 %v342
    %v656 = vunpack.c.l.b16 %v343
    %v657 = vunpack.c.h.b16 %v343
    %v658 = vunpack.c.l.b16 %v344
    %v659 = vunpack.c.h.b16 %v344
    %v660 = vunpack.c.l.b16 %v345
    %v661 = vunpack.c.h.b16 %v345
    %v662 = vunpack.c.l.b16 %v346
    %v663 = vunpack.c.h.b16 %v346
    %v664 = vunpack.c.l.b16 %v347
    %v665 = vunpack.c.h.b16 %v347
    %v666 = vunpack.c.l.b16 %v348
    %v667 = vunpack.c.h.b16 %v348
    %v668 = vunpack.c.l.b16 %v349
    %v669 = vunpack.c.h.b16 %v349
    %v670 = vunpack.c.l.b16 %v350
    %v671 = vunpack.c.h.b16 %v350
    %v672 = vunpack.c.l.b16 %v351
    %v673 = vunpack.c.h.b16 %v351
    %v674 = vunpack.c.l.b16 %v352
    %v675 = vunpack.c.h.b16 %v352
    %v676 = vunpack.c.l.b16 %v353
    %v677 = vunpack.c.h.b16 %v353
    %v678 = vunpack.c.l.b16 %v354
    %v679 = vunpack.c.h.b16 %v354
    %v680 = vunpack.c.l.b16 %v355
    %v681 = vunpack.c.h.b16 %v355
    %v682 = vunpack.c.l.b16 %v356
    %v683 = vunpack.c.h.b16 %v356
    %v684 = vunpack.c.l.b16 %v357
    %v685 = vunpack.c.h.b16 %v357
    %v686 = vunpack.c.l.b16 %v358
    %v687 = vunpack.c.h.b16 %v358
    %v688 = vunpack.c.l.b16 %v359
    %v689 = vunpack.c.h.b16 %v359
    %v690 = vunpack.c.l.b16 %v360
    %v691 = vunpack.c.h.b16 %v360
    %v692 = vunpack.c.l.b16 %v361
    %v693 = vunpack.c.h.b16 %v361
    %v694 = vunpack.c.l.b16 %v362
    %v695 = vunpack.c.h.b16 %v362
    %v696 = vunpack.c.l.b16 %v363
    %v697 = vunpack.c.h.b16 %v363
    %v698 = vunpack.c.l.b16 %v364
    %v699 = vunpack.c.h.b16 %v364
    %v700 = vunpack.c.l.b16 %v365
    %v701 = vunpack.c.h.b16 %v365
    %v702 = vunpack.c.l.b16 %v366
    %v703 = vunpack.c.h.b16 %v366
    %v704 = vunpack.c.l.b16 %v367
    %v705 = vunpack.c.h.b16 %v367
    %v706 = vunpack.c.l.b16 %v368
    %v707 = vunpack.c.h.b16 %v368
    %v708 = vunpack.c.l.b16 %v369
    %v709 = vunpack.c.h.b16 %v369
    %v710 = vunpack.c.l.b16 %v370
    %v711 = vunpack.c.h.b16 %v370
    %v712 = vunpack.c.l.b16 %v371
    %v713 = vunpack.c.h.b16 %v371
    %v714 = vunpack.c.l.b16 %v372
    %v715 = vunpack.c.h.b16 %v372
    %v716 = vunpack.c.l.b16 %v373
    %v717 = vunpack.c.h.b16 %v373
    %v718 = vunpack.c.l.b16 %v374
    %v719 = vunpack.c.h.b16 %v374
    %v720 = vunpack.c.l.b16 %v375
    %v721 = vunpack.c.h.b16 %v375
    %v722 = vunpack.c.l.b16 %v376
    %v723 = vunpack.c.h.b16 %v376
    %v724 = vunpack.c.l.b16 %v377
    %v725 = vunpack.c.h.b16 %v377
    %v726 = vunpack.c.l.b16 %v378
    %v727 = vunpack.c.h.b16 %v378
    %v728 = vunpack.c.l.b16 %v379
    %v729 = vunpack.c.h.b16 %v379
    %v730 = vunpack.c.l.b16 %v380
    %v731 = vunpack.c.h.b16 %v380
    %v732 = vunpack.c.l.b16 %v381
    %v733 = vunpack.c.h.b16 %v381
    %v734 = vpack.c.b16 %v554, %v542
    %v735 = vpack.c.b16 %v555, %v543
    %v736 = vpack.c.b16 %v556, %v544
    %v737 = vpack.c.b16 %v557, %v545
    %v738 = vpack.c.b16 %v558, %v546
    %v739 = vpack.c.b16 %v559, %v547
    %v740 = vpack.c.b16 %v560, %v548
    %v741 = vpack.c.b16 %v561, %v549
    %v742 = vpack.c.b16 %v562, %v550
    %v743 = vpack.c.b16 %v563, %v551
    %v744 = vpack.c.b16 %v564, %v552
    %v745 = vpack.c.b16 %v565, %v553
    %v746 = vpack.c.b16 %v578, %v566
    %v747 = vpack.c.b16 %v579, %v567
    %v748 = vpack.c.b16 %v580, %v568
    %v749 = vpack.c.b16 %v581, %v569
    %v750 = vpack.c.b16 %v582, %v570
    %v751 = vpack.c.b16 %v583, %v571
    %v752 = vpack.c.b16 %v584, %v572
    %v753 = vpack.c.b16 %v585, %v573
    %v754 = vpack.c.b16 %v586, %v574
    %v755 = vpack.c.b16 %v587, %v575
    %v756 = vpack.c.b16 %v588, %v576
    %v757 = vpack.c.b16 %v589, %v577
    %v758 = vpack.c.b16 %v602, %v590
    %v759 = vpack.c.b16 %v603, %v591
    %v760 = vpack.c.b16 %v604, %v592
    %v761 = vpack.c.b16 %v605, %v593
    %v762 = vpack.c.b16 %v606, %v594
    %v763 = vpack.c.b16 %v607, %v595
    %v764 = vpack.c.b16 %v608, %v596
    %v765 = vpack.c.b16 %v609, %v597
    %v766 = vpack.c.b16 %v610, %v598
    %v767 = vpack.c.b16 %v611, %v599
    %v768 = vpack.c.b16 %v612, %v600
    %v769 = vpack.c.b16 %v613, %v601
    %v770 = vpack.c.b16 %v626, %v614
    %v771 = vpack.c.b16 %v627, %v615
    %v772 = vpack.c.b16 %v628, %v616
    %v773 = vpack.c.b16 %v629, %v617
    %v774 = vpack.c.b16 %v630, %v618
    %v775 = vpack.c.b16 %v631, %v619
    %v776 = vpack.c.b16 %v632, %v620
    %v777 = vpack.c.b16 %v633, %v621
    %v778 = vpack.c.b16 %v634, %v622
    %v779 = vpack.c.b16 %v635, %v623
    %v780 = vpack.c.b16 %v636, %v624
    %v781 = vpack.c.b16 %v637, %v625
    %v782 = vpack.c.b16 %v650, %v638
    %v783 = vpack.c.b16 %v651, %v639
    %v784 = vpack.c.b16 %v652, %v640
    %v785 = vpack.c.b16 %v653, %v641
    %v786 = vpack.c.b16 %v654, %v642
    %v787 = vpack.c.b16 %v655, %v643
    %v788 = vpack.c.b16 %v656, %v644
    %v789 = vpack.c.b16 %v657, %v645
    %v790 = vpack.c.b16 %v658, %v646
    %v791 = vpack.c.b16 %v659, %v647
    %v792 = vpack.c.b16 %v660, %v648
    %v793 = vpack.c.b16 %v661, %v649
    %v794 = vpack.c.b16 %v674, %v662
    %v795 = vpack.c.b16 %v675, %v663
    %v796 = vpack.c.b16 %v676, %v664
    %v797 = vpack.c.b16 %v677, %v665
    %v798 = vpack.c.b16 %v678, %v666
    %v799 = vpack.c.b16 %v679, %v667
    %v800 = vpack.c.b16 %v680, %v668
    %v801 = vpack.c.b16 %v681, %v669
    %v802 = vpack.c.b16 %v682, %v670
    %v803 = vpack.c.b16 %v683, %v671
    %v804 = vpack.c.b16 %v684, %v672
    %v805 = vpack.c.b16 %v685, %v673
    %v806 = vpack.c.b16 %v698, %v686
    %v807 = vpack.c.b16 %v699, %v687
    %v808 = vpack.c.b16 %v700, %v688
    %v809 = vpack.c.b16 %v701, %v689
    %v810 = vpack.c.b16 %v702, %v690
    %v811 = vpack.c.b16 %v703, %v691
    %v812 = vpack.c.b16 %v704, %v692
    %v813 = vpack.c.b16 %v705, %v693
    %v814 = vpack.c.b16 %v706, %v694
    %v815 = vpack.c.b16 %v707, %v695
    %v816 = vpack.c.b16 %v708, %v696
    %v817 = vpack.c.b16 %v709, %v697
    %v818 = vpack.c.b16 %v722, %v710
    %v819 = vpack.c.b16 %v723, %v711
    %v820 = vpack.c.b16 %v724, %v712
    %v821 = vpack.c.b16 %v725, %v713
    %v822 = vpack.c.b16 %v726, %v714
    %v823 = vpack.c.b16 %v727, %v715
    %v824 = vpack.c.b16 %v728, %v716
    %v825 = vpack.c.b16 %v729, %v717
    %v826 = vpack.c.b16 %v730, %v718
    %v827 = vpack.c.b16 %v731, %v719
    %v828 = vpack.c.b16 %v732, %v720
    %v829 = vpack.c.b16 %v733, %v721
    %926 = vmatprep.subr.bf16.mxu0 %v819
    %927 = vmatpush1.bf16.msra.mxu0 %v818
    %928 = vmatprep.subr.bf16.mxu0 %v807
    %929 = vmatpush1.bf16.msra.mxu0 %v806
    %930 = vmatprep.subr.bf16.mxu0 %v795
    %931 = vmatpush1.bf16.msra.mxu0 %v794
    %932 = vmatprep.subr.bf16.mxu0 %v783
    %933 = vmatpush1.bf16.msra.mxu0 %v782
    %934 = vmatprep.subr.bf16.mxu0 %v771
    %935 = vmatpush1.bf16.msra.mxu0 %v770
    %936 = vmatprep.subr.bf16.mxu0 %v759
    %937 = vmatpush1.bf16.msra.mxu0 %v758
    %938 = vmatprep.subr.bf16.mxu0 %v747
    %939 = vmatpush1.bf16.msra.mxu0 %v746
    %940 = vmatprep.subr.bf16.mxu0 %v735
    %941 = vmatpush1.bf16.msra.mxu0 %v734
    %942 = vmatprep.subr.bf16.mxu0 0
    %943 = vmatpush2.bf16.msra.mxu0 0
    %944 = vmatprep.subr.bf16.mxu0 0
    %945 = vmatpush2.bf16.msra.mxu0 0
    %946 = vmatprep.subr.bf16.mxu0 0
    %947 = vmatpush2.bf16.msra.mxu0 0
    %948 = vmatprep.subr.bf16.mxu0 0
    %949 = vmatpush2.bf16.msra.mxu0 0
    %950 = vmatprep.subr.bf16.mxu0 0
    %951 = vmatpush2.bf16.msra.mxu0 0
    %952 = vmatprep.subr.bf16.mxu0 0
    %953 = vmatpush2.bf16.msra.mxu0 0
    %954 = vmatprep.subr.bf16.mxu0 0
    %955 = vmatpush2.bf16.msra.mxu0 0
    %956 = vmatprep.subr.bf16.mxu0 0
    %957 = vmatpush2.bf16.msra.mxu0 0
    %958 = vmatprep.mubr.bf16.mxu0 0
    %959 = vmatmul.mubr.bf16.gmra.mxu0 %v285
    %v960 = vpop.f32.mrf.mxu0
    %v961 = vadd.f32 %v389, %v960
    %v962 = vpop.f32.mrf.mxu0
    %v963 = vadd.f32 %v393, %v962
    %v964 = vpop.f32.mrf.mxu0
    %v965 = vadd.f32 %v389, %v964
    %v966 = vpop.f32.mrf.mxu0
    %v967 = vadd.f32 %v393, %v966
    %968 = vdwg.mxu0
    %969 = vmatprep.subr.bf16.mxu0 %v821
    %970 = vmatpush1.bf16.msra.mxu0 %v820
    %971 = vmatprep.subr.bf16.mxu0 %v809
    %972 = vmatpush1.bf16.msra.mxu0 %v808
    %973 = vmatprep.subr.bf16.mxu0 %v797
    %974 = vmatpush1.bf16.msra.mxu0 %v796
    %975 = vmatprep.subr.bf16.mxu0 %v785
    %976 = vmatpush1.bf16.msra.mxu0 %v784
    %977 = vmatprep.subr.bf16.mxu0 %v773
    %978 = vmatpush1.bf16.msra.mxu0 %v772
    %979 = vmatprep.subr.bf16.mxu0 %v761
    %980 = vmatpush1.bf16.msra.mxu0 %v760
    %981 = vmatprep.subr.bf16.mxu0 %v749
    %982 = vmatpush1.bf16.msra.mxu0 %v748
    %983 = vmatprep.subr.bf16.mxu0 %v737
    %984 = vmatpush1.bf16.msra.mxu0 %v736
    %985 = vmatprep.subr.bf16.mxu0 0
    %986 = vmatpush2.bf16.msra.mxu0 0
    %987 = vmatprep.subr.bf16.mxu0 0
    %988 = vmatpush2.bf16.msra.mxu0 0
    %989 = vmatprep.subr.bf16.mxu0 0
    %990 = vmatpush2.bf16.msra.mxu0 0
    %991 = vmatprep.subr.bf16.mxu0 0
    %992 = vmatpush2.bf16.msra.mxu0 0
    %993 = vmatprep.subr.bf16.mxu0 0
    %994 = vmatpush2.bf16.msra.mxu0 0
    %995 = vmatprep.subr.bf16.mxu0 0
    %996 = vmatpush2.bf16.msra.mxu0 0
    %997 = vmatprep.subr.bf16.mxu0 0
    %998 = vmatpush2.bf16.msra.mxu0 0
    %999 = vmatprep.subr.bf16.mxu0 0
    %1000 = vmatpush2.bf16.msra.mxu0 0
    %1001 = vmatprep.mubr.bf16.mxu0 0
    %1002 = vmatmul.mubr.bf16.gmra.mxu0 %v285
    %v1003 = vpop.f32.mrf.mxu0
    %v1004 = vadd.f32 %v397, %v1003
    %v1005 = vpop.f32.mrf.mxu0
    %v1006 = vadd.f32 %v401, %v1005
    %v1007 = vpop.f32.mrf.mxu0
    %v1008 = vadd.f32 %v397, %v1007
    %v1009 = vpop.f32.mrf.mxu0
    %v1010 = vadd.f32 %v401, %v1009
    %1011 = vdwg.mxu0
    %1012 = vmatprep.subr.bf16.mxu0 %v823
    %1013 = vmatpush1.bf16.msra.mxu0 %v822
    %1014 = vmatprep.subr.bf16.mxu0 %v811
    %1015 = vmatpush1.bf16.msra.mxu0 %v810
    %1016 = vmatprep.subr.bf16.mxu0 %v799
    %1017 = vmatpush1.bf16.msra.mxu0 %v798
    %1018 = vmatprep.subr.bf16.mxu0 %v787
    %1019 = vmatpush1.bf16.msra.mxu0 %v786
    %1020 = vmatprep.subr.bf16.mxu0 %v775
    %1021 = vmatpush1.bf16.msra.mxu0 %v774
    %1022 = vmatprep.subr.bf16.mxu0 %v763
    %1023 = vmatpush1.bf16.msra.mxu0 %v762
    %1024 = vmatprep.subr.bf16.mxu0 %v751
    %1025 = vmatpush1.bf16.msra.mxu0 %v750
    %1026 = vmatprep.subr.bf16.mxu0 %v739
    %1027 = vmatpush1.bf16.msra.mxu0 %v738
    %1028 = vmatprep.subr.bf16.mxu0 0
    %1029 = vmatpush2.bf16.msra.mxu0 0
    %1030 = vmatprep.subr.bf16.mxu0 0
    %1031 = vmatpush2.bf16.msra.mxu0 0
    %1032 = vmatprep.subr.bf16.mxu0 0
    %1033 = vmatpush2.bf16.msra.mxu0 0
    %1034 = vmatprep.subr.bf16.mxu0 0
    %1035 = vmatpush2.bf16.msra.mxu0 0
    %1036 = vmatprep.subr.bf16.mxu0 0
    %1037 = vmatpush2.bf16.msra.mxu0 0
    %1038 = vmatprep.subr.bf16.mxu0 0
    %1039 = vmatpush2.bf16.msra.mxu0 0
    %1040 = vmatprep.subr.bf16.mxu0 0
    %1041 = vmatpush2.bf16.msra.mxu0 0
    %1042 = vmatprep.subr.bf16.mxu0 0
    %1043 = vmatpush2.bf16.msra.mxu0 0
    %1044 = vmatprep.mubr.bf16.mxu0 0
    %1045 = vmatmul.mubr.bf16.gmra.mxu0 %v285
    %v1046 = vpop.f32.mrf.mxu0
    %v1047 = vadd.f32 %v405, %v1046
    %v1048 = vpop.f32.mrf.mxu0
    %v1049 = vadd.f32 %v409, %v1048
    %v1050 = vpop.f32.mrf.mxu0
    %v1051 = vadd.f32 %v405, %v1050
    %v1052 = vpop.f32.mrf.mxu0
    %v1053 = vadd.f32 %v409, %v1052
    %1054 = vdwg.mxu0
    %1055 = vmatprep.subr.bf16.mxu0 %v825
    %1056 = vmatpush1.bf16.msra.mxu0 %v824
    %1057 = vmatprep.subr.bf16.mxu0 %v813
    %1058 = vmatpush1.bf16.msra.mxu0 %v812
    %1059 = vmatprep.subr.bf16.mxu0 %v801
    %1060 = vmatpush1.bf16.msra.mxu0 %v800
    %1061 = vmatprep.subr.bf16.mxu0 %v789
    %1062 = vmatpush1.bf16.msra.mxu0 %v788
    %1063 = vmatprep.subr.bf16.mxu0 %v777
    %1064 = vmatpush1.bf16.msra.mxu0 %v776
    %1065 = vmatprep.subr.bf16.mxu0 %v765
    %1066 = vmatpush1.bf16.msra.mxu0 %v764
    %1067 = vmatprep.subr.bf16.mxu0 %v753
    %1068 = vmatpush1.bf16.msra.mxu0 %v752
    %1069 = vmatprep.subr.bf16.mxu0 %v741
    %1070 = vmatpush1.bf16.msra.mxu0 %v740
    %1071 = vmatprep.subr.bf16.mxu0 0
    %1072 = vmatpush2.bf16.msra.mxu0 0
    %1073 = vmatprep.subr.bf16.mxu0 0
    %1074 = vmatpush2.bf16.msra.mxu0 0
    %1075 = vmatprep.subr.bf16.mxu0 0
    %1076 = vmatpush2.bf16.msra.mxu0 0
    %1077 = vmatprep.subr.bf16.mxu0 0
    %1078 = vmatpush2.bf16.msra.mxu0 0
    %1079 = vmatprep.subr.bf16.mxu0 0
    %1080 = vmatpush2.bf16.msra.mxu0 0
    %1081 = vmatprep.subr.bf16.mxu0 0
    %1082 = vmatpush2.bf16.msra.mxu0 0
    %1083 = vmatprep.subr.bf16.mxu0 0
    %1084 = vmatpush2.bf16.msra.mxu0 0
    %1085 = vmatprep.subr.bf16.mxu0 0
    %1086 = vmatpush2.bf16.msra.mxu0 0
    %1087 = vmatprep.mubr.bf16.mxu0 0
    %1088 = vmatmul.mubr.bf16.gmra.mxu0 %v285
    %v1089 = vpop.f32.mrf.mxu0
    %v1090 = vadd.f32 %v413, %v1089
    %v1091 = vpop.f32.mrf.mxu0
    %v1092 = vadd.f32 %v417, %v1091
    %v1093 = vpop.f32.mrf.mxu0
    %v1094 = vadd.f32 %v413, %v1093
    %v1095 = vpop.f32.mrf.mxu0
    %v1096 = vadd.f32 %v417, %v1095
    %1097 = vdwg.mxu0
    %1098 = vmatprep.subr.bf16.mxu0 %v827
    %1099 = vmatpush1.bf16.msra.mxu0 %v826
    %1100 = vmatprep.subr.bf16.mxu0 %v815
    %1101 = vmatpush1.bf16.msra.mxu0 %v814
    %1102 = vmatprep.subr.bf16.mxu0 %v803
    %1103 = vmatpush1.bf16.msra.mxu0 %v802
    %1104 = vmatprep.subr.bf16.mxu0 %v791
    %1105 = vmatpush1.bf16.msra.mxu0 %v790
    %1106 = vmatprep.subr.bf16.mxu0 %v779
    %1107 = vmatpush1.bf16.msra.mxu0 %v778
    %1108 = vmatprep.subr.bf16.mxu0 %v767
    %1109 = vmatpush1.bf16.msra.mxu0 %v766
    %1110 = vmatprep.subr.bf16.mxu0 %v755
    %1111 = vmatpush1.bf16.msra.mxu0 %v754
    %1112 = vmatprep.subr.bf16.mxu0 %v743
    %1113 = vmatpush1.bf16.msra.mxu0 %v742
    %1114 = vmatprep.subr.bf16.mxu0 0
    %1115 = vmatpush2.bf16.msra.mxu0 0
    %1116 = vmatprep.subr.bf16.mxu0 0
    %1117 = vmatpush2.bf16.msra.mxu0 0
    %1118 = vmatprep.subr.bf16.mxu0 0
    %1119 = vmatpush2.bf16.msra.mxu0 0
    %1120 = vmatprep.subr.bf16.mxu0 0
    %1121 = vmatpush2.bf16.msra.mxu0 0
    %1122 = vmatprep.subr.bf16.mxu0 0
    %1123 = vmatpush2.bf16.msra.mxu0 0
    %1124 = vmatprep.subr.bf16.mxu0 0
    %1125 = vmatpush2.bf16.msra.mxu0 0
    %1126 = vmatprep.subr.bf16.mxu0 0
    %1127 = vmatpush2.bf16.msra.mxu0 0
    %1128 = vmatprep.subr.bf16.mxu0 0
    %1129 = vmatpush2.bf16.msra.mxu0 0
    %1130 = vmatprep.mubr.bf16.mxu0 0
    %1131 = vmatmul.mubr.bf16.gmra.mxu0 %v285
    %v1132 = vpop.f32.mrf.mxu0
    %v1133 = vadd.f32 %v421, %v1132
    %v1134 = vpop.f32.mrf.mxu0
    %v1135 = vadd.f32 %v425, %v1134
    %v1136 = vpop.f32.mrf.mxu0
    %v1137 = vadd.f32 %v421, %v1136
    %v1138 = vpop.f32.mrf.mxu0
    %v1139 = vadd.f32 %v425, %v1138
    %1140 = vdwg.mxu0
    %1141 = vmatprep.subr.bf16.mxu0 %v829
    %1142 = vmatpush1.bf16.msra.mxu0 %v828
    %1143 = vmatprep.subr.bf16.mxu0 %v817
    %1144 = vmatpush1.bf16.msra.mxu0 %v816
    %1145 = vmatprep.subr.bf16.mxu0 %v805
    %1146 = vmatpush1.bf16.msra.mxu0 %v804
    %1147 = vmatprep.subr.bf16.mxu0 %v793
    %1148 = vmatpush1.bf16.msra.mxu0 %v792
    %1149 = vmatprep.subr.bf16.mxu0 %v781
    %1150 = vmatpush1.bf16.msra.mxu0 %v780
    %1151 = vmatprep.subr.bf16.mxu0 %v769
    %1152 = vmatpush1.bf16.msra.mxu0 %v768
    %1153 = vmatprep.subr.bf16.mxu0 %v757
    %1154 = vmatpush1.bf16.msra.mxu0 %v756
    %1155 = vmatprep.subr.bf16.mxu0 %v745
    %1156 = vmatpush1.bf16.msra.mxu0 %v744
    %1157 = vmatprep.subr.bf16.mxu0 0
    %1158 = vmatpush2.bf16.msra.mxu0 0
    %1159 = vmatprep.subr.bf16.mxu0 0
    %1160 = vmatpush2.bf16.msra.mxu0 0
    %1161 = vmatprep.subr.bf16.mxu0 0
    %1162 = vmatpush2.bf16.msra.mxu0 0
    %1163 = vmatprep.subr.bf16.mxu0 0
    %1164 = vmatpush2.bf16.msra.mxu0 0
    %1165 = vmatprep.subr.bf16.mxu0 0
    %1166 = vmatpush2.bf16.msra.mxu0 0
    %1167 = vmatprep.subr.bf16.mxu0 0
    %1168 = vmatpush2.bf16.msra.mxu0 0
    %1169 = vmatprep.subr.bf16.mxu0 0
    %1170 = vmatpush2.bf16.msra.mxu0 0
    %1171 = vmatprep.subr.bf16.mxu0 0
    %1172 = vmatpush2.bf16.msra.mxu0 0
    %1173 = vmatprep.mubr.bf16.mxu0 0
    %1174 = vmatmul.mubr.bf16.gmra.mxu0 %v285
    %v1175 = vpop.f32.mrf.mxu0
    %v1176 = vadd.f32 %v429, %v1175
    %v1177 = vpop.f32.mrf.mxu0
    %v1178 = vadd.f32 %v433, %v1177
    %v1179 = vpop.f32.mrf.mxu0
    %v1180 = vadd.f32 %v429, %v1179
    %v1181 = vpop.f32.mrf.mxu0
    %v1182 = vadd.f32 %v433, %v1181
    %1183 = vdwg.mxu0
    %1184 = vmatprep.subr.mxu0 0.0
    %1185 = vmatpush1.xpose.msra.mxu0 0.0
    %1186 = vmatprep.subr.mxu0 0.0
    %1187 = vmatpush1.xpose.msra.mxu0 0.0
    %1188 = vmatprep.subr.mxu0 0.0
    %1189 = vmatpush1.xpose.msra.mxu0 0.0
    %1190 = vmatprep.subr.mxu0 0.0
    %1191 = vmatpush1.xpose.msra.mxu0 0.0
    %1192 = vmatprep.subr.mxu0 0.0
    %1193 = vmatpush1.xpose.msra.mxu0 0.0
    %1194 = vmatprep.subr.mxu0 0.0
    %1195 = vmatpush1.xpose.msra.mxu0 0.0
    %1196 = vmatprep.subr.mxu0 0.0
    %1197 = vmatpush1.xpose.msra.mxu0 0.0
    %1198 = vmatprep.subr.mxu0 0.0
    %1199 = vmatpush1.xpose.msra.mxu0 0.0
    %1200 = vmatprep.subr.mxu0 0.0
    %1201 = vmatpush1.xpose.msra.mxu0 0.0
    %1202 = vmatprep.subr.mxu0 0.0
    %1203 = vmatpush1.xpose.msra.mxu0 0.0
    %1204 = vmatprep.subr.mxu0 0.0
    %1205 = vmatpush1.xpose.msra.mxu0 0.0
    %1206 = vmatprep.subr.mxu0 0.0
    %1207 = vmatpush1.xpose.msra.mxu0 0.0
    %1208 = vmatprep.subr.mxu0 0.0
    %1209 = vmatpush1.xpose.msra.mxu0 0.0
    %1210 = vmatprep.subr.mxu0 0.0
    %1211 = vmatpush1.xpose.msra.mxu0 0.0
    %1212 = vmatprep.subr.mxu0 0.0
    %1213 = vmatpush1.xpose.msra.mxu0 %v1051
    %1214 = vmatprep.subr.mxu0 0.0
    %1215 = vmatpush1.xpose.msra.mxu0 %v1047
    %1216 = vmatprep.subr.mxu0 0.0
    %1217 = vmatpush2.xpose.msra.mxu0 0.0
    %1218 = vmatprep.subr.mxu0 0.0
    %1219 = vmatpush2.xpose.msra.mxu0 0.0
    %1220 = vmatprep.subr.mxu0 0.0
    %1221 = vmatpush2.xpose.msra.mxu0 0.0
    %1222 = vmatprep.subr.mxu0 0.0
    %1223 = vmatpush2.xpose.msra.mxu0 0.0
    %1224 = vmatprep.subr.mxu0 0.0
    %1225 = vmatpush2.xpose.msra.mxu0 0.0
    %1226 = vmatprep.subr.mxu0 0.0
    %1227 = vmatpush2.xpose.msra.mxu0 0.0
    %1228 = vmatprep.subr.mxu0 0.0
    %1229 = vmatpush2.xpose.msra.mxu0 0.0
    %1230 = vmatprep.subr.mxu0 0.0
    %1231 = vmatpush2.xpose.msra.mxu0 0.0
    %1232 = vmatprep.subr.mxu0 0.0
    %1233 = vmatpush2.xpose.msra.mxu0 0.0
    %1234 = vmatprep.subr.mxu0 0.0
    %1235 = vmatpush2.xpose.msra.mxu0 0.0
    %1236 = vmatprep.subr.mxu0 0.0
    %1237 = vmatpush2.xpose.msra.mxu0 0.0
    %1238 = vmatprep.subr.mxu0 0.0
    %1239 = vmatpush2.xpose.msra.mxu0 0.0
    %1240 = vmatprep.subr.mxu0 0.0
    %1241 = vmatpush2.xpose.msra.mxu0 0.0
    %1242 = vmatprep.subr.mxu0 0.0
    %1243 = vmatpush2.xpose.msra.mxu0 0.0
    %1244 = vmatprep.subr.mxu0 0.0
    %1245 = vmatpush2.xpose.msra.mxu0 0.0
    %1246 = vmatprep.subr.mxu0 0.0
    %1247 = vmatpush2.xpose.msra.mxu0 0.0
    %1248 = vmatprep.mubr.f32.mxu0 0.0
    %1249 = vmatmul.mubr.f32.gmra.mxu0 %v961
    %v1250 = vpop.f32.mrf.mxu0
    %v1251 = vadd.f32 0.0, %v1250
    %v1252 = vpop.f32.mrf.mxu0
    %1253 = vmatprep.mubr.f32.mxu0 0.0
    %1254 = vmatmul.mubr.f32.gmra.mxu0 %v965
    %v1255 = vpop.f32.mrf.mxu0
    %v1256 = vadd.f32 0.0, %v1255
    %v1257 = vpop.f32.mrf.mxu0
    %1258 = vdwg.mxu0
    %1259 = vmatprep.subr.mxu0 0.0
    %1260 = vmatpush1.xpose.msra.mxu0 0.0
    %1261 = vmatprep.subr.mxu0 0.0
    %1262 = vmatpush1.xpose.msra.mxu0 0.0
    %1263 = vmatprep.subr.mxu0 0.0
    %1264 = vmatpush1.xpose.msra.mxu0 0.0
    %1265 = vmatprep.subr.mxu0 0.0
    %1266 = vmatpush1.xpose.msra.mxu0 0.0
    %1267 = vmatprep.subr.mxu0 0.0
    %1268 = vmatpush1.xpose.msra.mxu0 0.0
    %1269 = vmatprep.subr.mxu0 0.0
    %1270 = vmatpush1.xpose.msra.mxu0 0.0
    %1271 = vmatprep.subr.mxu0 0.0
    %1272 = vmatpush1.xpose.msra.mxu0 0.0
    %1273 = vmatprep.subr.mxu0 0.0
    %1274 = vmatpush1.xpose.msra.mxu0 0.0
    %1275 = vmatprep.subr.mxu0 0.0
    %1276 = vmatpush1.xpose.msra.mxu0 0.0
    %1277 = vmatprep.subr.mxu0 0.0
    %1278 = vmatpush1.xpose.msra.mxu0 0.0
    %1279 = vmatprep.subr.mxu0 0.0
    %1280 = vmatpush1.xpose.msra.mxu0 0.0
    %1281 = vmatprep.subr.mxu0 0.0
    %1282 = vmatpush1.xpose.msra.mxu0 0.0
    %1283 = vmatprep.subr.mxu0 0.0
    %1284 = vmatpush1.xpose.msra.mxu0 0.0
    %1285 = vmatprep.subr.mxu0 0.0
    %1286 = vmatpush1.xpose.msra.mxu0 0.0
    %1287 = vmatprep.subr.mxu0 0.0
    %1288 = vmatpush1.xpose.msra.mxu0 %v1053
    %1289 = vmatprep.subr.mxu0 0.0
    %1290 = vmatpush1.xpose.msra.mxu0 %v1049
    %1291 = vmatprep.subr.mxu0 0.0
    %1292 = vmatpush2.xpose.msra.mxu0 0.0
    %1293 = vmatprep.subr.mxu0 0.0
    %1294 = vmatpush2.xpose.msra.mxu0 0.0
    %1295 = vmatprep.subr.mxu0 0.0
    %1296 = vmatpush2.xpose.msra.mxu0 0.0
    %1297 = vmatprep.subr.mxu0 0.0
    %1298 = vmatpush2.xpose.msra.mxu0 0.0
    %1299 = vmatprep.subr.mxu0 0.0
    %1300 = vmatpush2.xpose.msra.mxu0 0.0
    %1301 = vmatprep.subr.mxu0 0.0
    %1302 = vmatpush2.xpose.msra.mxu0 0.0
    %1303 = vmatprep.subr.mxu0 0.0
    %1304 = vmatpush2.xpose.msra.mxu0 0.0
    %1305 = vmatprep.subr.mxu0 0.0
    %1306 = vmatpush2.xpose.msra.mxu0 0.0
    %1307 = vmatprep.subr.mxu0 0.0
    %1308 = vmatpush2.xpose.msra.mxu0 0.0
    %1309 = vmatprep.subr.mxu0 0.0
    %1310 = vmatpush2.xpose.msra.mxu0 0.0
    %1311 = vmatprep.subr.mxu0 0.0
    %1312 = vmatpush2.xpose.msra.mxu0 0.0
    %1313 = vmatprep.subr.mxu0 0.0
    %1314 = vmatpush2.xpose.msra.mxu0 0.0
    %1315 = vmatprep.subr.mxu0 0.0
    %1316 = vmatpush2.xpose.msra.mxu0 0.0
    %1317 = vmatprep.subr.mxu0 0.0
    %1318 = vmatpush2.xpose.msra.mxu0 0.0
    %1319 = vmatprep.subr.mxu0 0.0
    %1320 = vmatpush2.xpose.msra.mxu0 0.0
    %1321 = vmatprep.subr.mxu0 0.0
    %1322 = vmatpush2.xpose.msra.mxu0 0.0
    %1323 = vmatprep.mubr.f32.mxu0 0.0
    %1324 = vmatmul.mubr.f32.gmra.mxu0 %v963
    %v1325 = vpop.f32.mrf.mxu0
    %v1326 = vadd.f32 0.0, %v1325
    %v1327 = vpop.f32.mrf.mxu0
    %1328 = vmatprep.mubr.f32.mxu0 0.0
    %1329 = vmatmul.mubr.f32.gmra.mxu0 %v967
    %v1330 = vpop.f32.mrf.mxu0
    %v1331 = vadd.f32 0.0, %v1330
    %v1332 = vpop.f32.mrf.mxu0
    %1333 = vdwg.mxu0
    %1334 = vmatprep.subr.mxu0 0.0
    %1335 = vmatpush1.xpose.msra.mxu0 0.0
    %1336 = vmatprep.subr.mxu0 0.0
    %1337 = vmatpush1.xpose.msra.mxu0 0.0
    %1338 = vmatprep.subr.mxu0 0.0
    %1339 = vmatpush1.xpose.msra.mxu0 0.0
    %1340 = vmatprep.subr.mxu0 0.0
    %1341 = vmatpush1.xpose.msra.mxu0 0.0
    %1342 = vmatprep.subr.mxu0 0.0
    %1343 = vmatpush1.xpose.msra.mxu0 0.0
    %1344 = vmatprep.subr.mxu0 0.0
    %1345 = vmatpush1.xpose.msra.mxu0 0.0
    %1346 = vmatprep.subr.mxu0 0.0
    %1347 = vmatpush1.xpose.msra.mxu0 0.0
    %1348 = vmatprep.subr.mxu0 0.0
    %1349 = vmatpush1.xpose.msra.mxu0 0.0
    %1350 = vmatprep.subr.mxu0 0.0
    %1351 = vmatpush1.xpose.msra.mxu0 0.0
    %1352 = vmatprep.subr.mxu0 0.0
    %1353 = vmatpush1.xpose.msra.mxu0 0.0
    %1354 = vmatprep.subr.mxu0 0.0
    %1355 = vmatpush1.xpose.msra.mxu0 0.0
    %1356 = vmatprep.subr.mxu0 0.0
    %1357 = vmatpush1.xpose.msra.mxu0 0.0
    %1358 = vmatprep.subr.mxu0 0.0
    %1359 = vmatpush1.xpose.msra.mxu0 0.0
    %1360 = vmatprep.subr.mxu0 0.0
    %1361 = vmatpush1.xpose.msra.mxu0 0.0
    %1362 = vmatprep.subr.mxu0 0.0
    %1363 = vmatpush1.xpose.msra.mxu0 %v1094
    %1364 = vmatprep.subr.mxu0 0.0
    %1365 = vmatpush1.xpose.msra.mxu0 %v1090
    %1366 = vmatprep.subr.mxu0 0.0
    %1367 = vmatpush2.xpose.msra.mxu0 0.0
    %1368 = vmatprep.subr.mxu0 0.0
    %1369 = vmatpush2.xpose.msra.mxu0 0.0
    %1370 = vmatprep.subr.mxu0 0.0
    %1371 = vmatpush2.xpose.msra.mxu0 0.0
    %1372 = vmatprep.subr.mxu0 0.0
    %1373 = vmatpush2.xpose.msra.mxu0 0.0
    %1374 = vmatprep.subr.mxu0 0.0
    %1375 = vmatpush2.xpose.msra.mxu0 0.0
    %1376 = vmatprep.subr.mxu0 0.0
    %1377 = vmatpush2.xpose.msra.mxu0 0.0
    %1378 = vmatprep.subr.mxu0 0.0
    %1379 = vmatpush2.xpose.msra.mxu0 0.0
    %1380 = vmatprep.subr.mxu0 0.0
    %1381 = vmatpush2.xpose.msra.mxu0 0.0
    %1382 = vmatprep.subr.mxu0 0.0
    %1383 = vmatpush2.xpose.msra.mxu0 0.0
    %1384 = vmatprep.subr.mxu0 0.0
    %1385 = vmatpush2.xpose.msra.mxu0 0.0
    %1386 = vmatprep.subr.mxu0 0.0
    %1387 = vmatpush2.xpose.msra.mxu0 0.0
    %1388 = vmatprep.subr.mxu0 0.0
    %1389 = vmatpush2.xpose.msra.mxu0 0.0
    %1390 = vmatprep.subr.mxu0 0.0
    %1391 = vmatpush2.xpose.msra.mxu0 0.0
    %1392 = vmatprep.subr.mxu0 0.0
    %1393 = vmatpush2.xpose.msra.mxu0 0.0
    %1394 = vmatprep.subr.mxu0 0.0
    %1395 = vmatpush2.xpose.msra.mxu0 0.0
    %1396 = vmatprep.subr.mxu0 0.0
    %1397 = vmatpush2.xpose.msra.mxu0 0.0
    %1398 = vmatprep.mubr.f32.mxu0 0.0
    %1399 = vmatmul.mubr.f32.gmra.mxu0 %v1004
    %v1400 = vpop.f32.mrf.mxu0
    %v1401 = vadd.f32 0.0, %v1400
    %v1402 = vpop.f32.mrf.mxu0
    %1403 = vmatprep.mubr.f32.mxu0 0.0
    %1404 = vmatmul.mubr.f32.gmra.mxu0 %v1008
    %v1405 = vpop.f32.mrf.mxu0
    %v1406 = vadd.f32 0.0, %v1405
    %v1407 = vpop.f32.mrf.mxu0
    %1408 = vdwg.mxu0
    %1409 = vmatprep.subr.mxu0 0.0
    %1410 = vmatpush1.xpose.msra.mxu0 0.0
    %1411 = vmatprep.subr.mxu0 0.0
    %1412 = vmatpush1.xpose.msra.mxu0 0.0
    %1413 = vmatprep.subr.mxu0 0.0
    %1414 = vmatpush1.xpose.msra.mxu0 0.0
    %1415 = vmatprep.subr.mxu0 0.0
    %1416 = vmatpush1.xpose.msra.mxu0 0.0
    %1417 = vmatprep.subr.mxu0 0.0
    %1418 = vmatpush1.xpose.msra.mxu0 0.0
    %1419 = vmatprep.subr.mxu0 0.0
    %1420 = vmatpush1.xpose.msra.mxu0 0.0
    %1421 = vmatprep.subr.mxu0 0.0
    %1422 = vmatpush1.xpose.msra.mxu0 0.0
    %1423 = vmatprep.subr.mxu0 0.0
    %1424 = vmatpush1.xpose.msra.mxu0 0.0
    %1425 = vmatprep.subr.mxu0 0.0
    %1426 = vmatpush1.xpose.msra.mxu0 0.0
    %1427 = vmatprep.subr.mxu0 0.0
    %1428 = vmatpush1.xpose.msra.mxu0 0.0
    %1429 = vmatprep.subr.mxu0 0.0
    %1430 = vmatpush1.xpose.msra.mxu0 0.0
    %1431 = vmatprep.subr.mxu0 0.0
    %1432 = vmatpush1.xpose.msra.mxu0 0.0
    %1433 = vmatprep.subr.mxu0 0.0
    %1434 = vmatpush1.xpose.msra.mxu0 0.0
    %1435 = vmatprep.subr.mxu0 0.0
    %1436 = vmatpush1.xpose.msra.mxu0 0.0
    %1437 = vmatprep.subr.mxu0 0.0
    %1438 = vmatpush1.xpose.msra.mxu0 %v1096
    %1439 = vmatprep.subr.mxu0 0.0
    %1440 = vmatpush1.xpose.msra.mxu0 %v1092
    %1441 = vmatprep.subr.mxu0 0.0
    %1442 = vmatpush2.xpose.msra.mxu0 0.0
    %1443 = vmatprep.subr.mxu0 0.0
    %1444 = vmatpush2.xpose.msra.mxu0 0.0
    %1445 = vmatprep.subr.mxu0 0.0
    %1446 = vmatpush2.xpose.msra.mxu0 0.0
    %1447 = vmatprep.subr.mxu0 0.0
    %1448 = vmatpush2.xpose.msra.mxu0 0.0
    %1449 = vmatprep.subr.mxu0 0.0
    %1450 = vmatpush2.xpose.msra.mxu0 0.0
    %1451 = vmatprep.subr.mxu0 0.0
    %1452 = vmatpush2.xpose.msra.mxu0 0.0
    %1453 = vmatprep.subr.mxu0 0.0
    %1454 = vmatpush2.xpose.msra.mxu0 0.0
    %1455 = vmatprep.subr.mxu0 0.0
    %1456 = vmatpush2.xpose.msra.mxu0 0.0
    %1457 = vmatprep.subr.mxu0 0.0
    %1458 = vmatpush2.xpose.msra.mxu0 0.0
    %1459 = vmatprep.subr.mxu0 0.0
    %1460 = vmatpush2.xpose.msra.mxu0 0.0
    %1461 = vmatprep.subr.mxu0 0.0
    %1462 = vmatpush2.xpose.msra.mxu0 0.0
    %1463 = vmatprep.subr.mxu0 0.0
    %1464 = vmatpush2.xpose.msra.mxu0 0.0
    %1465 = vmatprep.subr.mxu0 0.0
    %1466 = vmatpush2.xpose.msra.mxu0 0.0
    %1467 = vmatprep.subr.mxu0 0.0
    %1468 = vmatpush2.xpose.msra.mxu0 0.0
    %1469 = vmatprep.subr.mxu0 0.0
    %1470 = vmatpush2.xpose.msra.mxu0 0.0
    %1471 = vmatprep.subr.mxu0 0.0
    %1472 = vmatpush2.xpose.msra.mxu0 0.0
    %1473 = vmatprep.mubr.f32.mxu0 0.0
    %1474 = vmatmul.mubr.f32.gmra.mxu0 %v1006
    %v1475 = vpop.f32.mrf.mxu0
    %v1476 = vadd.f32 0.0, %v1475
    %v1477 = vpop.f32.mrf.mxu0
    %1478 = vmatprep.mubr.f32.mxu0 0.0
    %1479 = vmatmul.mubr.f32.gmra.mxu0 %v1010
    %v1480 = vpop.f32.mrf.mxu0
    %v1481 = vadd.f32 0.0, %v1480
    %v1482 = vpop.f32.mrf.mxu0
    %1483 = vdwg.mxu0
    %v1484 = vmul.f32 %v1251, 0.35355338
    %v1485 = vmul.f32 %v1256, 0.35355338
    %v1486 = vmul.f32 %v1326, 0.35355338
    %v1487 = vmul.f32 %v1331, 0.35355338
    %v1488 = vmul.f32 %v1401, 0.35355338
    %v1489 = vmul.f32 %v1406, 0.35355338
    %v1490 = vmul.f32 %v1476, 0.35355338
    %v1491 = vmul.f32 %v1481, 0.35355338
    %v1492 = vadd.f32 %v1484, %v237
    %v1493 = vadd.f32 %v1485, %v238
    %v1494 = vadd.f32 %v1486, %v237
    %v1495 = vadd.f32 %v1487, %v238
    %v1496 = vadd.f32 %v1488, %v237
    %v1497 = vadd.f32 %v1489, %v238
    %v1498 = vadd.f32 %v1490, %v237
    %v1499 = vadd.f32 %v1491, %v238
    %vm1500 = vcmask 130048
    %v1501 = vsel %vm1500, %v1492, -inf
    %1502 = vmax.xlane.f32.xlu0 %v1501
    %v1503 = vpop.xlane.xlu0 %1502
    %v1504 = vsel %vm1500, %v1493, -inf
    %1505 = vmax.xlane.f32.xlu0 %v1504
    %v1506 = vpop.xlane.xlu0 %1505
    %v1507 = vsel %vm1500, %v1494, -inf
    %1508 = vmax.xlane.f32.xlu0 %v1507
    %v1509 = vpop.xlane.xlu0 %1508
    %v1510 = vsel %vm1500, %v1495, -inf
    %1511 = vmax.xlane.f32.xlu0 %v1510
    %v1512 = vpop.xlane.xlu0 %1511
    %v1513 = vsel %vm1500, %v1496, -inf
    %1514 = vmax.xlane.f32.xlu0 %v1513
    %v1515 = vpop.xlane.xlu0 %1514
    %v1516 = vsel %vm1500, %v1497, -inf
    %1517 = vmax.xlane.f32.xlu0 %v1516
    %v1518 = vpop.xlane.xlu0 %1517
    %v1519 = vsel %vm1500, %v1498, -inf
    %1520 = vmax.xlane.f32.xlu0 %v1519
    %v1521 = vpop.xlane.xlu0 %1520
    %v1522 = vsel %vm1500, %v1499, -inf
    %1523 = vmax.xlane.f32.xlu0 %v1522
    %v1524 = vpop.xlane.xlu0 %1523
    %v1525 = vsub.f32 %v1492, %v1503
    %v1526 = vsub.f32 %v1493, %v1506
    %v1527 = vsub.f32 %v1494, %v1509
    %v1528 = vsub.f32 %v1495, %v1512
    %v1529 = vsub.f32 %v1496, %v1515
    %v1530 = vsub.f32 %v1497, %v1518
    %v1531 = vsub.f32 %v1498, %v1521
    %v1532 = vsub.f32 %v1499, %v1524
    %v1533 = vmul.f32 %v1525, 1.442695
    %v1534 = vpow.pop %v1533
    %v1535 = vmul.f32 %v1526, 1.442695
    %v1536 = vpow.pop %v1535
    %v1537 = vmul.f32 %v1527, 1.442695
    %v1538 = vpow.pop %v1537
    %v1539 = vmul.f32 %v1528, 1.442695
    %v1540 = vpow.pop %v1539
    %v1541 = vmul.f32 %v1529, 1.442695
    %v1542 = vpow.pop %v1541
    %v1543 = vmul.f32 %v1530, 1.442695
    %v1544 = vpow.pop %v1543
    %v1545 = vmul.f32 %v1531, 1.442695
    %v1546 = vpow.pop %v1545
    %v1547 = vmul.f32 %v1532, 1.442695
    %v1548 = vpow.pop %v1547
    %v1549 = vsel %vm1500, %v1534, 0.0
    %1550 = vadd.xlane.f32.xlu0 %v1549
    %v1551 = vpop.xlane.xlu0 %1550
    %v1552 = vsel %vm1500, %v1536, 0.0
    %1553 = vadd.xlane.f32.xlu0 %v1552
    %v1554 = vpop.xlane.xlu0 %1553
    %v1555 = vsel %vm1500, %v1538, 0.0
    %1556 = vadd.xlane.f32.xlu0 %v1555
    %v1557 = vpop.xlane.xlu0 %1556
    %v1558 = vsel %vm1500, %v1540, 0.0
    %1559 = vadd.xlane.f32.xlu0 %v1558
    %v1560 = vpop.xlane.xlu0 %1559
    %v1561 = vsel %vm1500, %v1542, 0.0
    %1562 = vadd.xlane.f32.xlu0 %v1561
    %v1563 = vpop.xlane.xlu0 %1562
    %v1564 = vsel %vm1500, %v1544, 0.0
    %1565 = vadd.xlane.f32.xlu0 %v1564
    %v1566 = vpop.xlane.xlu0 %1565
    %v1567 = vsel %vm1500, %v1546, 0.0
    %1568 = vadd.xlane.f32.xlu0 %v1567
    %v1569 = vpop.xlane.xlu0 %1568
    %v1570 = vsel %vm1500, %v1548, 0.0
    %1571 = vadd.xlane.f32.xlu0 %v1570
    %v1572 = vpop.xlane.xlu0 %1571
    %v1573 = vrcp.pop %v1551
    %v1574 = vrcp.pop %v1554
    %v1575 = vrcp.pop %v1557
    %v1576 = vrcp.pop %v1560
    %v1577 = vrcp.pop %v1563
    %v1578 = vrcp.pop %v1566
    %v1579 = vrcp.pop %v1569
    %v1580 = vrcp.pop %v1572
    %v1581 = vmul.f32 %v1534, %v1573
    %v1582 = vmul.f32 %v1536, %v1574
    %v1583 = vmul.f32 %v1538, %v1575
    %v1584 = vmul.f32 %v1540, %v1576
    %v1585 = vmul.f32 %v1542, %v1577
    %v1586 = vmul.f32 %v1544, %v1578
    %v1587 = vmul.f32 %v1546, %v1579
    %v1588 = vmul.f32 %v1548, %v1580
    %v1590 = vsel %vm1500, %v1581, 0
    %v1593 = vsel %vm1500, %v1582, 0
    %1595 = vmatprep.subr.mxu0 0.0
    %1596 = vmatpush1.msra.mxu0 0.0
    %1597 = vmatprep.subr.mxu0 0.0
    %1598 = vmatpush1.msra.mxu0 0.0
    %1599 = vmatprep.subr.mxu0 0.0
    %1600 = vmatpush1.msra.mxu0 0.0
    %1601 = vmatprep.subr.mxu0 0.0
    %1602 = vmatpush1.msra.mxu0 0.0
    %1603 = vmatprep.subr.mxu0 0.0
    %1604 = vmatpush1.msra.mxu0 0.0
    %1605 = vmatprep.subr.mxu0 0.0
    %1606 = vmatpush1.msra.mxu0 0.0
    %1607 = vmatprep.subr.mxu0 0.0
    %1608 = vmatpush1.msra.mxu0 0.0
    %1609 = vmatprep.subr.mxu0 0.0
    %1610 = vmatpush1.msra.mxu0 0.0
    %1611 = vmatprep.subr.mxu0 0.0
    %1612 = vmatpush1.msra.mxu0 0.0
    %1613 = vmatprep.subr.mxu0 0.0
    %1614 = vmatpush1.msra.mxu0 0.0
    %1615 = vmatprep.subr.mxu0 0.0
    %1616 = vmatpush1.msra.mxu0 0.0
    %1617 = vmatprep.subr.mxu0 0.0
    %1618 = vmatpush1.msra.mxu0 0.0
    %1619 = vmatprep.subr.mxu0 0.0
    %1620 = vmatpush1.msra.mxu0 0.0
    %1621 = vmatprep.subr.mxu0 0.0
    %1622 = vmatpush1.msra.mxu0 0.0
    %1623 = vmatprep.subr.mxu0 0.0
    %1624 = vmatpush1.msra.mxu0 %v1137
    %1625 = vmatprep.subr.mxu0 0.0
    %1626 = vmatpush1.msra.mxu0 %v1133
    %1627 = vmatprep.subr.mxu0 0.0
    %1628 = vmatpush2.msra.mxu0 0.0
    %1629 = vmatprep.subr.mxu0 0.0
    %1630 = vmatpush2.msra.mxu0 0.0
    %1631 = vmatprep.subr.mxu0 0.0
    %1632 = vmatpush2.msra.mxu0 0.0
    %1633 = vmatprep.subr.mxu0 0.0
    %1634 = vmatpush2.msra.mxu0 0.0
    %1635 = vmatprep.subr.mxu0 0.0
    %1636 = vmatpush2.msra.mxu0 0.0
    %1637 = vmatprep.subr.mxu0 0.0
    %1638 = vmatpush2.msra.mxu0 0.0
    %1639 = vmatprep.subr.mxu0 0.0
    %1640 = vmatpush2.msra.mxu0 0.0
    %1641 = vmatprep.subr.mxu0 0.0
    %1642 = vmatpush2.msra.mxu0 0.0
    %1643 = vmatprep.subr.mxu0 0.0
    %1644 = vmatpush2.msra.mxu0 0.0
    %1645 = vmatprep.subr.mxu0 0.0
    %1646 = vmatpush2.msra.mxu0 0.0
    %1647 = vmatprep.subr.mxu0 0.0
    %1648 = vmatpush2.msra.mxu0 0.0
    %1649 = vmatprep.subr.mxu0 0.0
    %1650 = vmatpush2.msra.mxu0 0.0
    %1651 = vmatprep.subr.mxu0 0.0
    %1652 = vmatpush2.msra.mxu0 0.0
    %1653 = vmatprep.subr.mxu0 0.0
    %1654 = vmatpush2.msra.mxu0 0.0
    %1655 = vmatprep.subr.mxu0 0.0
    %1656 = vmatpush2.msra.mxu0 0.0
    %1657 = vmatprep.subr.mxu0 0.0
    %1658 = vmatpush2.msra.mxu0 0.0
    %1659 = vmatprep.mubr.f32.mxu0 0.0
    %1660 = vmatmul.mubr.f32.gmra.mxu0 %v1590
    %v1661 = vpop.f32.mrf.mxu0
    %v1662 = vadd.f32 0.0, %v1661
    %v1663 = vpop.f32.mrf.mxu0
    %1664 = vmatprep.mubr.f32.mxu0 0.0
    %1665 = vmatmul.mubr.f32.gmra.mxu0 %v1593
    %v1666 = vpop.f32.mrf.mxu0
    %v1667 = vadd.f32 0.0, %v1666
    %v1668 = vpop.f32.mrf.mxu0
    %1669 = vdwg.mxu0
    %v1671 = vsel %vm1500, %v1583, 0
    %v1674 = vsel %vm1500, %v1584, 0
    %1676 = vmatprep.subr.mxu0 0.0
    %1677 = vmatpush1.msra.mxu0 0.0
    %1678 = vmatprep.subr.mxu0 0.0
    %1679 = vmatpush1.msra.mxu0 0.0
    %1680 = vmatprep.subr.mxu0 0.0
    %1681 = vmatpush1.msra.mxu0 0.0
    %1682 = vmatprep.subr.mxu0 0.0
    %1683 = vmatpush1.msra.mxu0 0.0
    %1684 = vmatprep.subr.mxu0 0.0
    %1685 = vmatpush1.msra.mxu0 0.0
    %1686 = vmatprep.subr.mxu0 0.0
    %1687 = vmatpush1.msra.mxu0 0.0
    %1688 = vmatprep.subr.mxu0 0.0
    %1689 = vmatpush1.msra.mxu0 0.0
    %1690 = vmatprep.subr.mxu0 0.0
    %1691 = vmatpush1.msra.mxu0 0.0
    %1692 = vmatprep.subr.mxu0 0.0
    %1693 = vmatpush1.msra.mxu0 0.0
    %1694 = vmatprep.subr.mxu0 0.0
    %1695 = vmatpush1.msra.mxu0 0.0
    %1696 = vmatprep.subr.mxu0 0.0
    %1697 = vmatpush1.msra.mxu0 0.0
    %1698 = vmatprep.subr.mxu0 0.0
    %1699 = vmatpush1.msra.mxu0 0.0
    %1700 = vmatprep.subr.mxu0 0.0
    %1701 = vmatpush1.msra.mxu0 0.0
    %1702 = vmatprep.subr.mxu0 0.0
    %1703 = vmatpush1.msra.mxu0 0.0
    %1704 = vmatprep.subr.mxu0 0.0
    %1705 = vmatpush1.msra.mxu0 %v1139
    %1706 = vmatprep.subr.mxu0 0.0
    %1707 = vmatpush1.msra.mxu0 %v1135
    %1708 = vmatprep.subr.mxu0 0.0
    %1709 = vmatpush2.msra.mxu0 0.0
    %1710 = vmatprep.subr.mxu0 0.0
    %1711 = vmatpush2.msra.mxu0 0.0
    %1712 = vmatprep.subr.mxu0 0.0
    %1713 = vmatpush2.msra.mxu0 0.0
    %1714 = vmatprep.subr.mxu0 0.0
    %1715 = vmatpush2.msra.mxu0 0.0
    %1716 = vmatprep.subr.mxu0 0.0
    %1717 = vmatpush2.msra.mxu0 0.0
    %1718 = vmatprep.subr.mxu0 0.0
    %1719 = vmatpush2.msra.mxu0 0.0
    %1720 = vmatprep.subr.mxu0 0.0
    %1721 = vmatpush2.msra.mxu0 0.0
    %1722 = vmatprep.subr.mxu0 0.0
    %1723 = vmatpush2.msra.mxu0 0.0
    %1724 = vmatprep.subr.mxu0 0.0
    %1725 = vmatpush2.msra.mxu0 0.0
    %1726 = vmatprep.subr.mxu0 0.0
    %1727 = vmatpush2.msra.mxu0 0.0
    %1728 = vmatprep.subr.mxu0 0.0
    %1729 = vmatpush2.msra.mxu0 0.0
    %1730 = vmatprep.subr.mxu0 0.0
    %1731 = vmatpush2.msra.mxu0 0.0
    %1732 = vmatprep.subr.mxu0 0.0
    %1733 = vmatpush2.msra.mxu0 0.0
    %1734 = vmatprep.subr.mxu0 0.0
    %1735 = vmatpush2.msra.mxu0 0.0
    %1736 = vmatprep.subr.mxu0 0.0
    %1737 = vmatpush2.msra.mxu0 0.0
    %1738 = vmatprep.subr.mxu0 0.0
    %1739 = vmatpush2.msra.mxu0 0.0
    %1740 = vmatprep.mubr.f32.mxu0 0.0
    %1741 = vmatmul.mubr.f32.gmra.mxu0 %v1671
    %v1742 = vpop.f32.mrf.mxu0
    %v1743 = vadd.f32 0.0, %v1742
    %v1744 = vpop.f32.mrf.mxu0
    %1745 = vmatprep.mubr.f32.mxu0 0.0
    %1746 = vmatmul.mubr.f32.gmra.mxu0 %v1674
    %v1747 = vpop.f32.mrf.mxu0
    %v1748 = vadd.f32 0.0, %v1747
    %v1749 = vpop.f32.mrf.mxu0
    %1750 = vdwg.mxu0
    %v1752 = vsel %vm1500, %v1585, 0
    %v1755 = vsel %vm1500, %v1586, 0
    %1757 = vmatprep.subr.mxu0 0.0
    %1758 = vmatpush1.msra.mxu0 0.0
    %1759 = vmatprep.subr.mxu0 0.0
    %1760 = vmatpush1.msra.mxu0 0.0
    %1761 = vmatprep.subr.mxu0 0.0
    %1762 = vmatpush1.msra.mxu0 0.0
    %1763 = vmatprep.subr.mxu0 0.0
    %1764 = vmatpush1.msra.mxu0 0.0
    %1765 = vmatprep.subr.mxu0 0.0
    %1766 = vmatpush1.msra.mxu0 0.0
    %1767 = vmatprep.subr.mxu0 0.0
    %1768 = vmatpush1.msra.mxu0 0.0
    %1769 = vmatprep.subr.mxu0 0.0
    %1770 = vmatpush1.msra.mxu0 0.0
    %1771 = vmatprep.subr.mxu0 0.0
    %1772 = vmatpush1.msra.mxu0 0.0
    %1773 = vmatprep.subr.mxu0 0.0
    %1774 = vmatpush1.msra.mxu0 0.0
    %1775 = vmatprep.subr.mxu0 0.0
    %1776 = vmatpush1.msra.mxu0 0.0
    %1777 = vmatprep.subr.mxu0 0.0
    %1778 = vmatpush1.msra.mxu0 0.0
    %1779 = vmatprep.subr.mxu0 0.0
    %1780 = vmatpush1.msra.mxu0 0.0
    %1781 = vmatprep.subr.mxu0 0.0
    %1782 = vmatpush1.msra.mxu0 0.0
    %1783 = vmatprep.subr.mxu0 0.0
    %1784 = vmatpush1.msra.mxu0 0.0
    %1785 = vmatprep.subr.mxu0 0.0
    %1786 = vmatpush1.msra.mxu0 %v1180
    %1787 = vmatprep.subr.mxu0 0.0
    %1788 = vmatpush1.msra.mxu0 %v1176
    %1789 = vmatprep.subr.mxu0 0.0
    %1790 = vmatpush2.msra.mxu0 0.0
    %1791 = vmatprep.subr.mxu0 0.0
    %1792 = vmatpush2.msra.mxu0 0.0
    %1793 = vmatprep.subr.mxu0 0.0
    %1794 = vmatpush2.msra.mxu0 0.0
    %1795 = vmatprep.subr.mxu0 0.0
    %1796 = vmatpush2.msra.mxu0 0.0
    %1797 = vmatprep.subr.mxu0 0.0
    %1798 = vmatpush2.msra.mxu0 0.0
    %1799 = vmatprep.subr.mxu0 0.0
    %1800 = vmatpush2.msra.mxu0 0.0
    %1801 = vmatprep.subr.mxu0 0.0
    %1802 = vmatpush2.msra.mxu0 0.0
    %1803 = vmatprep.subr.mxu0 0.0
    %1804 = vmatpush2.msra.mxu0 0.0
    %1805 = vmatprep.subr.mxu0 0.0
    %1806 = vmatpush2.msra.mxu0 0.0
    %1807 = vmatprep.subr.mxu0 0.0
    %1808 = vmatpush2.msra.mxu0 0.0
    %1809 = vmatprep.subr.mxu0 0.0
    %1810 = vmatpush2.msra.mxu0 0.0
    %1811 = vmatprep.subr.mxu0 0.0
    %1812 = vmatpush2.msra.mxu0 0.0
    %1813 = vmatprep.subr.mxu0 0.0
    %1814 = vmatpush2.msra.mxu0 0.0
    %1815 = vmatprep.subr.mxu0 0.0
    %1816 = vmatpush2.msra.mxu0 0.0
    %1817 = vmatprep.subr.mxu0 0.0
    %1818 = vmatpush2.msra.mxu0 0.0
    %1819 = vmatprep.subr.mxu0 0.0
    %1820 = vmatpush2.msra.mxu0 0.0
    %1821 = vmatprep.mubr.f32.mxu0 0.0
    %1822 = vmatmul.mubr.f32.gmra.mxu0 %v1752
    %v1823 = vpop.f32.mrf.mxu0
    %v1824 = vadd.f32 0.0, %v1823
    %v1825 = vpop.f32.mrf.mxu0
    %1826 = vmatprep.mubr.f32.mxu0 0.0
    %1827 = vmatmul.mubr.f32.gmra.mxu0 %v1755
    %v1828 = vpop.f32.mrf.mxu0
    %v1829 = vadd.f32 0.0, %v1828
    %v1830 = vpop.f32.mrf.mxu0
    %1831 = vdwg.mxu0
    %v1833 = vsel %vm1500, %v1587, 0
    %v1836 = vsel %vm1500, %v1588, 0
    %1838 = vmatprep.subr.mxu0 0.0
    %1839 = vmatpush1.msra.mxu0 0.0
    %1840 = vmatprep.subr.mxu0 0.0
    %1841 = vmatpush1.msra.mxu0 0.0
    %1842 = vmatprep.subr.mxu0 0.0
    %1843 = vmatpush1.msra.mxu0 0.0
    %1844 = vmatprep.subr.mxu0 0.0
    %1845 = vmatpush1.msra.mxu0 0.0
    %1846 = vmatprep.subr.mxu0 0.0
    %1847 = vmatpush1.msra.mxu0 0.0
    %1848 = vmatprep.subr.mxu0 0.0
    %1849 = vmatpush1.msra.mxu0 0.0
    %1850 = vmatprep.subr.mxu0 0.0
    %1851 = vmatpush1.msra.mxu0 0.0
    %1852 = vmatprep.subr.mxu0 0.0
    %1853 = vmatpush1.msra.mxu0 0.0
    %1854 = vmatprep.subr.mxu0 0.0
    %1855 = vmatpush1.msra.mxu0 0.0
    %1856 = vmatprep.subr.mxu0 0.0
    %1857 = vmatpush1.msra.mxu0 0.0
    %1858 = vmatprep.subr.mxu0 0.0
    %1859 = vmatpush1.msra.mxu0 0.0
    %1860 = vmatprep.subr.mxu0 0.0
    %1861 = vmatpush1.msra.mxu0 0.0
    %1862 = vmatprep.subr.mxu0 0.0
    %1863 = vmatpush1.msra.mxu0 0.0
    %1864 = vmatprep.subr.mxu0 0.0
    %1865 = vmatpush1.msra.mxu0 0.0
    %1866 = vmatprep.subr.mxu0 0.0
    %1867 = vmatpush1.msra.mxu0 %v1182
    %1868 = vmatprep.subr.mxu0 0.0
    %1869 = vmatpush1.msra.mxu0 %v1178
    %1870 = vmatprep.subr.mxu0 0.0
    %1871 = vmatpush2.msra.mxu0 0.0
    %1872 = vmatprep.subr.mxu0 0.0
    %1873 = vmatpush2.msra.mxu0 0.0
    %1874 = vmatprep.subr.mxu0 0.0
    %1875 = vmatpush2.msra.mxu0 0.0
    %1876 = vmatprep.subr.mxu0 0.0
    %1877 = vmatpush2.msra.mxu0 0.0
    %1878 = vmatprep.subr.mxu0 0.0
    %1879 = vmatpush2.msra.mxu0 0.0
    %1880 = vmatprep.subr.mxu0 0.0
    %1881 = vmatpush2.msra.mxu0 0.0
    %1882 = vmatprep.subr.mxu0 0.0
    %1883 = vmatpush2.msra.mxu0 0.0
    %1884 = vmatprep.subr.mxu0 0.0
    %1885 = vmatpush2.msra.mxu0 0.0
    %1886 = vmatprep.subr.mxu0 0.0
    %1887 = vmatpush2.msra.mxu0 0.0
    %1888 = vmatprep.subr.mxu0 0.0
    %1889 = vmatpush2.msra.mxu0 0.0
    %1890 = vmatprep.subr.mxu0 0.0
    %1891 = vmatpush2.msra.mxu0 0.0
    %1892 = vmatprep.subr.mxu0 0.0
    %1893 = vmatpush2.msra.mxu0 0.0
    %1894 = vmatprep.subr.mxu0 0.0
    %1895 = vmatpush2.msra.mxu0 0.0
    %1896 = vmatprep.subr.mxu0 0.0
    %1897 = vmatpush2.msra.mxu0 0.0
    %1898 = vmatprep.subr.mxu0 0.0
    %1899 = vmatpush2.msra.mxu0 0.0
    %1900 = vmatprep.subr.mxu0 0.0
    %1901 = vmatpush2.msra.mxu0 0.0
    %1902 = vmatprep.mubr.f32.mxu0 0.0
    %1903 = vmatmul.mubr.f32.gmra.mxu0 %v1833
    %v1904 = vpop.f32.mrf.mxu0
    %v1905 = vadd.f32 0.0, %v1904
    %v1906 = vpop.f32.mrf.mxu0
    %1907 = vmatprep.mubr.f32.mxu0 0.0
    %1908 = vmatmul.mubr.f32.gmra.mxu0 %v1836
    %v1909 = vpop.f32.mrf.mxu0
    %v1910 = vadd.f32 0.0, %v1909
    %v1911 = vpop.f32.mrf.mxu0
    %1912 = vdwg.mxu0
    %v1913 = vpack.c.bf16 %v1667, %v1662
    %v1914 = vpack.c.bf16 %v1748, %v1743
    %v1915 = vpack.c.bf16 %v1829, %v1824
    %v1916 = vpack.c.bf16 %v1910, %v1905
    %v1917 = vld [vmem:[%s6] sm:$0xf]
    %v1918 = vld [vmem:[%s6 + $0x4] sm:$0xf]
    %v1919 = vld [vmem:[%s6 + $0x8] sm:$0xf]
    %v1920 = vld [vmem:[%s6 + $0xc] sm:$0xf]
    %v1921 = vld [vmem:[%s6 + $0x10] sm:$0xf]
    %v1922 = vld [vmem:[%s6 + $0x14] sm:$0xf]
    %v1923 = vld [vmem:[%s6 + $0x18] sm:$0xf]
    %v1924 = vld [vmem:[%s6 + $0x1c] sm:$0xf]
    %v1925 = vld [vmem:[%s6 + $0x20] sm:$0xf]
    %v1926 = vld [vmem:[%s6 + $0x24] sm:$0xf]
    %v1927 = vld [vmem:[%s6 + $0x28] sm:$0xf]
    %v1928 = vld [vmem:[%s6 + $0x2c] sm:$0xf]
    %v1929 = vld [vmem:[%s6 + $0x30] sm:$0xf]
    %v1930 = vld [vmem:[%s6 + $0x34] sm:$0xf]
    %v1931 = vld [vmem:[%s6 + $0x38] sm:$0xf]
    %v1932 = vld [vmem:[%s6 + $0x3c] sm:$0xf]
    %v1933 = vld [vmem:[%s6 + $0x40] sm:$0xf]
    %v1934 = vld [vmem:[%s6 + $0x44] sm:$0xf]
    %v1935 = vld [vmem:[%s6 + $0x48] sm:$0xf]
    %v1936 = vld [vmem:[%s6 + $0x4c] sm:$0xf]
    %v1937 = vld [vmem:[%s6 + $0x50] sm:$0xf]
    %v1938 = vld [vmem:[%s6 + $0x54] sm:$0xf]
    %v1939 = vld [vmem:[%s6 + $0x58] sm:$0xf]
    %v1940 = vld [vmem:[%s6 + $0x5c] sm:$0xf]
    %v1941 = vld [vmem:[%s6 + $0x60] sm:$0xf]
    %v1942 = vld [vmem:[%s6 + $0x64] sm:$0xf]
    %v1943 = vld [vmem:[%s6 + $0x68] sm:$0xf]
    %v1944 = vld [vmem:[%s6 + $0x6c] sm:$0xf]
    %v1945 = vld [vmem:[%s6 + $0x70] sm:$0xf]
    %v1946 = vld [vmem:[%s6 + $0x74] sm:$0xf]
    %v1947 = vld [vmem:[%s6 + $0x78] sm:$0xf]
    %v1948 = vld [vmem:[%s6 + $0x7c] sm:$0xf]
    %v1949 = vld [vmem:[%s6 + $0x80] sm:$0xf]
    %v1950 = vld [vmem:[%s6 + $0x84] sm:$0xf]
    %v1951 = vld [vmem:[%s6 + $0x88] sm:$0xf]
    %v1952 = vld [vmem:[%s6 + $0x8c] sm:$0xf]
    %v1953 = vld [vmem:[%s6 + $0x90] sm:$0xf]
    %v1954 = vld [vmem:[%s6 + $0x94] sm:$0xf]
    %v1955 = vld [vmem:[%s6 + $0x98] sm:$0xf]
    %v1956 = vld [vmem:[%s6 + $0x9c] sm:$0xf]
    %v1957 = vld [vmem:[%s6 + $0xa0] sm:$0xf]
    %v1958 = vld [vmem:[%s6 + $0xa4] sm:$0xf]
    %v1959 = vld [vmem:[%s6 + $0xa8] sm:$0xf]
    %v1960 = vld [vmem:[%s6 + $0xac] sm:$0xf]
    %v1961 = vld [vmem:[%s6 + $0xb0] sm:$0xf]
    %v1962 = vld [vmem:[%s6 + $0xb4] sm:$0xf]
    %v1963 = vld [vmem:[%s6 + $0xb8] sm:$0xf]
    %v1964 = vld [vmem:[%s6 + $0xbc] sm:$0xf]
    %v1965 = vld [vmem:[%s6 + $0xc0] sm:$0xf]
    %v1966 = vld [vmem:[%s6 + $0xc4] sm:$0xf]
    %v1967 = vld [vmem:[%s6 + $0xc8] sm:$0xf]
    %v1968 = vld [vmem:[%s6 + $0xcc] sm:$0xf]
    %v1969 = vld [vmem:[%s6 + $0xd0] sm:$0xf]
    %v1970 = vld [vmem:[%s6 + $0xd4] sm:$0xf]
    %v1971 = vld [vmem:[%s6 + $0xd8] sm:$0xf]
    %v1972 = vld [vmem:[%s6 + $0xdc] sm:$0xf]
    %v1973 = vld [vmem:[%s6 + $0xe0] sm:$0xf]
    %v1974 = vld [vmem:[%s6 + $0xe4] sm:$0xf]
    %v1975 = vld [vmem:[%s6 + $0xe8] sm:$0xf]
    %v1976 = vld [vmem:[%s6 + $0xec] sm:$0xf]
    %v1977 = vld [vmem:[%s6 + $0xf0] sm:$0xf]
    %v1978 = vld [vmem:[%s6 + $0xf4] sm:$0xf]
    %v1979 = vld [vmem:[%s6 + $0xf8] sm:$0xf]
    %v1980 = vld [vmem:[%s6 + $0xfc] sm:$0xf]
    %v1981 = vld [vmem:[#allocation7] sm:$0x1]
    %v1983 = vlaneseq
    %v1984 = vshrl.u32 %v1983, 7
    %v1985 = vsub.s32 0, %v1984
    %v1986 = vrot.slane %v1981, %v1985
    %v2052 = vunpack.c.l.b16 %v1917
    %v2053 = vunpack.c.l.b16 %v1918
    %v2054 = vunpack.c.l.b16 %v1919
    %v2055 = vunpack.c.l.b16 %v1920
    %v2056 = vunpack.c.l.b16 %v1921
    %v2057 = vunpack.c.l.b16 %v1922
    %v2058 = vunpack.c.l.b16 %v1923
    %v2059 = vunpack.c.l.b16 %v1924
    %v2060 = vunpack.c.l.b16 %v1925
    %v2061 = vunpack.c.l.b16 %v1926
    %v2062 = vunpack.c.l.b16 %v1927
    %v2063 = vunpack.c.l.b16 %v1928
    %v2064 = vunpack.c.l.b16 %v1929
    %v2065 = vunpack.c.l.b16 %v1930
    %v2066 = vunpack.c.l.b16 %v1931
    %v2067 = vunpack.c.l.b16 %v1932
    %v2068 = vunpack.c.l.b16 %v1933
    %v2069 = vunpack.c.l.b16 %v1934
    %v2070 = vunpack.c.l.b16 %v1935
    %v2071 = vunpack.c.l.b16 %v1936
    %v2072 = vunpack.c.l.b16 %v1937
    %v2073 = vunpack.c.l.b16 %v1938
    %v2074 = vunpack.c.l.b16 %v1939
    %v2075 = vunpack.c.l.b16 %v1940
    %v2076 = vunpack.c.l.b16 %v1941
    %v2077 = vunpack.c.l.b16 %v1942
    %v2078 = vunpack.c.l.b16 %v1943
    %v2079 = vunpack.c.l.b16 %v1944
    %v2080 = vunpack.c.l.b16 %v1945
    %v2081 = vunpack.c.l.b16 %v1946
    %v2082 = vunpack.c.l.b16 %v1947
    %v2083 = vunpack.c.l.b16 %v1948
    %v2084 = vunpack.c.l.b16 %v1949
    %v2085 = vunpack.c.l.b16 %v1950
    %v2086 = vunpack.c.l.b16 %v1951
    %v2087 = vunpack.c.l.b16 %v1952
    %v2088 = vunpack.c.l.b16 %v1953
    %v2089 = vunpack.c.l.b16 %v1954
    %v2090 = vunpack.c.l.b16 %v1955
    %v2091 = vunpack.c.l.b16 %v1956
    %v2092 = vunpack.c.l.b16 %v1957
    %v2093 = vunpack.c.l.b16 %v1958
    %v2094 = vunpack.c.l.b16 %v1959
    %v2095 = vunpack.c.l.b16 %v1960
    %v2096 = vunpack.c.l.b16 %v1961
    %v2097 = vunpack.c.l.b16 %v1962
    %v2098 = vunpack.c.l.b16 %v1963
    %v2099 = vunpack.c.l.b16 %v1964
    %v2100 = vunpack.c.l.b16 %v1965
    %v2101 = vunpack.c.l.b16 %v1966
    %v2102 = vunpack.c.l.b16 %v1967
    %v2103 = vunpack.c.l.b16 %v1968
    %v2104 = vunpack.c.l.b16 %v1969
    %v2105 = vunpack.c.l.b16 %v1970
    %v2106 = vunpack.c.l.b16 %v1971
    %v2107 = vunpack.c.l.b16 %v1972
    %v2108 = vunpack.c.l.b16 %v1973
    %v2109 = vunpack.c.l.b16 %v1974
    %v2110 = vunpack.c.l.b16 %v1975
    %v2111 = vunpack.c.l.b16 %v1976
    %v2112 = vunpack.c.l.b16 %v1977
    %v2113 = vunpack.c.l.b16 %v1978
    %v2114 = vunpack.c.l.b16 %v1979
    %v2115 = vunpack.c.l.b16 %v1980
    %v2116 = vpack.c.b16 %v2053, %v2052
    %v2117 = vpack.c.b16 %v2055, %v2054
    %v2118 = vpack.c.b16 %v2057, %v2056
    %v2119 = vpack.c.b16 %v2059, %v2058
    %v2120 = vpack.c.b16 %v2061, %v2060
    %v2121 = vpack.c.b16 %v2063, %v2062
    %v2122 = vpack.c.b16 %v2065, %v2064
    %v2123 = vpack.c.b16 %v2067, %v2066
    %v2124 = vpack.c.b16 %v2069, %v2068
    %v2125 = vpack.c.b16 %v2071, %v2070
    %v2126 = vpack.c.b16 %v2073, %v2072
    %v2127 = vpack.c.b16 %v2075, %v2074
    %v2128 = vpack.c.b16 %v2077, %v2076
    %v2129 = vpack.c.b16 %v2079, %v2078
    %v2130 = vpack.c.b16 %v2081, %v2080
    %v2131 = vpack.c.b16 %v2083, %v2082
    %v2132 = vpack.c.b16 %v2085, %v2084
    %v2133 = vpack.c.b16 %v2087, %v2086
    %v2134 = vpack.c.b16 %v2089, %v2088
    %v2135 = vpack.c.b16 %v2091, %v2090
    %v2136 = vpack.c.b16 %v2093, %v2092
    %v2137 = vpack.c.b16 %v2095, %v2094
    %v2138 = vpack.c.b16 %v2097, %v2096
    %v2139 = vpack.c.b16 %v2099, %v2098
    %v2140 = vpack.c.b16 %v2101, %v2100
    %v2141 = vpack.c.b16 %v2103, %v2102
    %v2142 = vpack.c.b16 %v2105, %v2104
    %v2143 = vpack.c.b16 %v2107, %v2106
    %v2144 = vpack.c.b16 %v2109, %v2108
    %v2145 = vpack.c.b16 %v2111, %v2110
    %v2146 = vpack.c.b16 %v2113, %v2112
    %v2147 = vpack.c.b16 %v2115, %v2114
    %2180 = vmatprep.subr.bf16.mxu0 0
    %2181 = vmatpush1.bf16.msra.mxu0 %v2123
    %2182 = vmatprep.subr.bf16.mxu0 0
    %2183 = vmatpush1.bf16.msra.mxu0 %v2122
    %2184 = vmatprep.subr.bf16.mxu0 0
    %2185 = vmatpush1.bf16.msra.mxu0 %v2121
    %2186 = vmatprep.subr.bf16.mxu0 0
    %2187 = vmatpush1.bf16.msra.mxu0 %v2120
    %2188 = vmatprep.subr.bf16.mxu0 0
    %2189 = vmatpush1.bf16.msra.mxu0 %v2119
    %2190 = vmatprep.subr.bf16.mxu0 0
    %2191 = vmatpush1.bf16.msra.mxu0 %v2118
    %2192 = vmatprep.subr.bf16.mxu0 0
    %2193 = vmatpush1.bf16.msra.mxu0 %v2117
    %2194 = vmatprep.subr.bf16.mxu0 0
    %2195 = vmatpush1.bf16.msra.mxu0 %v2116
    %2196 = vmatprep.subr.bf16.mxu0 0
    %2197 = vmatpush2.bf16.msra.mxu0 %v2131
    %2198 = vmatprep.subr.bf16.mxu0 0
    %2199 = vmatpush2.bf16.msra.mxu0 %v2130
    %2200 = vmatprep.subr.bf16.mxu0 0
    %2201 = vmatpush2.bf16.msra.mxu0 %v2129
    %2202 = vmatprep.subr.bf16.mxu0 0
    %2203 = vmatpush2.bf16.msra.mxu0 %v2128
    %2204 = vmatprep.subr.bf16.mxu0 0
    %2205 = vmatpush2.bf16.msra.mxu0 %v2127
    %2206 = vmatprep.subr.bf16.mxu0 0
    %2207 = vmatpush2.bf16.msra.mxu0 %v2126
    %2208 = vmatprep.subr.bf16.mxu0 0
    %2209 = vmatpush2.bf16.msra.mxu0 %v2125
    %2210 = vmatprep.subr.bf16.mxu0 0
    %2211 = vmatpush2.bf16.msra.mxu0 %v2124
    %2212 = vmatprep.mubr.bf16.mxu0 %v1914
    %2213 = vmatmul.mubr.bf16.gmra.mxu0 %v1913
    %v2214 = vpop.f32.mrf.mxu0
    %v2215 = vadd.f32 %v1986, %v2214
    %v2216 = vpop.f32.mrf.mxu0
    %v2217 = vpop.f32.mrf.mxu0
    %v2218 = vadd.f32 %v1986, %v2217
    %v2219 = vpop.f32.mrf.mxu0
    %2220 = vdwg.mxu0
    %2221 = vmatprep.subr.bf16.mxu0 0
    %2222 = vmatpush1.bf16.msra.mxu0 %v2139
    %2223 = vmatprep.subr.bf16.mxu0 0
    %2224 = vmatpush1.bf16.msra.mxu0 %v2138
    %2225 = vmatprep.subr.bf16.mxu0 0
    %2226 = vmatpush1.bf16.msra.mxu0 %v2137
    %2227 = vmatprep.subr.bf16.mxu0 0
    %2228 = vmatpush1.bf16.msra.mxu0 %v2136
    %2229 = vmatprep.subr.bf16.mxu0 0
    %2230 = vmatpush1.bf16.msra.mxu0 %v2135
    %2231 = vmatprep.subr.bf16.mxu0 0
    %2232 = vmatpush1.bf16.msra.mxu0 %v2134
    %2233 = vmatprep.subr.bf16.mxu0 0
    %2234 = vmatpush1.bf16.msra.mxu0 %v2133
    %2235 = vmatprep.subr.bf16.mxu0 0
    %2236 = vmatpush1.bf16.msra.mxu0 %v2132
    %2237 = vmatprep.subr.bf16.mxu0 0
    %2238 = vmatpush2.bf16.msra.mxu0 %v2147
    %2239 = vmatprep.subr.bf16.mxu0 0
    %2240 = vmatpush2.bf16.msra.mxu0 %v2146
    %2241 = vmatprep.subr.bf16.mxu0 0
    %2242 = vmatpush2.bf16.msra.mxu0 %v2145
    %2243 = vmatprep.subr.bf16.mxu0 0
    %2244 = vmatpush2.bf16.msra.mxu0 %v2144
    %2245 = vmatprep.subr.bf16.mxu0 0
    %2246 = vmatpush2.bf16.msra.mxu0 %v2143
    %2247 = vmatprep.subr.bf16.mxu0 0
    %2248 = vmatpush2.bf16.msra.mxu0 %v2142
    %2249 = vmatprep.subr.bf16.mxu0 0
    %2250 = vmatpush2.bf16.msra.mxu0 %v2141
    %2251 = vmatprep.subr.bf16.mxu0 0
    %2252 = vmatpush2.bf16.msra.mxu0 %v2140
    %2253 = vmatprep.mubr.bf16.mxu0 %v1916
    %2254 = vmatmul.mubr.bf16.gmra.mxu0 %v1915
    %v2255 = vpop.f32.mrf.mxu0
    %v2256 = vadd.f32 %v2215, %v2255
    %v2257 = vpop.f32.mrf.mxu0
    %v2258 = vpop.f32.mrf.mxu0
    %v2259 = vadd.f32 %v2218, %v2258
    %v2260 = vpop.f32.mrf.mxu0
    %2261 = vdwg.mxu0
    %v2262 = vadd.f32 %v2256, %v283
    %v2263 = vadd.f32 %v2259, %v284
    %v2264 = vld [vmem:[#allocation9] sm:$0x1]
    %v2265 = vld [vmem:[#allocation10] sm:$0x1]
    %v2266 = vmul.f32 %v2262, %v236
    %v2267 = vmul.f32 %v2263, %v236
    %2268 = vadd.xlane.f32.xlu0 %v2266
    %v2269 = vpop.xlane.xlu0 %2268
    %2270 = vadd.xlane.f32.xlu0 %v2267
    %v2271 = vpop.xlane.xlu0 %2270
    %v2272 = vmul.f32 %v2269, 0.03125
    %v2273 = vmul.f32 %v2271, 0.03125
    %v2274 = vsub.f32 %v2262, %v2272
    %v2275 = vsub.f32 %v2263, %v2273
    %v2276 = vmul.f32 %v2274, %v236
    %v2277 = vmul.f32 %v2275, %v236
    %v2278 = vmul.f32 %v2276, %v2276
    %v2279 = vmul.f32 %v2277, %v2277
    %2280 = vadd.xlane.f32.xlu0 %v2278
    %v2281 = vpop.xlane.xlu0 %2280
    %2282 = vadd.xlane.f32.xlu0 %v2279
    %v2283 = vpop.xlane.xlu0 %2282
    %v2284 = vmul.f32 %v2281, 0.03125
    %v2285 = vmul.f32 %v2283, 0.03125
    %v2286 = vadd.f32 %v2284, 1e-12
    %v2287 = vadd.f32 %v2285, 1e-12
    %v2288 = vrsqrt.pop %v2286
    %v2289 = vrsqrt.pop %v2287
    %v2290 = vmul.f32 %v2276, %v2288
    %v2291 = vmul.f32 %v2277, %v2289
    %v2293 = vlaneseq
    %v2294 = vshrl.u32 %v2293, 7
    %v2295 = vsub.s32 0, %v2294
    %v2296 = vrot.slane %v2264, %v2295
    %v2298 = vmul.f32 %v2290, %v2296
    %v2299 = vmul.f32 %v2291, %v2296
    %v2301 = vlaneseq
    %v2302 = vshrl.u32 %v2301, 7
    %v2303 = vsub.s32 0, %v2302
    %v2304 = vrot.slane %v2265, %v2303
    %v2306 = vadd.f32 %v2298, %v2304
    %v2307 = vadd.f32 %v2299, %v2304
    %v2308 = vpack.c.bf16 %v2307, %v2306
    %v2309 = vld [vmem:[#allocation12] sm:$0xf]
    %v2310 = vld [vmem:[#allocation12 + $0x4] sm:$0xf]
    %v2311 = vld [vmem:[#allocation12 + $0x8] sm:$0xf]
    %v2312 = vld [vmem:[#allocation12 + $0xc] sm:$0xf]
    %v2313 = vld [vmem:[#allocation12 + $0x10] sm:$0xf]
    %v2314 = vld [vmem:[#allocation12 + $0x14] sm:$0xf]
    %v2315 = vld [vmem:[#allocation12 + $0x18] sm:$0xf]
    %v2316 = vld [vmem:[#allocation12 + $0x1c] sm:$0xf]
    %v2317 = vld [vmem:[#allocation12 + $0x20] sm:$0xf]
    %v2318 = vld [vmem:[#allocation12 + $0x24] sm:$0xf]
    %v2319 = vld [vmem:[#allocation12 + $0x28] sm:$0xf]
    %v2320 = vld [vmem:[#allocation12 + $0x2c] sm:$0xf]
    %v2321 = vld [vmem:[#allocation12 + $0x30] sm:$0xf]
    %v2322 = vld [vmem:[#allocation12 + $0x34] sm:$0xf]
    %v2323 = vld [vmem:[#allocation12 + $0x38] sm:$0xf]
    %v2324 = vld [vmem:[#allocation12 + $0x3c] sm:$0xf]
    %v2325 = vld [vmem:[#allocation13] sm:$0x1]
    %v2327 = vlaneseq
    %v2328 = vshrl.u32 %v2327, 7
    %v2329 = vsub.s32 0, %v2328
    %v2330 = vrot.slane %v2325, %v2329
    %v2348 = vunpack.c.l.b16 %v2309
    %v2349 = vunpack.c.l.b16 %v2310
    %v2350 = vunpack.c.l.b16 %v2311
    %v2351 = vunpack.c.l.b16 %v2312
    %v2352 = vunpack.c.l.b16 %v2313
    %v2353 = vunpack.c.l.b16 %v2314
    %v2354 = vunpack.c.l.b16 %v2315
    %v2355 = vunpack.c.l.b16 %v2316
    %v2356 = vunpack.c.l.b16 %v2317
    %v2357 = vunpack.c.l.b16 %v2318
    %v2358 = vunpack.c.l.b16 %v2319
    %v2359 = vunpack.c.l.b16 %v2320
    %v2360 = vunpack.c.l.b16 %v2321
    %v2361 = vunpack.c.l.b16 %v2322
    %v2362 = vunpack.c.l.b16 %v2323
    %v2363 = vunpack.c.l.b16 %v2324
    %v2364 = vpack.c.b16 %v2349, %v2348
    %v2365 = vpack.c.b16 %v2351, %v2350
    %v2366 = vpack.c.b16 %v2353, %v2352
    %v2367 = vpack.c.b16 %v2355, %v2354
    %v2368 = vpack.c.b16 %v2357, %v2356
    %v2369 = vpack.c.b16 %v2359, %v2358
    %v2370 = vpack.c.b16 %v2361, %v2360
    %v2371 = vpack.c.b16 %v2363, %v2362
    %2380 = vmatprep.subr.bf16.mxu0 0
    %2381 = vmatpush1.bf16.msra.mxu0 %v2371
    %2382 = vmatprep.subr.bf16.mxu0 0
    %2383 = vmatpush1.bf16.msra.mxu0 %v2370
    %2384 = vmatprep.subr.bf16.mxu0 0
    %2385 = vmatpush1.bf16.msra.mxu0 %v2369
    %2386 = vmatprep.subr.bf16.mxu0 0
    %2387 = vmatpush1.bf16.msra.mxu0 %v2368
    %2388 = vmatprep.subr.bf16.mxu0 0
    %2389 = vmatpush1.bf16.msra.mxu0 %v2367
    %2390 = vmatprep.subr.bf16.mxu0 0
    %2391 = vmatpush1.bf16.msra.mxu0 %v2366
    %2392 = vmatprep.subr.bf16.mxu0 0
    %2393 = vmatpush1.bf16.msra.mxu0 %v2365
    %2394 = vmatprep.subr.bf16.mxu0 0
    %2395 = vmatpush1.bf16.msra.mxu0 %v2364
    %2396 = vmatprep.subr.bf16.mxu0 0
    %2397 = vmatpush2.bf16.msra.mxu0 0
    %2398 = vmatprep.subr.bf16.mxu0 0
    %2399 = vmatpush2.bf16.msra.mxu0 0
    %2400 = vmatprep.subr.bf16.mxu0 0
    %2401 = vmatpush2.bf16.msra.mxu0 0
    %2402 = vmatprep.subr.bf16.mxu0 0
    %2403 = vmatpush2.bf16.msra.mxu0 0
    %2404 = vmatprep.subr.bf16.mxu0 0
    %2405 = vmatpush2.bf16.msra.mxu0 0
    %2406 = vmatprep.subr.bf16.mxu0 0
    %2407 = vmatpush2.bf16.msra.mxu0 0
    %2408 = vmatprep.subr.bf16.mxu0 0
    %2409 = vmatpush2.bf16.msra.mxu0 0
    %2410 = vmatprep.subr.bf16.mxu0 0
    %2411 = vmatpush2.bf16.msra.mxu0 0
    %2412 = vmatprep.mubr.bf16.mxu0 0
    %2413 = vmatmul.mubr.bf16.gmra.mxu0 %v2308
    %v2414 = vpop.f32.mrf.mxu0
    %v2415 = vadd.f32 %v2330, %v2414
    %v2416 = vpop.f32.mrf.mxu0
    %v2417 = vpop.f32.mrf.mxu0
    %v2418 = vadd.f32 %v2330, %v2417
    %v2419 = vpop.f32.mrf.mxu0
    %2420 = vdwg.mxu0
    %v2421 = vmul.f32 %v2415, 0.5
    %v2422 = vmul.f32 %v2418, 0.5
    %v2423 = vmul.f32 %v2415, 0.044715
    %v2424 = vmul.f32 %v2418, 0.044715
    %v2425 = vmul.f32 %v2423, %v2415
    %v2426 = vmul.f32 %v2424, %v2418
    %v2427 = vmul.f32 %v2425, %v2415
    %v2428 = vmul.f32 %v2426, %v2418
    %v2429 = vadd.f32 %v2415, %v2427
    %v2430 = vadd.f32 %v2418, %v2428
    %v2431 = vmul.f32 %v2429, 0.7978846
    %v2432 = vmul.f32 %v2430, 0.7978846
    %v2433 = vtanh.pop %v2431
    %v2434 = vtanh.pop %v2432
    %v2435 = vadd.f32 %v2433, 1.0
    %v2436 = vadd.f32 %v2434, 1.0
    %v2437 = vmul.f32 %v2421, %v2435
    %v2438 = vmul.f32 %v2422, %v2436
    %v2439 = vpack.c.bf16 %v2438, %v2437
    %v2440 = vld [vmem:[#allocation15] sm:$0xf]
    %v2441 = vld [vmem:[#allocation15 + $0x4] sm:$0xf]
    %v2442 = vld [vmem:[#allocation15 + $0x8] sm:$0xf]
    %v2443 = vld [vmem:[#allocation15 + $0xc] sm:$0xf]
    %v2444 = vld [vmem:[#allocation15 + $0x10] sm:$0xf]
    %v2445 = vld [vmem:[#allocation15 + $0x14] sm:$0xf]
    %v2446 = vld [vmem:[#allocation15 + $0x18] sm:$0xf]
    %v2447 = vld [vmem:[#allocation15 + $0x1c] sm:$0xf]
    %v2448 = vld [vmem:[#allocation15 + $0x20] sm:$0xf]
    %v2449 = vld [vmem:[#allocation15 + $0x24] sm:$0xf]
    %v2450 = vld [vmem:[#allocation15 + $0x28] sm:$0xf]
    %v2451 = vld [vmem:[#allocation15 + $0x2c] sm:$0xf]
    %v2452 = vld [vmem:[#allocation15 + $0x30] sm:$0xf]
    %v2453 = vld [vmem:[#allocation15 + $0x34] sm:$0xf]
    %v2454 = vld [vmem:[#allocation15 + $0x38] sm:$0xf]
    %v2455 = vld [vmem:[#allocation15 + $0x3c] sm:$0xf]
    %v2456 = vld [vmem:[#allocation16] sm:$0x1]
    %v2458 = vlaneseq
    %v2459 = vshrl.u32 %v2458, 7
    %v2460 = vsub.s32 0, %v2459
    %v2461 = vrot.slane %v2456, %v2460
    %v2479 = vunpack.c.l.b16 %v2440
    %v2480 = vunpack.c.l.b16 %v2441
    %v2481 = vunpack.c.l.b16 %v2442
    %v2482 = vunpack.c.l.b16 %v2443
    %v2483 = vunpack.c.l.b16 %v2444
    %v2484 = vunpack.c.l.b16 %v2445
    %v2485 = vunpack.c.l.b16 %v2446
    %v2486 = vunpack.c.l.b16 %v2447
    %v2487 = vunpack.c.l.b16 %v2448
    %v2488 = vunpack.c.l.b16 %v2449
    %v2489 = vunpack.c.l.b16 %v2450
    %v2490 = vunpack.c.l.b16 %v2451
    %v2491 = vunpack.c.l.b16 %v2452
    %v2492 = vunpack.c.l.b16 %v2453
    %v2493 = vunpack.c.l.b16 %v2454
    %v2494 = vunpack.c.l.b16 %v2455
    %v2495 = vpack.c.b16 %v2480, %v2479
    %v2496 = vpack.c.b16 %v2482, %v2481
    %v2497 = vpack.c.b16 %v2484, %v2483
    %v2498 = vpack.c.b16 %v2486, %v2485
    %v2499 = vpack.c.b16 %v2488, %v2487
    %v2500 = vpack.c.b16 %v2490, %v2489
    %v2501 = vpack.c.b16 %v2492, %v2491
    %v2502 = vpack.c.b16 %v2494, %v2493
    %2511 = vmatprep.subr.bf16.mxu0 0
    %2512 = vmatpush1.bf16.msra.mxu0 %v2502
    %2513 = vmatprep.subr.bf16.mxu0 0
    %2514 = vmatpush1.bf16.msra.mxu0 %v2501
    %2515 = vmatprep.subr.bf16.mxu0 0
    %2516 = vmatpush1.bf16.msra.mxu0 %v2500
    %2517 = vmatprep.subr.bf16.mxu0 0
    %2518 = vmatpush1.bf16.msra.mxu0 %v2499
    %2519 = vmatprep.subr.bf16.mxu0 0
    %2520 = vmatpush1.bf16.msra.mxu0 %v2498
    %2521 = vmatprep.subr.bf16.mxu0 0
    %2522 = vmatpush1.bf16.msra.mxu0 %v2497
    %2523 = vmatprep.subr.bf16.mxu0 0
    %2524 = vmatpush1.bf16.msra.mxu0 %v2496
    %2525 = vmatprep.subr.bf16.mxu0 0
    %2526 = vmatpush1.bf16.msra.mxu0 %v2495
    %2527 = vmatprep.subr.bf16.mxu0 0
    %2528 = vmatpush2.bf16.msra.mxu0 0
    %2529 = vmatprep.subr.bf16.mxu0 0
    %2530 = vmatpush2.bf16.msra.mxu0 0
    %2531 = vmatprep.subr.bf16.mxu0 0
    %2532 = vmatpush2.bf16.msra.mxu0 0
    %2533 = vmatprep.subr.bf16.mxu0 0
    %2534 = vmatpush2.bf16.msra.mxu0 0
    %2535 = vmatprep.subr.bf16.mxu0 0
    %2536 = vmatpush2.bf16.msra.mxu0 0
    %2537 = vmatprep.subr.bf16.mxu0 0
    %2538 = vmatpush2.bf16.msra.mxu0 0
    %2539 = vmatprep.subr.bf16.mxu0 0
    %2540 = vmatpush2.bf16.msra.mxu0 0
    %2541 = vmatprep.subr.bf16.mxu0 0
    %2542 = vmatpush2.bf16.msra.mxu0 0
    %2543 = vmatprep.mubr.bf16.mxu0 0
    %2544 = vmatmul.mubr.bf16.gmra.mxu0 %v2439
    %v2545 = vpop.f32.mrf.mxu0
    %v2546 = vadd.f32 %v2461, %v2545
    %v2547 = vpop.f32.mrf.mxu0
    %v2548 = vpop.f32.mrf.mxu0
    %v2549 = vadd.f32 %v2461, %v2548
    %v2550 = vpop.f32.mrf.mxu0
    %2551 = vdwg.mxu0
    %v2552 = vadd.f32 %v2546, %v2306
    %v2553 = vadd.f32 %v2549, %v2307
    %v2554 = vld [vmem:[#allocation18] sm:$0x1]
    %v2555 = vld [vmem:[#allocation19] sm:$0x1]
    %v2556 = vmul.f32 %v2552, %v236
    %v2557 = vmul.f32 %v2553, %v236
    %2558 = vadd.xlane.f32.xlu0 %v2556
    %v2559 = vpop.xlane.xlu0 %2558
    %2560 = vadd.xlane.f32.xlu0 %v2557
    %v2561 = vpop.xlane.xlu0 %2560
    %v2562 = vmul.f32 %v2559, 0.03125
    %v2563 = vmul.f32 %v2561, 0.03125
    %v2564 = vsub.f32 %v2552, %v2562
    %v2565 = vsub.f32 %v2553, %v2563
    %v2566 = vmul.f32 %v2564, %v236
    %v2567 = vmul.f32 %v2565, %v236
    %v2568 = vmul.f32 %v2566, %v2566
    %v2569 = vmul.f32 %v2567, %v2567
    %2570 = vadd.xlane.f32.xlu0 %v2568
    %v2571 = vpop.xlane.xlu0 %2570
    %2572 = vadd.xlane.f32.xlu0 %v2569
    %v2573 = vpop.xlane.xlu0 %2572
    %v2574 = vmul.f32 %v2571, 0.03125
    %v2575 = vmul.f32 %v2573, 0.03125
    %v2576 = vadd.f32 %v2574, 1e-12
    %v2577 = vadd.f32 %v2575, 1e-12
    %v2578 = vrsqrt.pop %v2576
    %v2579 = vrsqrt.pop %v2577
    %v2580 = vmul.f32 %v2566, %v2578
    %v2581 = vmul.f32 %v2567, %v2579
    %v2583 = vlaneseq
    %v2584 = vshrl.u32 %v2583, 7
    %v2585 = vsub.s32 0, %v2584
    %v2586 = vrot.slane %v2554, %v2585
    %v2588 = vmul.f32 %v2580, %v2586
    %v2589 = vmul.f32 %v2581, %v2586
    %v2591 = vlaneseq
    %v2592 = vshrl.u32 %v2591, 7
    %v2593 = vsub.s32 0, %v2592
    %v2594 = vrot.slane %v2555, %v2593
    %v2596 = vadd.f32 %v2588, %v2594
    %v2597 = vadd.f32 %v2589, %v2594
    %v2598 = vpack.c.bf16 %v2597, %v2596
    %s2599 = scalar_lea.vmem [#allocation4], 768
    %v2600 = vld [vmem:[%s2599] sm:$0xff]
    %v2601 = vld [vmem:[%s2599 + $0x8] sm:$0xff]
    %v2602 = vld [vmem:[%s2599 + $0x10] sm:$0xff]
    %v2603 = vld [vmem:[%s2599 + $0x18] sm:$0xff]
    %v2604 = vld [vmem:[%s2599 + $0x20] sm:$0xff]
    %v2605 = vld [vmem:[%s2599 + $0x28] sm:$0xff]
    %v2606 = vld [vmem:[%s2599 + $0x30] sm:$0xff]
    %v2607 = vld [vmem:[%s2599 + $0x38] sm:$0xff]
    %v2608 = vld [vmem:[%s2599 + $0x40] sm:$0xff]
    %v2609 = vld [vmem:[%s2599 + $0x48] sm:$0xff]
    %v2610 = vld [vmem:[%s2599 + $0x50] sm:$0xff]
    %v2611 = vld [vmem:[%s2599 + $0x58] sm:$0xff]
    %v2612 = vld [vmem:[%s2599 + $0x60] sm:$0xff]
    %v2613 = vld [vmem:[%s2599 + $0x68] sm:$0xff]
    %v2614 = vld [vmem:[%s2599 + $0x70] sm:$0xff]
    %v2615 = vld [vmem:[%s2599 + $0x78] sm:$0xff]
    %v2616 = vld [vmem:[%s2599 + $0x80] sm:$0xff]
    %v2617 = vld [vmem:[%s2599 + $0x88] sm:$0xff]
    %v2618 = vld [vmem:[%s2599 + $0x90] sm:$0xff]
    %v2619 = vld [vmem:[%s2599 + $0x98] sm:$0xff]
    %v2620 = vld [vmem:[%s2599 + $0xa0] sm:$0xff]
    %v2621 = vld [vmem:[%s2599 + $0xa8] sm:$0xff]
    %v2622 = vld [vmem:[%s2599 + $0xb0] sm:$0xff]
    %v2623 = vld [vmem:[%s2599 + $0xb8] sm:$0xff]
    %v2624 = vld [vmem:[%s2599 + $0xc0] sm:$0xff]
    %v2625 = vld [vmem:[%s2599 + $0xc8] sm:$0xff]
    %v2626 = vld [vmem:[%s2599 + $0xd0] sm:$0xff]
    %v2627 = vld [vmem:[%s2599 + $0xd8] sm:$0xff]
    %v2628 = vld [vmem:[%s2599 + $0xe0] sm:$0xff]
    %v2629 = vld [vmem:[%s2599 + $0xe8] sm:$0xff]
    %v2630 = vld [vmem:[%s2599 + $0xf0] sm:$0xff]
    %v2631 = vld [vmem:[%s2599 + $0xf8] sm:$0xff]
    %v2632 = vld [vmem:[%s2599 + $0x100] sm:$0xff]
    %v2633 = vld [vmem:[%s2599 + $0x108] sm:$0xff]
    %v2634 = vld [vmem:[%s2599 + $0x110] sm:$0xff]
    %v2635 = vld [vmem:[%s2599 + $0x118] sm:$0xff]
    %v2636 = vld [vmem:[%s2599 + $0x120] sm:$0xff]
    %v2637 = vld [vmem:[%s2599 + $0x128] sm:$0xff]
    %v2638 = vld [vmem:[%s2599 + $0x130] sm:$0xff]
    %v2639 = vld [vmem:[%s2599 + $0x138] sm:$0xff]
    %v2640 = vld [vmem:[%s2599 + $0x140] sm:$0xff]
    %v2641 = vld [vmem:[%s2599 + $0x148] sm:$0xff]
    %v2642 = vld [vmem:[%s2599 + $0x150] sm:$0xff]
    %v2643 = vld [vmem:[%s2599 + $0x158] sm:$0xff]
    %v2644 = vld [vmem:[%s2599 + $0x160] sm:$0xff]
    %v2645 = vld [vmem:[%s2599 + $0x168] sm:$0xff]
    %v2646 = vld [vmem:[%s2599 + $0x170] sm:$0xff]
    %v2647 = vld [vmem:[%s2599 + $0x178] sm:$0xff]
    %v2648 = vld [vmem:[%s2599 + $0x180] sm:$0xff]
    %v2649 = vld [vmem:[%s2599 + $0x188] sm:$0xff]
    %v2650 = vld [vmem:[%s2599 + $0x190] sm:$0xff]
    %v2651 = vld [vmem:[%s2599 + $0x198] sm:$0xff]
    %v2652 = vld [vmem:[%s2599 + $0x1a0] sm:$0xff]
    %v2653 = vld [vmem:[%s2599 + $0x1a8] sm:$0xff]
    %v2654 = vld [vmem:[%s2599 + $0x1b0] sm:$0xff]
    %v2655 = vld [vmem:[%s2599 + $0x1b8] sm:$0xff]
    %v2656 = vld [vmem:[%s2599 + $0x1c0] sm:$0xff]
    %v2657 = vld [vmem:[%s2599 + $0x1c8] sm:$0xff]
    %v2658 = vld [vmem:[%s2599 + $0x1d0] sm:$0xff]
    %v2659 = vld [vmem:[%s2599 + $0x1d8] sm:$0xff]
    %v2660 = vld [vmem:[%s2599 + $0x1e0] sm:$0xff]
    %v2661 = vld [vmem:[%s2599 + $0x1e8] sm:$0xff]
    %v2662 = vld [vmem:[%s2599 + $0x1f0] sm:$0xff]
    %v2663 = vld [vmem:[%s2599 + $0x1f8] sm:$0xff]
    %v2664 = vld [vmem:[%s2599 + $0x200] sm:$0xff]
    %v2665 = vld [vmem:[%s2599 + $0x208] sm:$0xff]
    %v2666 = vld [vmem:[%s2599 + $0x210] sm:$0xff]
    %v2667 = vld [vmem:[%s2599 + $0x218] sm:$0xff]
    %v2668 = vld [vmem:[%s2599 + $0x220] sm:$0xff]
    %v2669 = vld [vmem:[%s2599 + $0x228] sm:$0xff]
    %v2670 = vld [vmem:[%s2599 + $0x230] sm:$0xff]
    %v2671 = vld [vmem:[%s2599 + $0x238] sm:$0xff]
    %v2672 = vld [vmem:[%s2599 + $0x240] sm:$0xff]
    %v2673 = vld [vmem:[%s2599 + $0x248] sm:$0xff]
    %v2674 = vld [vmem:[%s2599 + $0x250] sm:$0xff]
    %v2675 = vld [vmem:[%s2599 + $0x258] sm:$0xff]
    %v2676 = vld [vmem:[%s2599 + $0x260] sm:$0xff]
    %v2677 = vld [vmem:[%s2599 + $0x268] sm:$0xff]
    %v2678 = vld [vmem:[%s2599 + $0x270] sm:$0xff]
    %v2679 = vld [vmem:[%s2599 + $0x278] sm:$0xff]
    %v2680 = vld [vmem:[%s2599 + $0x280] sm:$0xff]
    %v2681 = vld [vmem:[%s2599 + $0x288] sm:$0xff]
    %v2682 = vld [vmem:[%s2599 + $0x290] sm:$0xff]
    %v2683 = vld [vmem:[%s2599 + $0x298] sm:$0xff]
    %v2684 = vld [vmem:[%s2599 + $0x2a0] sm:$0xff]
    %v2685 = vld [vmem:[%s2599 + $0x2a8] sm:$0xff]
    %v2686 = vld [vmem:[%s2599 + $0x2b0] sm:$0xff]
    %v2687 = vld [vmem:[%s2599 + $0x2b8] sm:$0xff]
    %v2688 = vld [vmem:[%s2599 + $0x2c0] sm:$0xff]
    %v2689 = vld [vmem:[%s2599 + $0x2c8] sm:$0xff]
    %v2690 = vld [vmem:[%s2599 + $0x2d0] sm:$0xff]
    %v2691 = vld [vmem:[%s2599 + $0x2d8] sm:$0xff]
    %v2692 = vld [vmem:[%s2599 + $0x2e0] sm:$0xff]
    %v2693 = vld [vmem:[%s2599 + $0x2e8] sm:$0xff]
    %v2694 = vld [vmem:[%s2599 + $0x2f0] sm:$0xff]
    %v2695 = vld [vmem:[%s2599 + $0x2f8] sm:$0xff]
    %s2696 = scalar_lea.vmem [#allocation6], 12
    %v2697 = vld [vmem:[%s2696] sm:$0xff]
    %v2698 = vld [vmem:[%s2696 + $0x8] sm:$0xf]
    %v2701 = vlaneseq
    %v2702 = vshrl.u32 %v2701, 7
    %v2703 = vsub.s32 0, %v2702
    %v2704 = vrot.slane %v2697, %v2703
    %v2705 = vlaneseq
    %v2706 = vshrl.u32 %v2705, 7
    %v2707 = vsub.s32 1, %v2706
    %v2708 = vrot.slane %v2697, %v2707
    %v2709 = vlaneseq
    %v2710 = vshrl.u32 %v2709, 7
    %v2711 = vsub.s32 2, %v2710
    %v2712 = vrot.slane %v2697, %v2711
    %v2713 = vlaneseq
    %v2714 = vshrl.u32 %v2713, 7
    %v2715 = vsub.s32 3, %v2714
    %v2716 = vrot.slane %v2697, %v2715
    %v2717 = vlaneseq
    %v2718 = vshrl.u32 %v2717, 7
    %v2719 = vsub.s32 4, %v2718
    %v2720 = vrot.slane %v2697, %v2719
    %v2721 = vlaneseq
    %v2722 = vshrl.u32 %v2721, 7
    %v2723 = vsub.s32 5, %v2722
    %v2724 = vrot.slane %v2697, %v2723
    %v2725 = vlaneseq
    %v2726 = vshrl.u32 %v2725, 7
    %v2727 = vsub.s32 6, %v2726
    %v2728 = vrot.slane %v2697, %v2727
    %v2729 = vlaneseq
    %v2730 = vshrl.u32 %v2729, 7
    %v2731 = vsub.s32 7, %v2730
    %v2732 = vrot.slane %v2697, %v2731
    %v2733 = vlaneseq
    %v2734 = vshrl.u32 %v2733, 7
    %v2735 = vsub.s32 0, %v2734
    %v2736 = vrot.slane %v2698, %v2735
    %v2737 = vlaneseq
    %v2738 = vshrl.u32 %v2737, 7
    %v2739 = vsub.s32 1, %v2738
    %v2740 = vrot.slane %v2698, %v2739
    %v2741 = vlaneseq
    %v2742 = vshrl.u32 %v2741, 7
    %v2743 = vsub.s32 2, %v2742
    %v2744 = vrot.slane %v2698, %v2743
    %v2745 = vlaneseq
    %v2746 = vshrl.u32 %v2745, 7
    %v2747 = vsub.s32 3, %v2746
    %v2748 = vrot.slane %v2698, %v2747
    %v2857 = vunpack.c.l.b16 %v2600
    %v2858 = vunpack.c.h.b16 %v2600
    %v2859 = vunpack.c.l.b16 %v2601
    %v2860 = vunpack.c.h.b16 %v2601
    %v2861 = vunpack.c.l.b16 %v2602
    %v2862 = vunpack.c.h.b16 %v2602
    %v2863 = vunpack.c.l.b16 %v2603
    %v2864 = vunpack.c.h.b16 %v2603
    %v2865 = vunpack.c.l.b16 %v2604
    %v2866 = vunpack.c.h.b16 %v2604
    %v2867 = vunpack.c.l.b16 %v2605
    %v2868 = vunpack.c.h.b16 %v2605
    %v2869 = vunpack.c.l.b16 %v2606
    %v2870 = vunpack.c.h.b16 %v2606
    %v2871 = vunpack.c.l.b16 %v2607
    %v2872 = vunpack.c.h.b16 %v2607
    %v2873 = vunpack.c.l.b16 %v2608
    %v2874 = vunpack.c.h.b16 %v2608
    %v2875 = vunpack.c.l.b16 %v2609
    %v2876 = vunpack.c.h.b16 %v2609
    %v2877 = vunpack.c.l.b16 %v2610
    %v2878 = vunpack.c.h.b16 %v2610
    %v2879 = vunpack.c.l.b16 %v2611
    %v2880 = vunpack.c.h.b16 %v2611
    %v2881 = vunpack.c.l.b16 %v2612
    %v2882 = vunpack.c.h.b16 %v2612
    %v2883 = vunpack.c.l.b16 %v2613
    %v2884 = vunpack.c.h.b16 %v2613
    %v2885 = vunpack.c.l.b16 %v2614
    %v2886 = vunpack.c.h.b16 %v2614
    %v2887 = vunpack.c.l.b16 %v2615
    %v2888 = vunpack.c.h.b16 %v2615
    %v2889 = vunpack.c.l.b16 %v2616
    %v2890 = vunpack.c.h.b16 %v2616
    %v2891 = vunpack.c.l.b16 %v2617
    %v2892 = vunpack.c.h.b16 %v2617
    %v2893 = vunpack.c.l.b16 %v2618
    %v2894 = vunpack.c.h.b16 %v2618
    %v2895 = vunpack.c.l.b16 %v2619
    %v2896 = vunpack.c.h.b16 %v2619
    %v2897 = vunpack.c.l.b16 %v2620
    %v2898 = vunpack.c.h.b16 %v2620
    %v2899 = vunpack.c.l.b16 %v2621
    %v2900 = vunpack.c.h.b16 %v2621
    %v2901 = vunpack.c.l.b16 %v2622
    %v2902 = vunpack.c.h.b16 %v2622
    %v2903 = vunpack.c.l.b16 %v2623
    %v2904 = vunpack.c.h.b16 %v2623
    %v2905 = vunpack.c.l.b16 %v2624
    %v2906 = vunpack.c.h.b16 %v2624
    %v2907 = vunpack.c.l.b16 %v2625
    %v2908 = vunpack.c.h.b16 %v2625
    %v2909 = vunpack.c.l.b16 %v2626
    %v2910 = vunpack.c.h.b16 %v2626
    %v2911 = vunpack.c.l.b16 %v2627
    %v2912 = vunpack.c.h.b16 %v2627
    %v2913 = vunpack.c.l.b16 %v2628
    %v2914 = vunpack.c.h.b16 %v2628
    %v2915 = vunpack.c.l.b16 %v2629
    %v2916 = vunpack.c.h.b16 %v2629
    %v2917 = vunpack.c.l.b16 %v2630
    %v2918 = vunpack.c.h.b16 %v2630
    %v2919 = vunpack.c.l.b16 %v2631
    %v2920 = vunpack.c.h.b16 %v2631
    %v2921 = vunpack.c.l.b16 %v2632
    %v2922 = vunpack.c.h.b16 %v2632
    %v2923 = vunpack.c.l.b16 %v2633
    %v2924 = vunpack.c.h.b16 %v2633
    %v2925 = vunpack.c.l.b16 %v2634
    %v2926 = vunpack.c.h.b16 %v2634
    %v2927 = vunpack.c.l.b16 %v2635
    %v2928 = vunpack.c.h.b16 %v2635
    %v2929 = vunpack.c.l.b16 %v2636
    %v2930 = vunpack.c.h.b16 %v2636
    %v2931 = vunpack.c.l.b16 %v2637
    %v2932 = vunpack.c.h.b16 %v2637
    %v2933 = vunpack.c.l.b16 %v2638
    %v2934 = vunpack.c.h.b16 %v2638
    %v2935 = vunpack.c.l.b16 %v2639
    %v2936 = vunpack.c.h.b16 %v2639
    %v2937 = vunpack.c.l.b16 %v2640
    %v2938 = vunpack.c.h.b16 %v2640
    %v2939 = vunpack.c.l.b16 %v2641
    %v2940 = vunpack.c.h.b16 %v2641
    %v2941 = vunpack.c.l.b16 %v2642
    %v2942 = vunpack.c.h.b16 %v2642
    %v2943 = vunpack.c.l.b16 %v2643
    %v2944 = vunpack.c.h.b16 %v2643
    %v2945 = vunpack.c.l.b16 %v2644
    %v2946 = vunpack.c.h.b16 %v2644
    %v2947 = vunpack.c.l.b16 %v2645
    %v2948 = vunpack.c.h.b16 %v2645
    %v2949 = vunpack.c.l.b16 %v2646
    %v2950 = vunpack.c.h.b16 %v2646
    %v2951 = vunpack.c.l.b16 %v2647
    %v2952 = vunpack.c.h.b16 %v2647
    %v2953 = vunpack.c.l.b16 %v2648
    %v2954 = vunpack.c.h.b16 %v2648
    %v2955 = vunpack.c.l.b16 %v2649
    %v2956 = vunpack.c.h.b16 %v2649
    %v2957 = vunpack.c.l.b16 %v2650
    %v2958 = vunpack.c.h.b16 %v2650
    %v2959 = vunpack.c.l.b16 %v2651
    %v2960 = vunpack.c.h.b16 %v2651
    %v2961 = vunpack.c.l.b16 %v2652
    %v2962 = vunpack.c.h.b16 %v2652
    %v2963 = vunpack.c.l.b16 %v2653
    %v2964 = vunpack.c.h.b16 %v2653
    %v2965 = vunpack.c.l.b16 %v2654
    %v2966 = vunpack.c.h.b16 %v2654
    %v2967 = vunpack.c.l.b16 %v2655
    %v2968 = vunpack.c.h.b16 %v2655
    %v2969 = vunpack.c.l.b16 %v2656
    %v2970 = vunpack.c.h.b16 %v2656
    %v2971 = vunpack.c.l.b16 %v2657
    %v2972 = vunpack.c.h.b16 %v2657
    %v2973 = vunpack.c.l.b16 %v2658
    %v2974 = vunpack.c.h.b16 %v2658
    %v2975 = vunpack.c.l.b16 %v2659
    %v2976 = vunpack.c.h.b16 %v2659
    %v2977 = vunpack.c.l.b16 %v2660
    %v2978 = vunpack.c.h.b16 %v2660
    %v2979 = vunpack.c.l.b16 %v2661
    %v2980 = vunpack.c.h.b16 %v2661
    %v2981 = vunpack.c.l.b16 %v2662
    %v2982 = vunpack.c.h.b16 %v2662
    %v2983 = vunpack.c.l.b16 %v2663
    %v2984 = vunpack.c.h.b16 %v2663
    %v2985 = vunpack.c.l.b16 %v2664
    %v2986 = vunpack.c.h.b16 %v2664
    %v2987 = vunpack.c.l.b16 %v2665
    %v2988 = vunpack.c.h.b16 %v2665
    %v2989 = vunpack.c.l.b16 %v2666
    %v2990 = vunpack.c.h.b16 %v2666
    %v2991 = vunpack.c.l.b16 %v2667
    %v2992 = vunpack.c.h.b16 %v2667
    %v2993 = vunpack.c.l.b16 %v2668
    %v2994 = vunpack.c.h.b16 %v2668
    %v2995 = vunpack.c.l.b16 %v2669
    %v2996 = vunpack.c.h.b16 %v2669
    %v2997 = vunpack.c.l.b16 %v2670
    %v2998 = vunpack.c.h.b16 %v2670
    %v2999 = vunpack.c.l.b16 %v2671
    %v3000 = vunpack.c.h.b16 %v2671
    %v3001 = vunpack.c.l.b16 %v2672
    %v3002 = vunpack.c.h.b16 %v2672
    %v3003 = vunpack.c.l.b16 %v2673
    %v3004 = vunpack.c.h.b16 %v2673
    %v3005 = vunpack.c.l.b16 %v2674
    %v3006 = vunpack.c.h.b16 %v2674
    %v3007 = vunpack.c.l.b16 %v2675
    %v3008 = vunpack.c.h.b16 %v2675
    %v3009 = vunpack.c.l.b16 %v2676
    %v3010 = vunpack.c.h.b16 %v2676
    %v3011 = vunpack.c.l.b16 %v2677
    %v3012 = vunpack.c.h.b16 %v2677
    %v3013 = vunpack.c.l.b16 %v2678
    %v3014 = vunpack.c.h.b16 %v2678
    %v3015 = vunpack.c.l.b16 %v2679
    %v3016 = vunpack.c.h.b16 %v2679
    %v3017 = vunpack.c.l.b16 %v2680
    %v3018 = vunpack.c.h.b16 %v2680
    %v3019 = vunpack.c.l.b16 %v2681
    %v3020 = vunpack.c.h.b16 %v2681
    %v3021 = vunpack.c.l.b16 %v2682
    %v3022 = vunpack.c.h.b16 %v2682
    %v3023 = vunpack.c.l.b16 %v2683
    %v3024 = vunpack.c.h.b16 %v2683
    %v3025 = vunpack.c.l.b16 %v2684
    %v3026 = vunpack.c.h.b16 %v2684
    %v3027 = vunpack.c.l.b16 %v2685
    %v3028 = vunpack.c.h.b16 %v2685
    %v3029 = vunpack.c.l.b16 %v2686
    %v3030 = vunpack.c.h.b16 %v2686
    %v3031 = vunpack.c.l.b16 %v2687
    %v3032 = vunpack.c.h.b16 %v2687
    %v3033 = vunpack.c.l.b16 %v2688
    %v3034 = vunpack.c.h.b16 %v2688
    %v3035 = vunpack.c.l.b16 %v2689
    %v3036 = vunpack.c.h.b16 %v2689
    %v3037 = vunpack.c.l.b16 %v2690
    %v3038 = vunpack.c.h.b16 %v2690
    %v3039 = vunpack.c.l.b16 %v2691
    %v3040 = vunpack.c.h.b16 %v2691
    %v3041 = vunpack.c.l.b16 %v2692
    %v3042 = vunpack.c.h.b16 %v2692
    %v3043 = vunpack.c.l.b16 %v2693
    %v3044 = vunpack.c.h.b16 %v2693
    %v3045 = vunpack.c.l.b16 %v2694
    %v3046 = vunpack.c.h.b16 %v2694
    %v3047 = vunpack.c.l.b16 %v2695
    %v3048 = vunpack.c.h.b16 %v2695
    %v3049 = vpack.c.b16 %v2869, %v2857
    %v3050 = vpack.c.b16 %v2870, %v2858
    %v3051 = vpack.c.b16 %v2871, %v2859
    %v3052 = vpack.c.b16 %v2872, %v2860
    %v3053 = vpack.c.b16 %v2873, %v2861
    %v3054 = vpack.c.b16 %v2874, %v2862
    %v3055 = vpack.c.b16 %v2875, %v2863
    %v3056 = vpack.c.b16 %v2876, %v2864
    %v3057 = vpack.c.b16 %v2877, %v2865
    %v3058 = vpack.c.b16 %v2878, %v2866
    %v3059 = vpack.c.b16 %v2879, %v2867
    %v3060 = vpack.c.b16 %v2880, %v2868
    %v3061 = vpack.c.b16 %v2893, %v2881
    %v3062 = vpack.c.b16 %v2894, %v2882
    %v3063 = vpack.c.b16 %v2895, %v2883
    %v3064 = vpack.c.b16 %v2896, %v2884
    %v3065 = vpack.c.b16 %v2897, %v2885
    %v3066 = vpack.c.b16 %v2898, %v2886
    %v3067 = vpack.c.b16 %v2899, %v2887
    %v3068 = vpack.c.b16 %v2900, %v2888
    %v3069 = vpack.c.b16 %v2901, %v2889
    %v3070 = vpack.c.b16 %v2902, %v2890
    %v3071 = vpack.c.b16 %v2903, %v2891
    %v3072 = vpack.c.b16 %v2904, %v2892
    %v3073 = vpack.c.b16 %v2917, %v2905
    %v3074 = vpack.c.b16 %v2918, %v2906
    %v3075 = vpack.c.b16 %v2919, %v2907
    %v3076 = vpack.c.b16 %v2920, %v2908
    %v3077 = vpack.c.b16 %v2921, %v2909
    %v3078 = vpack.c.b16 %v2922, %v2910
    %v3079 = vpack.c.b16 %v2923, %v2911
    %v3080 = vpack.c.b16 %v2924, %v2912
    %v3081 = vpack.c.b16 %v2925, %v2913
    %v3082 = vpack.c.b16 %v2926, %v2914
    %v3083 = vpack.c.b16 %v2927, %v2915
    %v3084 = vpack.c.b16 %v2928, %v2916
    %v3085 = vpack.c.b16 %v2941, %v2929
    %v3086 = vpack.c.b16 %v2942, %v2930
    %v3087 = vpack.c.b16 %v2943, %v2931
    %v3088 = vpack.c.b16 %v2944, %v2932
    %v3089 = vpack.c.b16 %v2945, %v2933
    %v3090 = vpack.c.b16 %v2946, %v2934
    %v3091 = vpack.c.b16 %v2947, %v2935
    %v3092 = vpack.c.b16 %v2948, %v2936
    %v3093 = vpack.c.b16 %v2949, %v2937
    %v3094 = vpack.c.b16 %v2950, %v2938
    %v3095 = vpack.c.b16 %v2951, %v2939
    %v3096 = vpack.c.b16 %v2952, %v2940
    %v3097 = vpack.c.b16 %v2965, %v2953
    %v3098 = vpack.c.b16 %v2966, %v2954
    %v3099 = vpack.c.b16 %v2967, %v2955
    %v3100 = vpack.c.b16 %v2968, %v2956
    %v3101 = vpack.c.b16 %v2969, %v2957
    %v3102 = vpack.c.b16 %v2970, %v2958
    %v3103 = vpack.c.b16 %v2971, %v2959
    %v3104 = vpack.c.b16 %v2972, %v2960
    %v3105 = vpack.c.b16 %v2973, %v2961
    %v3106 = vpack.c.b16 %v2974, %v2962
    %v3107 = vpack.c.b16 %v2975, %v2963
    %v3108 = vpack.c.b16 %v2976, %v2964
    %v3109 = vpack.c.b16 %v2989, %v2977
    %v3110 = vpack.c.b16 %v2990, %v2978
    %v3111 = vpack.c.b16 %v2991, %v2979
    %v3112 = vpack.c.b16 %v2992, %v2980
    %v3113 = vpack.c.b16 %v2993, %v2981
    %v3114 = vpack.c.b16 %v2994, %v2982
    %v3115 = vpack.c.b16 %v2995, %v2983
    %v3116 = vpack.c.b16 %v2996, %v2984
    %v3117 = vpack.c.b16 %v2997, %v2985
    %v3118 = vpack.c.b16 %v2998, %v2986
    %v3119 = vpack.c.b16 %v2999, %v2987
    %v3120 = vpack.c.b16 %v3000, %v2988
    %v3121 = vpack.c.b16 %v3013, %v3001
    %v3122 = vpack.c.b16 %v3014, %v3002
    %v3123 = vpack.c.b16 %v3015, %v3003
    %v3124 = vpack.c.b16 %v3016, %v3004
    %v3125 = vpack.c.b16 %v3017, %v3005
    %v3126 = vpack.c.b16 %v3018, %v3006
    %v3127 = vpack.c.b16 %v3019, %v3007
    %v3128 = vpack.c.b16 %v3020, %v3008
    %v3129 = vpack.c.b16 %v3021, %v3009
    %v3130 = vpack.c.b16 %v3022, %v3010
    %v3131 = vpack.c.b16 %v3023, %v3011
    %v3132 = vpack.c.b16 %v3024, %v3012
    %v3133 = vpack.c.b16 %v3037, %v3025
    %v3134 = vpack.c.b16 %v3038, %v3026
    %v3135 = vpack.c.b16 %v3039, %v3027
    %v3136 = vpack.c.b16 %v3040, %v3028
    %v3137 = vpack.c.b16 %v3041, %v3029
    %v3138 = vpack.c.b16 %v3042, %v3030
    %v3139 = vpack.c.b16 %v3043, %v3031
    %v3140 = vpack.c.b16 %v3044, %v3032
    %v3141 = vpack.c.b16 %v3045, %v3033
    %v3142 = vpack.c.b16 %v3046, %v3034
    %v3143 = vpack.c.b16 %v3047, %v3035
    %v3144 = vpack.c.b16 %v3048, %v3036
    %3241 = vmatprep.subr.bf16.mxu0 %v3134
    %3242 = vmatpush1.bf16.msra.mxu0 %v3133
    %3243 = vmatprep.subr.bf16.mxu0 %v3122
    %3244 = vmatpush1.bf16.msra.mxu0 %v3121
    %3245 = vmatprep.subr.bf16.mxu0 %v3110
    %3246 = vmatpush1.bf16.msra.mxu0 %v3109
    %3247 = vmatprep.subr.bf16.mxu0 %v3098
    %3248 = vmatpush1.bf16.msra.mxu0 %v3097
    %3249 = vmatprep.subr.bf16.mxu0 %v3086
    %3250 = vmatpush1.bf16.msra.mxu0 %v3085
    %3251 = vmatprep.subr.bf16.mxu0 %v3074
    %3252 = vmatpush1.bf16.msra.mxu0 %v3073
    %3253 = vmatprep.subr.bf16.mxu0 %v3062
    %3254 = vmatpush1.bf16.msra.mxu0 %v3061
    %3255 = vmatprep.subr.bf16.mxu0 %v3050
    %3256 = vmatpush1.bf16.msra.mxu0 %v3049
    %3257 = vmatprep.subr.bf16.mxu0 0
    %3258 = vmatpush2.bf16.msra.mxu0 0
    %3259 = vmatprep.subr.bf16.mxu0 0
    %3260 = vmatpush2.bf16.msra.mxu0 0
    %3261 = vmatprep.subr.bf16.mxu0 0
    %3262 = vmatpush2.bf16.msra.mxu0 0
    %3263 = vmatprep.subr.bf16.mxu0 0
    %3264 = vmatpush2.bf16.msra.mxu0 0
    %3265 = vmatprep.subr.bf16.mxu0 0
    %3266 = vmatpush2.bf16.msra.mxu0 0
    %3267 = vmatprep.subr.bf16.mxu0 0
    %3268 = vmatpush2.bf16.msra.mxu0 0
    %3269 = vmatprep.subr.bf16.mxu0 0
    %3270 = vmatpush2.bf16.msra.mxu0 0
    %3271 = vmatprep.subr.bf16.mxu0 0
    %3272 = vmatpush2.bf16.msra.mxu0 0
    %3273 = vmatprep.mubr.bf16.mxu0 0
    %3274 = vmatmul.mubr.bf16.gmra.mxu0 %v2598
    %v3275 = vpop.f32.mrf.mxu0
    %v3276 = vadd.f32 %v2704, %v3275
    %v3277 = vpop.f32.mrf.mxu0
    %v3278 = vadd.f32 %v2708, %v3277
    %v3279 = vpop.f32.mrf.mxu0
    %v3280 = vadd.f32 %v2704, %v3279
    %v3281 = vpop.f32.mrf.mxu0
    %v3282 = vadd.f32 %v2708, %v3281
    %3283 = vdwg.mxu0
    %3284 = vmatprep.subr.bf16.mxu0 %v3136
    %3285 = vmatpush1.bf16.msra.mxu0 %v3135
    %3286 = vmatprep.subr.bf16.mxu0 %v3124
    %3287 = vmatpush1.bf16.msra.mxu0 %v3123
    %3288 = vmatprep.subr.bf16.mxu0 %v3112
    %3289 = vmatpush1.bf16.msra.mxu0 %v3111
    %3290 = vmatprep.subr.bf16.mxu0 %v3100
    %3291 = vmatpush1.bf16.msra.mxu0 %v3099
    %3292 = vmatprep.subr.bf16.mxu0 %v3088
    %3293 = vmatpush1.bf16.msra.mxu0 %v3087
    %3294 = vmatprep.subr.bf16.mxu0 %v3076
    %3295 = vmatpush1.bf16.msra.mxu0 %v3075
    %3296 = vmatprep.subr.bf16.mxu0 %v3064
    %3297 = vmatpush1.bf16.msra.mxu0 %v3063
    %3298 = vmatprep.subr.bf16.mxu0 %v3052
    %3299 = vmatpush1.bf16.msra.mxu0 %v3051
    %3300 = vmatprep.subr.bf16.mxu0 0
    %3301 = vmatpush2.bf16.msra.mxu0 0
    %3302 = vmatprep.subr.bf16.mxu0 0
    %3303 = vmatpush2.bf16.msra.mxu0 0
    %3304 = vmatprep.subr.bf16.mxu0 0
    %3305 = vmatpush2.bf16.msra.mxu0 0
    %3306 = vmatprep.subr.bf16.mxu0 0
    %3307 = vmatpush2.bf16.msra.mxu0 0
    %3308 = vmatprep.subr.bf16.mxu0 0
    %3309 = vmatpush2.bf16.msra.mxu0 0
    %3310 = vmatprep.subr.bf16.mxu0 0
    %3311 = vmatpush2.bf16.msra.mxu0 0
    %3312 = vmatprep.subr.bf16.mxu0 0
    %3313 = vmatpush2.bf16.msra.mxu0 0
    %3314 = vmatprep.subr.bf16.mxu0 0
    %3315 = vmatpush2.bf16.msra.mxu0 0
    %3316 = vmatprep.mubr.bf16.mxu0 0
    %3317 = vmatmul.mubr.bf16.gmra.mxu0 %v2598
    %v3318 = vpop.f32.mrf.mxu0
    %v3319 = vadd.f32 %v2712, %v3318
    %v3320 = vpop.f32.mrf.mxu0
    %v3321 = vadd.f32 %v2716, %v3320
    %v3322 = vpop.f32.mrf.mxu0
    %v3323 = vadd.f32 %v2712, %v3322
    %v3324 = vpop.f32.mrf.mxu0
    %v3325 = vadd.f32 %v2716, %v3324
    %3326 = vdwg.mxu0
    %3327 = vmatprep.subr.bf16.mxu0 %v3138
    %3328 = vmatpush1.bf16.msra.mxu0 %v3137
    %3329 = vmatprep.subr.bf16.mxu0 %v3126
    %3330 = vmatpush1.bf16.msra.mxu0 %v3125
    %3331 = vmatprep.subr.bf16.mxu0 %v3114
    %3332 = vmatpush1.bf16.msra.mxu0 %v3113
    %3333 = vmatprep.subr.bf16.mxu0 %v3102
    %3334 = vmatpush1.bf16.msra.mxu0 %v3101
    %3335 = vmatprep.subr.bf16.mxu0 %v3090
    %3336 = vmatpush1.bf16.msra.mxu0 %v3089
    %3337 = vmatprep.subr.bf16.mxu0 %v3078
    %3338 = vmatpush1.bf16.msra.mxu0 %v3077
    %3339 = vmatprep.subr.bf16.mxu0 %v3066
    %3340 = vmatpush1.bf16.msra.mxu0 %v3065
    %3341 = vmatprep.subr.bf16.mxu0 %v3054
    %3342 = vmatpush1.bf16.msra.mxu0 %v3053
    %3343 = vmatprep.subr.bf16.mxu0 0
    %3344 = vmatpush2.bf16.msra.mxu0 0
    %3345 = vmatprep.subr.bf16.mxu0 0
    %3346 = vmatpush2.bf16.msra.mxu0 0
    %3347 = vmatprep.subr.bf16.mxu0 0
    %3348 = vmatpush2.bf16.msra.mxu0 0
    %3349 = vmatprep.subr.bf16.mxu0 0
    %3350 = vmatpush2.bf16.msra.mxu0 0
    %3351 = vmatprep.subr.bf16.mxu0 0
    %3352 = vmatpush2.bf16.msra.mxu0 0
    %3353 = vmatprep.subr.bf16.mxu0 0
    %3354 = vmatpush2.bf16.msra.mxu0 0
    %3355 = vmatprep.subr.bf16.mxu0 0
    %3356 = vmatpush2.bf16.msra.mxu0 0
    %3357 = vmatprep.subr.bf16.mxu0 0
    %3358 = vmatpush2.bf16.msra.mxu0 0
    %3359 = vmatprep.mubr.bf16.mxu0 0
    %3360 = vmatmul.mubr.bf16.gmra.mxu0 %v2598
    %v3361 = vpop.f32.mrf.mxu0
    %v3362 = vadd.f32 %v2720, %v3361
    %v3363 = vpop.f32.mrf.mxu0
    %v3364 = vadd.f32 %v2724, %v3363
    %v3365 = vpop.f32.mrf.mxu0
    %v3366 = vadd.f32 %v2720, %v3365
    %v3367 = vpop.f32.mrf.mxu0
    %v3368 = vadd.f32 %v2724, %v3367
    %3369 = vdwg.mxu0
    %3370 = vmatprep.subr.bf16.mxu0 %v3140
    %3371 = vmatpush1.bf16.msra.mxu0 %v3139
    %3372 = vmatprep.subr.bf16.mxu0 %v3128
    %3373 = vmatpush1.bf16.msra.mxu0 %v3127
    %3374 = vmatprep.subr.bf16.mxu0 %v3116
    %3375 = vmatpush1.bf16.msra.mxu0 %v3115
    %3376 = vmatprep.subr.bf16.mxu0 %v3104
    %3377 = vmatpush1.bf16.msra.mxu0 %v3103
    %3378 = vmatprep.subr.bf16.mxu0 %v3092
    %3379 = vmatpush1.bf16.msra.mxu0 %v3091
    %3380 = vmatprep.subr.bf16.mxu0 %v3080
    %3381 = vmatpush1.bf16.msra.mxu0 %v3079
    %3382 = vmatprep.subr.bf16.mxu0 %v3068
    %3383 = vmatpush1.bf16.msra.mxu0 %v3067
    %3384 = vmatprep.subr.bf16.mxu0 %v3056
    %3385 = vmatpush1.bf16.msra.mxu0 %v3055
    %3386 = vmatprep.subr.bf16.mxu0 0
    %3387 = vmatpush2.bf16.msra.mxu0 0
    %3388 = vmatprep.subr.bf16.mxu0 0
    %3389 = vmatpush2.bf16.msra.mxu0 0
    %3390 = vmatprep.subr.bf16.mxu0 0
    %3391 = vmatpush2.bf16.msra.mxu0 0
    %3392 = vmatprep.subr.bf16.mxu0 0
    %3393 = vmatpush2.bf16.msra.mxu0 0
    %3394 = vmatprep.subr.bf16.mxu0 0
    %3395 = vmatpush2.bf16.msra.mxu0 0
    %3396 = vmatprep.subr.bf16.mxu0 0
    %3397 = vmatpush2.bf16.msra.mxu0 0
    %3398 = vmatprep.subr.bf16.mxu0 0
    %3399 = vmatpush2.bf16.msra.mxu0 0
    %3400 = vmatprep.subr.bf16.mxu0 0
    %3401 = vmatpush2.bf16.msra.mxu0 0
    %3402 = vmatprep.mubr.bf16.mxu0 0
    %3403 = vmatmul.mubr.bf16.gmra.mxu0 %v2598
    %v3404 = vpop.f32.mrf.mxu0
    %v3405 = vadd.f32 %v2728, %v3404
    %v3406 = vpop.f32.mrf.mxu0
    %v3407 = vadd.f32 %v2732, %v3406
    %v3408 = vpop.f32.mrf.mxu0
    %v3409 = vadd.f32 %v2728, %v3408
    %v3410 = vpop.f32.mrf.mxu0
    %v3411 = vadd.f32 %v2732, %v3410
    %3412 = vdwg.mxu0
    %3413 = vmatprep.subr.bf16.mxu0 %v3142
    %3414 = vmatpush1.bf16.msra.mxu0 %v3141
    %3415 = vmatprep.subr.bf16.mxu0 %v3130
    %3416 = vmatpush1.bf16.msra.mxu0 %v3129
    %3417 = vmatprep.subr.bf16.mxu0 %v3118
    %3418 = vmatpush1.bf16.msra.mxu0 %v3117
    %3419 = vmatprep.subr.bf16.mxu0 %v3106
    %3420 = vmatpush1.bf16.msra.mxu0 %v3105
    %3421 = vmatprep.subr.bf16.mxu0 %v3094
    %3422 = vmatpush1.bf16.msra.mxu0 %v3093
    %3423 = vmatprep.subr.bf16.mxu0 %v3082
    %3424 = vmatpush1.bf16.msra.mxu0 %v3081
    %3425 = vmatprep.subr.bf16.mxu0 %v3070
    %3426 = vmatpush1.bf16.msra.mxu0 %v3069
    %3427 = vmatprep.subr.bf16.mxu0 %v3058
    %3428 = vmatpush1.bf16.msra.mxu0 %v3057
    %3429 = vmatprep.subr.bf16.mxu0 0
    %3430 = vmatpush2.bf16.msra.mxu0 0
    %3431 = vmatprep.subr.bf16.mxu0 0
    %3432 = vmatpush2.bf16.msra.mxu0 0
    %3433 = vmatprep.subr.bf16.mxu0 0
    %3434 = vmatpush2.bf16.msra.mxu0 0
    %3435 = vmatprep.subr.bf16.mxu0 0
    %3436 = vmatpush2.bf16.msra.mxu0 0
    %3437 = vmatprep.subr.bf16.mxu0 0
    %3438 = vmatpush2.bf16.msra.mxu0 0
    %3439 = vmatprep.subr.bf16.mxu0 0
    %3440 = vmatpush2.bf16.msra.mxu0 0
    %3441 = vmatprep.subr.bf16.mxu0 0
    %3442 = vmatpush2.bf16.msra.mxu0 0
    %3443 = vmatprep.subr.bf16.mxu0 0
    %3444 = vmatpush2.bf16.msra.mxu0 0
    %3445 = vmatprep.mubr.bf16.mxu0 0
    %3446 = vmatmul.mubr.bf16.gmra.mxu0 %v2598
    %v3447 = vpop.f32.mrf.mxu0
    %v3448 = vadd.f32 %v2736, %v3447
    %v3449 = vpop.f32.mrf.mxu0
    %v3450 = vadd.f32 %v2740, %v3449
    %v3451 = vpop.f32.mrf.mxu0
    %v3452 = vadd.f32 %v2736, %v3451
    %v3453 = vpop.f32.mrf.mxu0
    %v3454 = vadd.f32 %v2740, %v3453
    %3455 = vdwg.mxu0
    %3456 = vmatprep.subr.bf16.mxu0 %v3144
    %3457 = vmatpush1.bf16.msra.mxu0 %v3143
    %3458 = vmatprep.subr.bf16.mxu0 %v3132
    %3459 = vmatpush1.bf16.msra.mxu0 %v3131
    %3460 = vmatprep.subr.bf16.mxu0 %v3120
    %3461 = vmatpush1.bf16.msra.mxu0 %v3119
    %3462 = vmatprep.subr.bf16.mxu0 %v3108
    %3463 = vmatpush1.bf16.msra.mxu0 %v3107
    %3464 = vmatprep.subr.bf16.mxu0 %v3096
    %3465 = vmatpush1.bf16.msra.mxu0 %v3095
    %3466 = vmatprep.subr.bf16.mxu0 %v3084
    %3467 = vmatpush1.bf16.msra.mxu0 %v3083
    %3468 = vmatprep.subr.bf16.mxu0 %v3072
    %3469 = vmatpush1.bf16.msra.mxu0 %v3071
    %3470 = vmatprep.subr.bf16.mxu0 %v3060
    %3471 = vmatpush1.bf16.msra.mxu0 %v3059
    %3472 = vmatprep.subr.bf16.mxu0 0
    %3473 = vmatpush2.bf16.msra.mxu0 0
    %3474 = vmatprep.subr.bf16.mxu0 0
    %3475 = vmatpush2.bf16.msra.mxu0 0
    %3476 = vmatprep.subr.bf16.mxu0 0
    %3477 = vmatpush2.bf16.msra.mxu0 0
    %3478 = vmatprep.subr.bf16.mxu0 0
    %3479 = vmatpush2.bf16.msra.mxu0 0
    %3480 = vmatprep.subr.bf16.mxu0 0
    %3481 = vmatpush2.bf16.msra.mxu0 0
    %3482 = vmatprep.subr.bf16.mxu0 0
    %3483 = vmatpush2.bf16.msra.mxu0 0
    %3484 = vmatprep.subr.bf16.mxu0 0
    %3485 = vmatpush2.bf16.msra.mxu0 0
    %3486 = vmatprep.subr.bf16.mxu0 0
    %3487 = vmatpush2.bf16.msra.mxu0 0
    %3488 = vmatprep.mubr.bf16.mxu0 0
    %3489 = vmatmul.mubr.bf16.gmra.mxu0 %v2598
    %v3490 = vpop.f32.mrf.mxu0
    %v3491 = vadd.f32 %v2744, %v3490
    %v3492 = vpop.f32.mrf.mxu0
    %v3493 = vadd.f32 %v2748, %v3492
    %v3494 = vpop.f32.mrf.mxu0
    %v3495 = vadd.f32 %v2744, %v3494
    %v3496 = vpop.f32.mrf.mxu0
    %v3497 = vadd.f32 %v2748, %v3496
    %3498 = vdwg.mxu0
    %3499 = vmatprep.subr.mxu0 0.0
    %3500 = vmatpush1.xpose.msra.mxu0 0.0
    %3501 = vmatprep.subr.mxu0 0.0
    %3502 = vmatpush1.xpose.msra.mxu0 0.0
    %3503 = vmatprep.subr.mxu0 0.0
    %3504 = vmatpush1.xpose.msra.mxu0 0.0
    %3505 = vmatprep.subr.mxu0 0.0
    %3506 = vmatpush1.xpose.msra.mxu0 0.0
    %3507 = vmatprep.subr.mxu0 0.0
    %3508 = vmatpush1.xpose.msra.mxu0 0.0
    %3509 = vmatprep.subr.mxu0 0.0
    %3510 = vmatpush1.xpose.msra.mxu0 0.0
    %3511 = vmatprep.subr.mxu0 0.0
    %3512 = vmatpush1.xpose.msra.mxu0 0.0
    %3513 = vmatprep.subr.mxu0 0.0
    %3514 = vmatpush1.xpose.msra.mxu0 0.0
    %3515 = vmatprep.subr.mxu0 0.0
    %3516 = vmatpush1.xpose.msra.mxu0 0.0
    %3517 = vmatprep.subr.mxu0 0.0
    %3518 = vmatpush1.xpose.msra.mxu0 0.0
    %3519 = vmatprep.subr.mxu0 0.0
    %3520 = vmatpush1.xpose.msra.mxu0 0.0
    %3521 = vmatprep.subr.mxu0 0.0
    %3522 = vmatpush1.xpose.msra.mxu0 0.0
    %3523 = vmatprep.subr.mxu0 0.0
    %3524 = vmatpush1.xpose.msra.mxu0 0.0
    %3525 = vmatprep.subr.mxu0 0.0
    %3526 = vmatpush1.xpose.msra.mxu0 0.0
    %3527 = vmatprep.subr.mxu0 0.0
    %3528 = vmatpush1.xpose.msra.mxu0 %v3366
    %3529 = vmatprep.subr.mxu0 0.0
    %3530 = vmatpush1.xpose.msra.mxu0 %v3362
    %3531 = vmatprep.subr.mxu0 0.0
    %3532 = vmatpush2.xpose.msra.mxu0 0.0
    %3533 = vmatprep.subr.mxu0 0.0
    %3534 = vmatpush2.xpose.msra.mxu0 0.0
    %3535 = vmatprep.subr.mxu0 0.0
    %3536 = vmatpush2.xpose.msra.mxu0 0.0
    %3537 = vmatprep.subr.mxu0 0.0
    %3538 = vmatpush2.xpose.msra.mxu0 0.0
    %3539 = vmatprep.subr.mxu0 0.0
    %3540 = vmatpush2.xpose.msra.mxu0 0.0
    %3541 = vmatprep.subr.mxu0 0.0
    %3542 = vmatpush2.xpose.msra.mxu0 0.0
    %3543 = vmatprep.subr.mxu0 0.0
    %3544 = vmatpush2.xpose.msra.mxu0 0.0
    %3545 = vmatprep.subr.mxu0 0.0
    %3546 = vmatpush2.xpose.msra.mxu0 0.0
    %3547 = vmatprep.subr.mxu0 0.0
    %3548 = vmatpush2.xpose.msra.mxu0 0.0
    %3549 = vmatprep.subr.mxu0 0.0
    %3550 = vmatpush2.xpose.msra.mxu0 0.0
    %3551 = vmatprep.subr.mxu0 0.0
    %3552 = vmatpush2.xpose.msra.mxu0 0.0
    %3553 = vmatprep.subr.mxu0 0.0
    %3554 = vmatpush2.xpose.msra.mxu0 0.0
    %3555 = vmatprep.subr.mxu0 0.0
    %3556 = vmatpush2.xpose.msra.mxu0 0.0
    %3557 = vmatprep.subr.mxu0 0.0
    %3558 = vmatpush2.xpose.msra.mxu0 0.0
    %3559 = vmatprep.subr.mxu0 0.0
    %3560 = vmatpush2.xpose.msra.mxu0 0.0
    %3561 = vmatprep.subr.mxu0 0.0
    %3562 = vmatpush2.xpose.msra.mxu0 0.0
    %3563 = vmatprep.mubr.f32.mxu0 0.0
    %3564 = vmatmul.mubr.f32.gmra.mxu0 %v3276
    %v3565 = vpop.f32.mrf.mxu0
    %v3566 = vadd.f32 0.0, %v3565
    %v3567 = vpop.f32.mrf.mxu0
    %3568 = vmatprep.mubr.f32.mxu0 0.0
    %3569 = vmatmul.mubr.f32.gmra.mxu0 %v3280
    %v3570 = vpop.f32.mrf.mxu0
    %v3571 = vadd.f32 0.0, %v3570
    %v3572 = vpop.f32.mrf.mxu0
    %3573 = vdwg.mxu0
    %3574 = vmatprep.subr.mxu0 0.0
    %3575 = vmatpush1.xpose.msra.mxu0 0.0
    %3576 = vmatprep.subr.mxu0 0.0
    %3577 = vmatpush1.xpose.msra.mxu0 0.0
    %3578 = vmatprep.subr.mxu0 0.0
    %3579 = vmatpush1.xpose.msra.mxu0 0.0
    %3580 = vmatprep.subr.mxu0 0.0
    %3581 = vmatpush1.xpose.msra.mxu0 0.0
    %3582 = vmatprep.subr.mxu0 0.0
    %3583 = vmatpush1.xpose.msra.mxu0 0.0
    %3584 = vmatprep.subr.mxu0 0.0
    %3585 = vmatpush1.xpose.msra.mxu0 0.0
    %3586 = vmatprep.subr.mxu0 0.0
    %3587 = vmatpush1.xpose.msra.mxu0 0.0
    %3588 = vmatprep.subr.mxu0 0.0
    %3589 = vmatpush1.xpose.msra.mxu0 0.0
    %3590 = vmatprep.subr.mxu0 0.0
    %3591 = vmatpush1.xpose.msra.mxu0 0.0
    %3592 = vmatprep.subr.mxu0 0.0
    %3593 = vmatpush1.xpose.msra.mxu0 0.0
    %3594 = vmatprep.subr.mxu0 0.0
    %3595 = vmatpush1.xpose.msra.mxu0 0.0
    %3596 = vmatprep.subr.mxu0 0.0
    %3597 = vmatpush1.xpose.msra.mxu0 0.0
    %3598 = vmatprep.subr.mxu0 0.0
    %3599 = vmatpush1.xpose.msra.mxu0 0.0
    %3600 = vmatprep.subr.mxu0 0.0
    %3601 = vmatpush1.xpose.msra.mxu0 0.0
    %3602 = vmatprep.subr.mxu0 0.0
    %3603 = vmatpush1.xpose.msra.mxu0 %v3368
    %3604 = vmatprep.subr.mxu0 0.0
    %3605 = vmatpush1.xpose.msra.mxu0 %v3364
    %3606 = vmatprep.subr.mxu0 0.0
    %3607 = vmatpush2.xpose.msra.mxu0 0.0
    %3608 = vmatprep.subr.mxu0 0.0
    %3609 = vmatpush2.xpose.msra.mxu0 0.0
    %3610 = vmatprep.subr.mxu0 0.0
    %3611 = vmatpush2.xpose.msra.mxu0 0.0
    %3612 = vmatprep.subr.mxu0 0.0
    %3613 = vmatpush2.xpose.msra.mxu0 0.0
    %3614 = vmatprep.subr.mxu0 0.0
    %3615 = vmatpush2.xpose.msra.mxu0 0.0
    %3616 = vmatprep.subr.mxu0 0.0
    %3617 = vmatpush2.xpose.msra.mxu0 0.0
    %3618 = vmatprep.subr.mxu0 0.0
    %3619 = vmatpush2.xpose.msra.mxu0 0.0
    %3620 = vmatprep.subr.mxu0 0.0
    %3621 = vmatpush2.xpose.msra.mxu0 0.0
    %3622 = vmatprep.subr.mxu0 0.0
    %3623 = vmatpush2.xpose.msra.mxu0 0.0
    %3624 = vmatprep.subr.mxu0 0.0
    %3625 = vmatpush2.xpose.msra.mxu0 0.0
    %3626 = vmatprep.subr.mxu0 0.0
    %3627 = vmatpush2.xpose.msra.mxu0 0.0
    %3628 = vmatprep.subr.mxu0 0.0
    %3629 = vmatpush2.xpose.msra.mxu0 0.0
    %3630 = vmatprep.subr.mxu0 0.0
    %3631 = vmatpush2.xpose.msra.mxu0 0.0
    %3632 = vmatprep.subr.mxu0 0.0
    %3633 = vmatpush2.xpose.msra.mxu0 0.0
    %3634 = vmatprep.subr.mxu0 0.0
    %3635 = vmatpush2.xpose.msra.mxu0 0.0
    %3636 = vmatprep.subr.mxu0 0.0
    %3637 = vmatpush2.xpose.msra.mxu0 0.0
    %3638 = vmatprep.mubr.f32.mxu0 0.0
    %3639 = vmatmul.mubr.f32.gmra.mxu0 %v3278
    %v3640 = vpop.f32.mrf.mxu0
    %v3641 = vadd.f32 0.0, %v3640
    %v3642 = vpop.f32.mrf.mxu0
    %3643 = vmatprep.mubr.f32.mxu0 0.0
    %3644 = vmatmul.mubr.f32.gmra.mxu0 %v3282
    %v3645 = vpop.f32.mrf.mxu0
    %v3646 = vadd.f32 0.0, %v3645
    %v3647 = vpop.f32.mrf.mxu0
    %3648 = vdwg.mxu0
    %3649 = vmatprep.subr.mxu0 0.0
    %3650 = vmatpush1.xpose.msra.mxu0 0.0
    %3651 = vmatprep.subr.mxu0 0.0
    %3652 = vmatpush1.xpose.msra.mxu0 0.0
    %3653 = vmatprep.subr.mxu0 0.0
    %3654 = vmatpush1.xpose.msra.mxu0 0.0
    %3655 = vmatprep.subr.mxu0 0.0
    %3656 = vmatpush1.xpose.msra.mxu0 0.0
    %3657 = vmatprep.subr.mxu0 0.0
    %3658 = vmatpush1.xpose.msra.mxu0 0.0
    %3659 = vmatprep.subr.mxu0 0.0
    %3660 = vmatpush1.xpose.msra.mxu0 0.0
    %3661 = vmatprep.subr.mxu0 0.0
    %3662 = vmatpush1.xpose.msra.mxu0 0.0
    %3663 = vmatprep.subr.mxu0 0.0
    %3664 = vmatpush1.xpose.msra.mxu0 0.0
    %3665 = vmatprep.subr.mxu0 0.0
    %3666 = vmatpush1.xpose.msra.mxu0 0.0
    %3667 = vmatprep.subr.mxu0 0.0
    %3668 = vmatpush1.xpose.msra.mxu0 0.0
    %3669 = vmatprep.subr.mxu0 0.0
    %3670 = vmatpush1.xpose.msra.mxu0 0.0
    %3671 = vmatprep.subr.mxu0 0.0
    %3672 = vmatpush1.xpose.msra.mxu0 0.0
    %3673 = vmatprep.subr.mxu0 0.0
    %3674 = vmatpush1.xpose.msra.mxu0 0.0
    %3675 = vmatprep.subr.mxu0 0.0
    %3676 = vmatpush1.xpose.msra.mxu0 0.0
    %3677 = vmatprep.subr.mxu0 0.0
    %3678 = vmatpush1.xpose.msra.mxu0 %v3409
    %3679 = vmatprep.subr.mxu0 0.0
    %3680 = vmatpush1.xpose.msra.mxu0 %v3405
    %3681 = vmatprep.subr.mxu0 0.0
    %3682 = vmatpush2.xpose.msra.mxu0 0.0
    %3683 = vmatprep.subr.mxu0 0.0
    %3684 = vmatpush2.xpose.msra.mxu0 0.0
    %3685 = vmatprep.subr.mxu0 0.0
    %3686 = vmatpush2.xpose.msra.mxu0 0.0
    %3687 = vmatprep.subr.mxu0 0.0
    %3688 = vmatpush2.xpose.msra.mxu0 0.0
    %3689 = vmatprep.subr.mxu0 0.0
    %3690 = vmatpush2.xpose.msra.mxu0 0.0
    %3691 = vmatprep.subr.mxu0 0.0
    %3692 = vmatpush2.xpose.msra.mxu0 0.0
    %3693 = vmatprep.subr.mxu0 0.0
    %3694 = vmatpush2.xpose.msra.mxu0 0.0
    %3695 = vmatprep.subr.mxu0 0.0
    %3696 = vmatpush2.xpose.msra.mxu0 0.0
    %3697 = vmatprep.subr.mxu0 0.0
    %3698 = vmatpush2.xpose.msra.mxu0 0.0
    %3699 = vmatprep.subr.mxu0 0.0
    %3700 = vmatpush2.xpose.msra.mxu0 0.0
    %3701 = vmatprep.subr.mxu0 0.0
    %3702 = vmatpush2.xpose.msra.mxu0 0.0
    %3703 = vmatprep.subr.mxu0 0.0
    %3704 = vmatpush2.xpose.msra.mxu0 0.0
    %3705 = vmatprep.subr.mxu0 0.0
    %3706 = vmatpush2.xpose.msra.mxu0 0.0
    %3707 = vmatprep.subr.mxu0 0.0
    %3708 = vmatpush2.xpose.msra.mxu0 0.0
    %3709 = vmatprep.subr.mxu0 0.0
    %3710 = vmatpush2.xpose.msra.mxu0 0.0
    %3711 = vmatprep.subr.mxu0 0.0
    %3712 = vmatpush2.xpose.msra.mxu0 0.0
    %3713 = vmatprep.mubr.f32.mxu0 0.0
    %3714 = vmatmul.mubr.f32.gmra.mxu0 %v3319
    %v3715 = vpop.f32.mrf.mxu0
    %v3716 = vadd.f32 0.0, %v3715
    %v3717 = vpop.f32.mrf.mxu0
    %3718 = vmatprep.mubr.f32.mxu0 0.0
    %3719 = vmatmul.mubr.f32.gmra.mxu0 %v3323
    %v3720 = vpop.f32.mrf.mxu0
    %v3721 = vadd.f32 0.0, %v3720
    %v3722 = vpop.f32.mrf.mxu0
    %3723 = vdwg.mxu0
    %3724 = vmatprep.subr.mxu0 0.0
    %3725 = vmatpush1.xpose.msra.mxu0 0.0
    %3726 = vmatprep.subr.mxu0 0.0
    %3727 = vmatpush1.xpose.msra.mxu0 0.0
    %3728 = vmatprep.subr.mxu0 0.0
    %3729 = vmatpush1.xpose.msra.mxu0 0.0
    %3730 = vmatprep.subr.mxu0 0.0
    %3731 = vmatpush1.xpose.msra.mxu0 0.0
    %3732 = vmatprep.subr.mxu0 0.0
    %3733 = vmatpush1.xpose.msra.mxu0 0.0
    %3734 = vmatprep.subr.mxu0 0.0
    %3735 = vmatpush1.xpose.msra.mxu0 0.0
    %3736 = vmatprep.subr.mxu0 0.0
    %3737 = vmatpush1.xpose.msra.mxu0 0.0
    %3738 = vmatprep.subr.mxu0 0.0
    %3739 = vmatpush1.xpose.msra.mxu0 0.0
    %3740 = vmatprep.subr.mxu0 0.0
    %3741 = vmatpush1.xpose.msra.mxu0 0.0
    %3742 = vmatprep.subr.mxu0 0.0
    %3743 = vmatpush1.xpose.msra.mxu0 0.0
    %3744 = vmatprep.subr.mxu0 0.0
    %3745 = vmatpush1.xpose.msra.mxu0 0.0
    %3746 = vmatprep.subr.mxu0 0.0
    %3747 = vmatpush1.xpose.msra.mxu0 0.0
    %3748 = vmatprep.subr.mxu0 0.0
    %3749 = vmatpush1.xpose.msra.mxu0 0.0
    %3750 = vmatprep.subr.mxu0 0.0
    %3751 = vmatpush1.xpose.msra.mxu0 0.0
    %3752 = vmatprep.subr.mxu0 0.0
    %3753 = vmatpush1.xpose.msra.mxu0 %v3411
    %3754 = vmatprep.subr.mxu0 0.0
    %3755 = vmatpush1.xpose.msra.mxu0 %v3407
    %3756 = vmatprep.subr.mxu0 0.0
    %3757 = vmatpush2.xpose.msra.mxu0 0.0
    %3758 = vmatprep.subr.mxu0 0.0
    %3759 = vmatpush2.xpose.msra.mxu0 0.0
    %3760 = vmatprep.subr.mxu0 0.0
    %3761 = vmatpush2.xpose.msra.mxu0 0.0
    %3762 = vmatprep.subr.mxu0 0.0
    %3763 = vmatpush2.xpose.msra.mxu0 0.0
    %3764 = vmatprep.subr.mxu0 0.0
    %3765 = vmatpush2.xpose.msra.mxu0 0.0
    %3766 = vmatprep.subr.mxu0 0.0
    %3767 = vmatpush2.xpose.msra.mxu0 0.0
    %3768 = vmatprep.subr.mxu0 0.0
    %3769 = vmatpush2.xpose.msra.mxu0 0.0
    %3770 = vmatprep.subr.mxu0 0.0
    %3771 = vmatpush2.xpose.msra.mxu0 0.0
    %3772 = vmatprep.subr.mxu0 0.0
    %3773 = vmatpush2.xpose.msra.mxu0 0.0
    %3774 = vmatprep.subr.mxu0 0.0
    %3775 = vmatpush2.xpose.msra.mxu0 0.0
    %3776 = vmatprep.subr.mxu0 0.0
    %3777 = vmatpush2.xpose.msra.mxu0 0.0
    %3778 = vmatprep.subr.mxu0 0.0
    %3779 = vmatpush2.xpose.msra.mxu0 0.0
    %3780 = vmatprep.subr.mxu0 0.0
    %3781 = vmatpush2.xpose.msra.mxu0 0.0
    %3782 = vmatprep.subr.mxu0 0.0
    %3783 = vmatpush2.xpose.msra.mxu0 0.0
    %3784 = vmatprep.subr.mxu0 0.0
    %3785 = vmatpush2.xpose.msra.mxu0 0.0
    %3786 = vmatprep.subr.mxu0 0.0
    %3787 = vmatpush2.xpose.msra.mxu0 0.0
    %3788 = vmatprep.mubr.f32.mxu0 0.0
    %3789 = vmatmul.mubr.f32.gmra.mxu0 %v3321
    %v3790 = vpop.f32.mrf.mxu0
    %v3791 = vadd.f32 0.0, %v3790
    %v3792 = vpop.f32.mrf.mxu0
    %3793 = vmatprep.mubr.f32.mxu0 0.0
    %3794 = vmatmul.mubr.f32.gmra.mxu0 %v3325
    %v3795 = vpop.f32.mrf.mxu0
    %v3796 = vadd.f32 0.0, %v3795
    %v3797 = vpop.f32.mrf.mxu0
    %3798 = vdwg.mxu0
    %v3799 = vmul.f32 %v3566, 0.35355338
    %v3800 = vmul.f32 %v3571, 0.35355338
    %v3801 = vmul.f32 %v3641, 0.35355338
    %v3802 = vmul.f32 %v3646, 0.35355338
    %v3803 = vmul.f32 %v3716, 0.35355338
    %v3804 = vmul.f32 %v3721, 0.35355338
    %v3805 = vmul.f32 %v3791, 0.35355338
    %v3806 = vmul.f32 %v3796, 0.35355338
    %v3807 = vadd.f32 %v3799, %v237
    %v3808 = vadd.f32 %v3800, %v238
    %v3809 = vadd.f32 %v3801, %v237
    %v3810 = vadd.f32 %v3802, %v238
    %v3811 = vadd.f32 %v3803, %v237
    %v3812 = vadd.f32 %v3804, %v238
    %v3813 = vadd.f32 %v3805, %v237
    %v3814 = vadd.f32 %v3806, %v238
    %v3815 = vsel %vm1500, %v3807, -inf
    %3816 = vmax.xlane.f32.xlu0 %v3815
    %v3817 = vpop.xlane.xlu0 %3816
    %v3818 = vsel %vm1500, %v3808, -inf
    %3819 = vmax.xlane.f32.xlu0 %v3818
    %v3820 = vpop.xlane.xlu0 %3819
    %v3821 = vsel %vm1500, %v3809, -inf
    %3822 = vmax.xlane.f32.xlu0 %v3821
    %v3823 = vpop.xlane.xlu0 %3822
    %v3824 = vsel %vm1500, %v3810, -inf
    %3825 = vmax.xlane.f32.xlu0 %v3824
    %v3826 = vpop.xlane.xlu0 %3825
    %v3827 = vsel %vm1500, %v3811, -inf
    %3828 = vmax.xlane.f32.xlu0 %v3827
    %v3829 = vpop.xlane.xlu0 %3828
    %v3830 = vsel %vm1500, %v3812, -inf
    %3831 = vmax.xlane.f32.xlu0 %v3830
    %v3832 = vpop.xlane.xlu0 %3831
    %v3833 = vsel %vm1500, %v3813, -inf
    %3834 = vmax.xlane.f32.xlu0 %v3833
    %v3835 = vpop.xlane.xlu0 %3834
    %v3836 = vsel %vm1500, %v3814, -inf
    %3837 = vmax.xlane.f32.xlu0 %v3836
    %v3838 = vpop.xlane.xlu0 %3837
    %v3839 = vsub.f32 %v3807, %v3817
    %v3840 = vsub.f32 %v3808, %v3820
    %v3841 = vsub.f32 %v3809, %v3823
    %v3842 = vsub.f32 %v3810, %v3826
    %v3843 = vsub.f32 %v3811, %v3829
    %v3844 = vsub.f32 %v3812, %v3832
    %v3845 = vsub.f32 %v3813, %v3835
    %v3846 = vsub.f32 %v3814, %v3838
    %v3847 = vmul.f32 %v3839, 1.442695
    %v3848 = vpow.pop %v3847
    %v3849 = vmul.f32 %v3840, 1.442695
    %v3850 = vpow.pop %v3849
    %v3851 = vmul.f32 %v3841, 1.442695
    %v3852 = vpow.pop %v3851
    %v3853 = vmul.f32 %v3842, 1.442695
    %v3854 = vpow.pop %v3853
    %v3855 = vmul.f32 %v3843, 1.442695
    %v3856 = vpow.pop %v3855
    %v3857 = vmul.f32 %v3844, 1.442695
    %v3858 = vpow.pop %v3857
    %v3859 = vmul.f32 %v3845, 1.442695
    %v3860 = vpow.pop %v3859
    %v3861 = vmul.f32 %v3846, 1.442695
    %v3862 = vpow.pop %v3861
    %v3863 = vsel %vm1500, %v3848, 0.0
    %3864 = vadd.xlane.f32.xlu0 %v3863
    %v3865 = vpop.xlane.xlu0 %3864
    %v3866 = vsel %vm1500, %v3850, 0.0
    %3867 = vadd.xlane.f32.xlu0 %v3866
    %v3868 = vpop.xlane.xlu0 %3867
    %v3869 = vsel %vm1500, %v3852, 0.0
    %3870 = vadd.xlane.f32.xlu0 %v3869
    %v3871 = vpop.xlane.xlu0 %3870
    %v3872 = vsel %vm1500, %v3854, 0.0
    %3873 = vadd.xlane.f32.xlu0 %v3872
    %v3874 = vpop.xlane.xlu0 %3873
    %v3875 = vsel %vm1500, %v3856, 0.0
    %3876 = vadd.xlane.f32.xlu0 %v3875
    %v3877 = vpop.xlane.xlu0 %3876
    %v3878 = vsel %vm1500, %v3858, 0.0
    %3879 = vadd.xlane.f32.xlu0 %v3878
    %v3880 = vpop.xlane.xlu0 %3879
    %v3881 = vsel %vm1500, %v3860, 0.0
    %3882 = vadd.xlane.f32.xlu0 %v3881
    %v3883 = vpop.xlane.xlu0 %3882
    %v3884 = vsel %vm1500, %v3862, 0.0
    %3885 = vadd.xlane.f32.xlu0 %v3884
    %v3886 = vpop.xlane.xlu0 %3885
    %v3887 = vrcp.pop %v3865
    %v3888 = vrcp.pop %v3868
    %v3889 = vrcp.pop %v3871
    %v3890 = vrcp.pop %v3874
    %v3891 = vrcp.pop %v3877
    %v3892 = vrcp.pop %v3880
    %v3893 = vrcp.pop %v3883
    %v3894 = vrcp.pop %v3886
    %v3895 = vmul.f32 %v3848, %v3887
    %v3896 = vmul.f32 %v3850, %v3888
    %v3897 = vmul.f32 %v3852, %v3889
    %v3898 = vmul.f32 %v3854, %v3890
    %v3899 = vmul.f32 %v3856, %v3891
    %v3900 = vmul.f32 %v3858, %v3892
    %v3901 = vmul.f32 %v3860, %v3893
    %v3902 = vmul.f32 %v3862, %v3894
    %v3904 = vsel %vm1500, %v3895, 0
    %v3907 = vsel %vm1500, %v3896, 0
    %3909 = vmatprep.subr.mxu0 0.0
    %3910 = vmatpush1.msra.mxu0 0.0
    %3911 = vmatprep.subr.mxu0 0.0
    %3912 = vmatpush1.msra.mxu0 0.0
    %3913 = vmatprep.subr.mxu0 0.0
    %3914 = vmatpush1.msra.mxu0 0.0
    %3915 = vmatprep.subr.mxu0 0.0
    %3916 = vmatpush1.msra.mxu0 0.0
    %3917 = vmatprep.subr.mxu0 0.0
    %3918 = vmatpush1.msra.mxu0 0.0
    %3919 = vmatprep.subr.mxu0 0.0
    %3920 = vmatpush1.msra.mxu0 0.0
    %3921 = vmatprep.subr.mxu0 0.0
    %3922 = vmatpush1.msra.mxu0 0.0
    %3923 = vmatprep.subr.mxu0 0.0
    %3924 = vmatpush1.msra.mxu0 0.0
    %3925 = vmatprep.subr.mxu0 0.0
    %3926 = vmatpush1.msra.mxu0 0.0
    %3927 = vmatprep.subr.mxu0 0.0
    %3928 = vmatpush1.msra.mxu0 0.0
    %3929 = vmatprep.subr.mxu0 0.0
    %3930 = vmatpush1.msra.mxu0 0.0
    %3931 = vmatprep.subr.mxu0 0.0
    %3932 = vmatpush1.msra.mxu0 0.0
    %3933 = vmatprep.subr.mxu0 0.0
    %3934 = vmatpush1.msra.mxu0 0.0
    %3935 = vmatprep.subr.mxu0 0.0
    %3936 = vmatpush1.msra.mxu0 0.0
    %3937 = vmatprep.subr.mxu0 0.0
    %3938 = vmatpush1.msra.mxu0 %v3452
    %3939 = vmatprep.subr.mxu0 0.0
    %3940 = vmatpush1.msra.mxu0 %v3448
    %3941 = vmatprep.subr.mxu0 0.0
    %3942 = vmatpush2.msra.mxu0 0.0
    %3943 = vmatprep.subr.mxu0 0.0
    %3944 = vmatpush2.msra.mxu0 0.0
    %3945 = vmatprep.subr.mxu0 0.0
    %3946 = vmatpush2.msra.mxu0 0.0
    %3947 = vmatprep.subr.mxu0 0.0
    %3948 = vmatpush2.msra.mxu0 0.0
    %3949 = vmatprep.subr.mxu0 0.0
    %3950 = vmatpush2.msra.mxu0 0.0
    %3951 = vmatprep.subr.mxu0 0.0
    %3952 = vmatpush2.msra.mxu0 0.0
    %3953 = vmatprep.subr.mxu0 0.0
    %3954 = vmatpush2.msra.mxu0 0.0
    %3955 = vmatprep.subr.mxu0 0.0
    %3956 = vmatpush2.msra.mxu0 0.0
    %3957 = vmatprep.subr.mxu0 0.0
    %3958 = vmatpush2.msra.mxu0 0.0
    %3959 = vmatprep.subr.mxu0 0.0
    %3960 = vmatpush2.msra.mxu0 0.0
    %3961 = vmatprep.subr.mxu0 0.0
    %3962 = vmatpush2.msra.mxu0 0.0
    %3963 = vmatprep.subr.mxu0 0.0
    %3964 = vmatpush2.msra.mxu0 0.0
    %3965 = vmatprep.subr.mxu0 0.0
    %3966 = vmatpush2.msra.mxu0 0.0
    %3967 = vmatprep.subr.mxu0 0.0
    %3968 = vmatpush2.msra.mxu0 0.0
    %3969 = vmatprep.subr.mxu0 0.0
    %3970 = vmatpush2.msra.mxu0 0.0
    %3971 = vmatprep.subr.mxu0 0.0
    %3972 = vmatpush2.msra.mxu0 0.0
    %3973 = vmatprep.mubr.f32.mxu0 0.0
    %3974 = vmatmul.mubr.f32.gmra.mxu0 %v3904
    %v3975 = vpop.f32.mrf.mxu0
    %v3976 = vadd.f32 0.0, %v3975
    %v3977 = vpop.f32.mrf.mxu0
    %3978 = vmatprep.mubr.f32.mxu0 0.0
    %3979 = vmatmul.mubr.f32.gmra.mxu0 %v3907
    %v3980 = vpop.f32.mrf.mxu0
    %v3981 = vadd.f32 0.0, %v3980
    %v3982 = vpop.f32.mrf.mxu0
    %3983 = vdwg.mxu0
    %v3985 = vsel %vm1500, %v3897, 0
    %v3988 = vsel %vm1500, %v3898, 0
    %3990 = vmatprep.subr.mxu0 0.0
    %3991 = vmatpush1.msra.mxu0 0.0
    %3992 = vmatprep.subr.mxu0 0.0
    %3993 = vmatpush1.msra.mxu0 0.0
    %3994 = vmatprep.subr.mxu0 0.0
    %3995 = vmatpush1.msra.mxu0 0.0
    %3996 = vmatprep.subr.mxu0 0.0
    %3997 = vmatpush1.msra.mxu0 0.0
    %3998 = vmatprep.subr.mxu0 0.0
    %3999 = vmatpush1.msra.mxu0 0.0
    %4000 = vmatprep.subr.mxu0 0.0
    %4001 = vmatpush1.msra.mxu0 0.0
    %4002 = vmatprep.subr.mxu0 0.0
    %4003 = vmatpush1.msra.mxu0 0.0
    %4004 = vmatprep.subr.mxu0 0.0
    %4005 = vmatpush1.msra.mxu0 0.0
    %4006 = vmatprep.subr.mxu0 0.0
    %4007 = vmatpush1.msra.mxu0 0.0
    %4008 = vmatprep.subr.mxu0 0.0
    %4009 = vmatpush1.msra.mxu0 0.0
    %4010 = vmatprep.subr.mxu0 0.0
    %4011 = vmatpush1.msra.mxu0 0.0
    %4012 = vmatprep.subr.mxu0 0.0
    %4013 = vmatpush1.msra.mxu0 0.0
    %4014 = vmatprep.subr.mxu0 0.0
    %4015 = vmatpush1.msra.mxu0 0.0
    %4016 = vmatprep.subr.mxu0 0.0
    %4017 = vmatpush1.msra.mxu0 0.0
    %4018 = vmatprep.subr.mxu0 0.0
    %4019 = vmatpush1.msra.mxu0 %v3454
    %4020 = vmatprep.subr.mxu0 0.0
    %4021 = vmatpush1.msra.mxu0 %v3450
    %4022 = vmatprep.subr.mxu0 0.0
    %4023 = vmatpush2.msra.mxu0 0.0
    %4024 = vmatprep.subr.mxu0 0.0
    %4025 = vmatpush2.msra.mxu0 0.0
    %4026 = vmatprep.subr.mxu0 0.0
    %4027 = vmatpush2.msra.mxu0 0.0
    %4028 = vmatprep.subr.mxu0 0.0
    %4029 = vmatpush2.msra.mxu0 0.0
    %4030 = vmatprep.subr.mxu0 0.0
    %4031 = vmatpush2.msra.mxu0 0.0
    %4032 = vmatprep.subr.mxu0 0.0
    %4033 = vmatpush2.msra.mxu0 0.0
    %4034 = vmatprep.subr.mxu0 0.0
    %4035 = vmatpush2.msra.mxu0 0.0
    %4036 = vmatprep.subr.mxu0 0.0
    %4037 = vmatpush2.msra.mxu0 0.0
    %4038 = vmatprep.subr.mxu0 0.0
    %4039 = vmatpush2.msra.mxu0 0.0
    %4040 = vmatprep.subr.mxu0 0.0
    %4041 = vmatpush2.msra.mxu0 0.0
    %4042 = vmatprep.subr.mxu0 0.0
    %4043 = vmatpush2.msra.mxu0 0.0
    %4044 = vmatprep.subr.mxu0 0.0
    %4045 = vmatpush2.msra.mxu0 0.0
    %4046 = vmatprep.subr.mxu0 0.0
    %4047 = vmatpush2.msra.mxu0 0.0
    %4048 = vmatprep.subr.mxu0 0.0
    %4049 = vmatpush2.msra.mxu0 0.0
    %4050 = vmatprep.subr.mxu0 0.0
    %4051 = vmatpush2.msra.mxu0 0.0
    %4052 = vmatprep.subr.mxu0 0.0
    %4053 = vmatpush2.msra.mxu0 0.0
    %4054 = vmatprep.mubr.f32.mxu0 0.0
    %4055 = vmatmul.mubr.f32.gmra.mxu0 %v3985
    %v4056 = vpop.f32.mrf.mxu0
    %v4057 = vadd.f32 0.0, %v4056
    %v4058 = vpop.f32.mrf.mxu0
    %4059 = vmatprep.mubr.f32.mxu0 0.0
    %4060 = vmatmul.mubr.f32.gmra.mxu0 %v3988
    %v4061 = vpop.f32.mrf.mxu0
    %v4062 = vadd.f32 0.0, %v4061
    %v4063 = vpop.f32.mrf.mxu0
    %4064 = vdwg.mxu0
    %v4066 = vsel %vm1500, %v3899, 0
    %v4069 = vsel %vm1500, %v3900, 0
    %4071 = vmatprep.subr.mxu0 0.0
    %4072 = vmatpush1.msra.mxu0 0.0
    %4073 = vmatprep.subr.mxu0 0.0
    %4074 = vmatpush1.msra.mxu0 0.0
    %4075 = vmatprep.subr.mxu0 0.0
    %4076 = vmatpush1.msra.mxu0 0.0
    %4077 = vmatprep.subr.mxu0 0.0
    %4078 = vmatpush1.msra.mxu0 0.0
    %4079 = vmatprep.subr.mxu0 0.0
    %4080 = vmatpush1.msra.mxu0 0.0
    %4081 = vmatprep.subr.mxu0 0.0
    %4082 = vmatpush1.msra.mxu0 0.0
    %4083 = vmatprep.subr.mxu0 0.0
    %4084 = vmatpush1.msra.mxu0 0.0
    %4085 = vmatprep.subr.mxu0 0.0
    %4086 = vmatpush1.msra.mxu0 0.0
    %4087 = vmatprep.subr.mxu0 0.0
    %4088 = vmatpush1.msra.mxu0 0.0
    %4089 = vmatprep.subr.mxu0 0.0
    %4090 = vmatpush1.msra.mxu0 0.0
    %4091 = vmatprep.subr.mxu0 0.0
    %4092 = vmatpush1.msra.mxu0 0.0
    %4093 = vmatprep.subr.mxu0 0.0
    %4094 = vmatpush1.msra.mxu0 0.0
    %4095 = vmatprep.subr.mxu0 0.0
    %4096 = vmatpush1.msra.mxu0 0.0
    %4097 = vmatprep.subr.mxu0 0.0
    %4098 = vmatpush1.msra.mxu0 0.0
    %4099 = vmatprep.subr.mxu0 0.0
    %4100 = vmatpush1.msra.mxu0 %v3495
    %4101 = vmatprep.subr.mxu0 0.0
    %4102 = vmatpush1.msra.mxu0 %v3491
    %4103 = vmatprep.subr.mxu0 0.0
    %4104 = vmatpush2.msra.mxu0 0.0
    %4105 = vmatprep.subr.mxu0 0.0
    %4106 = vmatpush2.msra.mxu0 0.0
    %4107 = vmatprep.subr.mxu0 0.0
    %4108 = vmatpush2.msra.mxu0 0.0
    %4109 = vmatprep.subr.mxu0 0.0
    %4110 = vmatpush2.msra.mxu0 0.0
    %4111 = vmatprep.subr.mxu0 0.0
    %4112 = vmatpush2.msra.mxu0 0.0
    %4113 = vmatprep.subr.mxu0 0.0
    %4114 = vmatpush2.msra.mxu0 0.0
    %4115 = vmatprep.subr.mxu0 0.0
    %4116 = vmatpush2.msra.mxu0 0.0
    %4117 = vmatprep.subr.mxu0 0.0
    %4118 = vmatpush2.msra.mxu0 0.0
    %4119 = vmatprep.subr.mxu0 0.0
    %4120 = vmatpush2.msra.mxu0 0.0
    %4121 = vmatprep.subr.mxu0 0.0
    %4122 = vmatpush2.msra.mxu0 0.0
    %4123 = vmatprep.subr.mxu0 0.0
    %4124 = vmatpush2.msra.mxu0 0.0
    %4125 = vmatprep.subr.mxu0 0.0
    %4126 = vmatpush2.msra.mxu0 0.0
    %4127 = vmatprep.subr.mxu0 0.0
    %4128 = vmatpush2.msra.mxu0 0.0
    %4129 = vmatprep.subr.mxu0 0.0
    %4130 = vmatpush2.msra.mxu0 0.0
    %4131 = vmatprep.subr.mxu0 0.0
    %4132 = vmatpush2.msra.mxu0 0.0
    %4133 = vmatprep.subr.mxu0 0.0
    %4134 = vmatpush2.msra.mxu0 0.0
    %4135 = vmatprep.mubr.f32.mxu0 0.0
    %4136 = vmatmul.mubr.f32.gmra.mxu0 %v4066
    %v4137 = vpop.f32.mrf.mxu0
    %v4138 = vadd.f32 0.0, %v4137
    %v4139 = vpop.f32.mrf.mxu0
    %4140 = vmatprep.mubr.f32.mxu0 0.0
    %4141 = vmatmul.mubr.f32.gmra.mxu0 %v4069
    %v4142 = vpop.f32.mrf.mxu0
    %v4143 = vadd.f32 0.0, %v4142
    %v4144 = vpop.f32.mrf.mxu0
    %4145 = vdwg.mxu0
    %v4147 = vsel %vm1500, %v3901, 0
    %v4150 = vsel %vm1500, %v3902, 0
    %4152 = vmatprep.subr.mxu0 0.0
    %4153 = vmatpush1.msra.mxu0 0.0
    %4154 = vmatprep.subr.mxu0 0.0
    %4155 = vmatpush1.msra.mxu0 0.0
    %4156 = vmatprep.subr.mxu0 0.0
    %4157 = vmatpush1.msra.mxu0 0.0
    %4158 = vmatprep.subr.mxu0 0.0
    %4159 = vmatpush1.msra.mxu0 0.0
    %4160 = vmatprep.subr.mxu0 0.0
    %4161 = vmatpush1.msra.mxu0 0.0
    %4162 = vmatprep.subr.mxu0 0.0
    %4163 = vmatpush1.msra.mxu0 0.0
    %4164 = vmatprep.subr.mxu0 0.0
    %4165 = vmatpush1.msra.mxu0 0.0
    %4166 = vmatprep.subr.mxu0 0.0
    %4167 = vmatpush1.msra.mxu0 0.0
    %4168 = vmatprep.subr.mxu0 0.0
    %4169 = vmatpush1.msra.mxu0 0.0
    %4170 = vmatprep.subr.mxu0 0.0
    %4171 = vmatpush1.msra.mxu0 0.0
    %4172 = vmatprep.subr.mxu0 0.0
    %4173 = vmatpush1.msra.mxu0 0.0
    %4174 = vmatprep.subr.mxu0 0.0
    %4175 = vmatpush1.msra.mxu0 0.0
    %4176 = vmatprep.subr.mxu0 0.0
    %4177 = vmatpush1.msra.mxu0 0.0
    %4178 = vmatprep.subr.mxu0 0.0
    %4179 = vmatpush1.msra.mxu0 0.0
    %4180 = vmatprep.subr.mxu0 0.0
    %4181 = vmatpush1.msra.mxu0 %v3497
    %4182 = vmatprep.subr.mxu0 0.0
    %4183 = vmatpush1.msra.mxu0 %v3493
    %4184 = vmatprep.subr.mxu0 0.0
    %4185 = vmatpush2.msra.mxu0 0.0
    %4186 = vmatprep.subr.mxu0 0.0
    %4187 = vmatpush2.msra.mxu0 0.0
    %4188 = vmatprep.subr.mxu0 0.0
    %4189 = vmatpush2.msra.mxu0 0.0
    %4190 = vmatprep.subr.mxu0 0.0
    %4191 = vmatpush2.msra.mxu0 0.0
    %4192 = vmatprep.subr.mxu0 0.0
    %4193 = vmatpush2.msra.mxu0 0.0
    %4194 = vmatprep.subr.mxu0 0.0
    %4195 = vmatpush2.msra.mxu0 0.0
    %4196 = vmatprep.subr.mxu0 0.0
    %4197 = vmatpush2.msra.mxu0 0.0
    %4198 = vmatprep.subr.mxu0 0.0
    %4199 = vmatpush2.msra.mxu0 0.0
    %4200 = vmatprep.subr.mxu0 0.0
    %4201 = vmatpush2.msra.mxu0 0.0
    %4202 = vmatprep.subr.mxu0 0.0
    %4203 = vmatpush2.msra.mxu0 0.0
    %4204 = vmatprep.subr.mxu0 0.0
    %4205 = vmatpush2.msra.mxu0 0.0
    %4206 = vmatprep.subr.mxu0 0.0
    %4207 = vmatpush2.msra.mxu0 0.0
    %4208 = vmatprep.subr.mxu0 0.0
    %4209 = vmatpush2.msra.mxu0 0.0
    %4210 = vmatprep.subr.mxu0 0.0
    %4211 = vmatpush2.msra.mxu0 0.0
    %4212 = vmatprep.subr.mxu0 0.0
    %4213 = vmatpush2.msra.mxu0 0.0
    %4214 = vmatprep.subr.mxu0 0.0
    %4215 = vmatpush2.msra.mxu0 0.0
    %4216 = vmatprep.mubr.f32.mxu0 0.0
    %4217 = vmatmul.mubr.f32.gmra.mxu0 %v4147
    %v4218 = vpop.f32.mrf.mxu0
    %v4219 = vadd.f32 0.0, %v4218
    %v4220 = vpop.f32.mrf.mxu0
    %4221 = vmatprep.mubr.f32.mxu0 0.0
    %4222 = vmatmul.mubr.f32.gmra.mxu0 %v4150
    %v4223 = vpop.f32.mrf.mxu0
    %v4224 = vadd.f32 0.0, %v4223
    %v4225 = vpop.f32.mrf.mxu0
    %4226 = vdwg.mxu0
    %v4227 = vpack.c.bf16 %v3981, %v3976
    %v4228 = vpack.c.bf16 %v4062, %v4057
    %v4229 = vpack.c.bf16 %v4143, %v4138
    %v4230 = vpack.c.bf16 %v4224, %v4219
    %s4231 = scalar_lea.vmem %s6, 256
    %v4232 = vld [vmem:[%s4231] sm:$0xf]
    %v4233 = vld [vmem:[%s4231 + $0x4] sm:$0xf]
    %v4234 = vld [vmem:[%s4231 + $0x8] sm:$0xf]
    %v4235 = vld [vmem:[%s4231 + $0xc] sm:$0xf]
    %v4236 = vld [vmem:[%s4231 + $0x10] sm:$0xf]
    %v4237 = vld [vmem:[%s4231 + $0x14] sm:$0xf]
    %v4238 = vld [vmem:[%s4231 + $0x18] sm:$0xf]
    %v4239 = vld [vmem:[%s4231 + $0x1c] sm:$0xf]
    %v4240 = vld [vmem:[%s4231 + $0x20] sm:$0xf]
    %v4241 = vld [vmem:[%s4231 + $0x24] sm:$0xf]
    %v4242 = vld [vmem:[%s4231 + $0x28] sm:$0xf]
    %v4243 = vld [vmem:[%s4231 + $0x2c] sm:$0xf]
    %v4244 = vld [vmem:[%s4231 + $0x30] sm:$0xf]
    %v4245 = vld [vmem:[%s4231 + $0x34] sm:$0xf]
    %v4246 = vld [vmem:[%s4231 + $0x38] sm:$0xf]
    %v4247 = vld [vmem:[%s4231 + $0x3c] sm:$0xf]
    %v4248 = vld [vmem:[%s4231 + $0x40] sm:$0xf]
    %v4249 = vld [vmem:[%s4231 + $0x44] sm:$0xf]
    %v4250 = vld [vmem:[%s4231 + $0x48] sm:$0xf]
    %v4251 = vld [vmem:[%s4231 + $0x4c] sm:$0xf]
    %v4252 = vld [vmem:[%s4231 + $0x50] sm:$0xf]
    %v4253 = vld [vmem:[%s4231 + $0x54] sm:$0xf]
    %v4254 = vld [vmem:[%s4231 + $0x58] sm:$0xf]
    %v4255 = vld [vmem:[%s4231 + $0x5c] sm:$0xf]
    %v4256 = vld [vmem:[%s4231 + $0x60] sm:$0xf]
    %v4257 = vld [vmem:[%s4231 + $0x64] sm:$0xf]
    %v4258 = vld [vmem:[%s4231 + $0x68] sm:$0xf]
    %v4259 = vld [vmem:[%s4231 + $0x6c] sm:$0xf]
    %v4260 = vld [vmem:[%s4231 + $0x70] sm:$0xf]
    %v4261 = vld [vmem:[%s4231 + $0x74] sm:$0xf]
    %v4262 = vld [vmem:[%s4231 + $0x78] sm:$0xf]
    %v4263 = vld [vmem:[%s4231 + $0x7c] sm:$0xf]
    %v4264 = vld [vmem:[%s4231 + $0x80] sm:$0xf]
    %v4265 = vld [vmem:[%s4231 + $0x84] sm:$0xf]
    %v4266 = vld [vmem:[%s4231 + $0x88] sm:$0xf]
    %v4267 = vld [vmem:[%s4231 + $0x8c] sm:$0xf]
    %v4268 = vld [vmem:[%s4231 + $0x90] sm:$0xf]
    %v4269 = vld [vmem:[%s4231 + $0x94] sm:$0xf]
    %v4270 = vld [vmem:[%s4231 + $0x98] sm:$0xf]
    %v4271 = vld [vmem:[%s4231 + $0x9c] sm:$0xf]
    %v4272 = vld [vmem:[%s4231 + $0xa0] sm:$0xf]
    %v4273 = vld [vmem:[%s4231 + $0xa4] sm:$0xf]
    %v4274 = vld [vmem:[%s4231 + $0xa8] sm:$0xf]
    %v4275 = vld [vmem:[%s4231 + $0xac] sm:$0xf]
    %v4276 = vld [vmem:[%s4231 + $0xb0] sm:$0xf]
    %v4277 = vld [vmem:[%s4231 + $0xb4] sm:$0xf]
    %v4278 = vld [vmem:[%s4231 + $0xb8] sm:$0xf]
    %v4279 = vld [vmem:[%s4231 + $0xbc] sm:$0xf]
    %v4280 = vld [vmem:[%s4231 + $0xc0] sm:$0xf]
    %v4281 = vld [vmem:[%s4231 + $0xc4] sm:$0xf]
    %v4282 = vld [vmem:[%s4231 + $0xc8] sm:$0xf]
    %v4283 = vld [vmem:[%s4231 + $0xcc] sm:$0xf]
    %v4284 = vld [vmem:[%s4231 + $0xd0] sm:$0xf]
    %v4285 = vld [vmem:[%s4231 + $0xd4] sm:$0xf]
    %v4286 = vld [vmem:[%s4231 + $0xd8] sm:$0xf]
    %v4287 = vld [vmem:[%s4231 + $0xdc] sm:$0xf]
    %v4288 = vld [vmem:[%s4231 + $0xe0] sm:$0xf]
    %v4289 = vld [vmem:[%s4231 + $0xe4] sm:$0xf]
    %v4290 = vld [vmem:[%s4231 + $0xe8] sm:$0xf]
    %v4291 = vld [vmem:[%s4231 + $0xec] sm:$0xf]
    %v4292 = vld [vmem:[%s4231 + $0xf0] sm:$0xf]
    %v4293 = vld [vmem:[%s4231 + $0xf4] sm:$0xf]
    %v4294 = vld [vmem:[%s4231 + $0xf8] sm:$0xf]
    %v4295 = vld [vmem:[%s4231 + $0xfc] sm:$0xf]
    %s4296 = scalar_lea.vmem [#allocation7], 1
    %v4297 = vld [vmem:[%s4296] sm:$0x1]
    %v4299 = vlaneseq
    %v4300 = vshrl.u32 %v4299, 7
    %v4301 = vsub.s32 0, %v4300
    %v4302 = vrot.slane %v4297, %v4301
    %v4368 = vunpack.c.l.b16 %v4232
    %v4369 = vunpack.c.l.b16 %v4233
    %v4370 = vunpack.c.l.b16 %v4234
    %v4371 = vunpack.c.l.b16 %v4235
    %v4372 = vunpack.c.l.b16 %v4236
    %v4373 = vunpack.c.l.b16 %v4237
    %v4374 = vunpack.c.l.b16 %v4238
    %v4375 = vunpack.c.l.b16 %v4239
    %v4376 = vunpack.c.l.b16 %v4240
    %v4377 = vunpack.c.l.b16 %v4241
    %v4378 = vunpack.c.l.b16 %v4242
    %v4379 = vunpack.c.l.b16 %v4243
    %v4380 = vunpack.c.l.b16 %v4244
    %v4381 = vunpack.c.l.b16 %v4245
    %v4382 = vunpack.c.l.b16 %v4246
    %v4383 = vunpack.c.l.b16 %v4247
    %v4384 = vunpack.c.l.b16 %v4248
    %v4385 = vunpack.c.l.b16 %v4249
    %v4386 = vunpack.c.l.b16 %v4250
    %v4387 = vunpack.c.l.b16 %v4251
    %v4388 = vunpack.c.l.b16 %v4252
    %v4389 = vunpack.c.l.b16 %v4253
    %v4390 = vunpack.c.l.b16 %v4254
    %v4391 = vunpack.c.l.b16 %v4255
    %v4392 = vunpack.c.l.b16 %v4256
    %v4393 = vunpack.c.l.b16 %v4257
    %v4394 = vunpack.c.l.b16 %v4258
    %v4395 = vunpack.c.l.b16 %v4259
    %v4396 = vunpack.c.l.b16 %v4260
    %v4397 = vunpack.c.l.b16 %v4261
    %v4398 = vunpack.c.l.b16 %v4262
    %v4399 = vunpack.c.l.b16 %v4263
    %v4400 = vunpack.c.l.b16 %v4264
    %v4401 = vunpack.c.l.b16 %v4265
    %v4402 = vunpack.c.l.b16 %v4266
    %v4403 = vunpack.c.l.b16 %v4267
    %v4404 = vunpack.c.l.b16 %v4268
    %v4405 = vunpack.c.l.b16 %v4269
    %v4406 = vunpack.c.l.b16 %v4270
    %v4407 = vunpack.c.l.b16 %v4271
    %v4408 = vunpack.c.l.b16 %v4272
    %v4409 = vunpack.c.l.b16 %v4273
    %v4410 = vunpack.c.l.b16 %v4274
    %v4411 = vunpack.c.l.b16 %v4275
    %v4412 = vunpack.c.l.b16 %v4276
    %v4413 = vunpack.c.l.b16 %v4277
    %v4414 = vunpack.c.l.b16 %v4278
    %v4415 = vunpack.c.l.b16 %v4279
    %v4416 = vunpack.c.l.b16 %v4280
    %v4417 = vunpack.c.l.b16 %v4281
    %v4418 = vunpack.c.l.b16 %v4282
    %v4419 = vunpack.c.l.b16 %v4283
    %v4420 = vunpack.c.l.b16 %v4284
    %v4421 = vunpack.c.l.b16 %v4285
    %v4422 = vunpack.c.l.b16 %v4286
    %v4423 = vunpack.c.l.b16 %v4287
    %v4424 = vunpack.c.l.b16 %v4288
    %v4425 = vunpack.c.l.b16 %v4289
    %v4426 = vunpack.c.l.b16 %v4290
    %v4427 = vunpack.c.l.b16 %v4291
    %v4428 = vunpack.c.l.b16 %v4292
    %v4429 = vunpack.c.l.b16 %v4293
    %v4430 = vunpack.c.l.b16 %v4294
    %v4431 = vunpack.c.l.b16 %v4295
    %v4432 = vpack.c.b16 %v4369, %v4368
    %v4433 = vpack.c.b16 %v4371, %v4370
    %v4434 = vpack.c.b16 %v4373, %v4372
    %v4435 = vpack.c.b16 %v4375, %v4374
    %v4436 = vpack.c.b16 %v4377, %v4376
    %v4437 = vpack.c.b16 %v4379, %v4378
    %v4438 = vpack.c.b16 %v4381, %v4380
    %v4439 = vpack.c.b16 %v4383, %v4382
    %v4440 = vpack.c.b16 %v4385, %v4384
    %v4441 = vpack.c.b16 %v4387, %v4386
    %v4442 = vpack.c.b16 %v4389, %v4388
    %v4443 = vpack.c.b16 %v4391, %v4390
    %v4444 = vpack.c.b16 %v4393, %v4392
    %v4445 = vpack.c.b16 %v4395, %v4394
    %v4446 = vpack.c.b16 %v4397, %v4396
    %v4447 = vpack.c.b16 %v4399, %v4398
    %v4448 = vpack.c.b16 %v4401, %v4400
    %v4449 = vpack.c.b16 %v4403, %v4402
    %v4450 = vpack.c.b16 %v4405, %v4404
    %v4451 = vpack.c.b16 %v4407, %v4406
    %v4452 = vpack.c.b16 %v4409, %v4408
    %v4453 = vpack.c.b16 %v4411, %v4410
    %v4454 = vpack.c.b16 %v4413, %v4412
    %v4455 = vpack.c.b16 %v4415, %v4414
    %v4456 = vpack.c.b16 %v4417, %v4416
    %v4457 = vpack.c.b16 %v4419, %v4418
    %v4458 = vpack.c.b16 %v4421, %v4420
    %v4459 = vpack.c.b16 %v4423, %v4422
    %v4460 = vpack.c.b16 %v4425, %v4424
    %v4461 = vpack.c.b16 %v4427, %v4426
    %v4462 = vpack.c.b16 %v4429, %v4428
    %v4463 = vpack.c.b16 %v4431, %v4430
    %4496 = vmatprep.subr.bf16.mxu0 0
    %4497 = vmatpush1.bf16.msra.mxu0 %v4439
    %4498 = vmatprep.subr.bf16.mxu0 0
    %4499 = vmatpush1.bf16.msra.mxu0 %v4438
    %4500 = vmatprep.subr.bf16.mxu0 0
    %4501 = vmatpush1.bf16.msra.mxu0 %v4437
    %4502 = vmatprep.subr.bf16.mxu0 0
    %4503 = vmatpush1.bf16.msra.mxu0 %v4436
    %4504 = vmatprep.subr.bf16.mxu0 0
    %4505 = vmatpush1.bf16.msra.mxu0 %v4435
    %4506 = vmatprep.subr.bf16.mxu0 0
    %4507 = vmatpush1.bf16.msra.mxu0 %v4434
    %4508 = vmatprep.subr.bf16.mxu0 0
    %4509 = vmatpush1.bf16.msra.mxu0 %v4433
    %4510 = vmatprep.subr.bf16.mxu0 0
    %4511 = vmatpush1.bf16.msra.mxu0 %v4432
    %4512 = vmatprep.subr.bf16.mxu0 0
    %4513 = vmatpush2.bf16.msra.mxu0 %v4447
    %4514 = vmatprep.subr.bf16.mxu0 0
    %4515 = vmatpush2.bf16.msra.mxu0 %v4446
    %4516 = vmatprep.subr.bf16.mxu0 0
    %4517 = vmatpush2.bf16.msra.mxu0 %v4445
    %4518 = vmatprep.subr.bf16.mxu0 0
    %4519 = vmatpush2.bf16.msra.mxu0 %v4444
    %4520 = vmatprep.subr.bf16.mxu0 0
    %4521 = vmatpush2.bf16.msra.mxu0 %v4443
    %4522 = vmatprep.subr.bf16.mxu0 0
    %4523 = vmatpush2.bf16.msra.mxu0 %v4442
    %4524 = vmatprep.subr.bf16.mxu0 0
    %4525 = vmatpush2.bf16.msra.mxu0 %v4441
    %4526 = vmatprep.subr.bf16.mxu0 0
    %4527 = vmatpush2.bf16.msra.mxu0 %v4440
    %4528 = vmatprep.mubr.bf16.mxu0 %v4228
    %4529 = vmatmul.mubr.bf16.gmra.mxu0 %v4227
    %v4530 = vpop.f32.mrf.mxu0
    %v4531 = vadd.f32 %v4302, %v4530
    %v4532 = vpop.f32.mrf.mxu0
    %v4533 = vpop.f32.mrf.mxu0
    %v4534 = vadd.f32 %v4302, %v4533
    %v4535 = vpop.f32.mrf.mxu0
    %4536 = vdwg.mxu0
    %4537 = vmatprep.subr.bf16.mxu0 0
    %4538 = vmatpush1.bf16.msra.mxu0 %v4455
    %4539 = vmatprep.subr.bf16.mxu0 0
    %4540 = vmatpush1.bf16.msra.mxu0 %v4454
    %4541 = vmatprep.subr.bf16.mxu0 0
    %4542 = vmatpush1.bf16.msra.mxu0 %v4453
    %4543 = vmatprep.subr.bf16.mxu0 0
    %4544 = vmatpush1.bf16.msra.mxu0 %v4452
    %4545 = vmatprep.subr.bf16.mxu0 0
    %4546 = vmatpush1.bf16.msra.mxu0 %v4451
    %4547 = vmatprep.subr.bf16.mxu0 0
    %4548 = vmatpush1.bf16.msra.mxu0 %v4450
    %4549 = vmatprep.subr.bf16.mxu0 0
    %4550 = vmatpush1.bf16.msra.mxu0 %v4449
    %4551 = vmatprep.subr.bf16.mxu0 0
    %4552 = vmatpush1.bf16.msra.mxu0 %v4448
    %4553 = vmatprep.subr.bf16.mxu0 0
    %4554 = vmatpush2.bf16.msra.mxu0 %v4463
    %4555 = vmatprep.subr.bf16.mxu0 0
    %4556 = vmatpush2.bf16.msra.mxu0 %v4462
    %4557 = vmatprep.subr.bf16.mxu0 0
    %4558 = vmatpush2.bf16.msra.mxu0 %v4461
    %4559 = vmatprep.subr.bf16.mxu0 0
    %4560 = vmatpush2.bf16.msra.mxu0 %v4460
    %4561 = vmatprep.subr.bf16.mxu0 0
    %4562 = vmatpush2.bf16.msra.mxu0 %v4459
    %4563 = vmatprep.subr.bf16.mxu0 0
    %4564 = vmatpush2.bf16.msra.mxu0 %v4458
    %4565 = vmatprep.subr.bf16.mxu0 0
    %4566 = vmatpush2.bf16.msra.mxu0 %v4457
    %4567 = vmatprep.subr.bf16.mxu0 0
    %4568 = vmatpush2.bf16.msra.mxu0 %v4456
    %4569 = vmatprep.mubr.bf16.mxu0 %v4230
    %4570 = vmatmul.mubr.bf16.gmra.mxu0 %v4229
    %v4571 = vpop.f32.mrf.mxu0
    %v4572 = vadd.f32 %v4531, %v4571
    %v4573 = vpop.f32.mrf.mxu0
    %v4574 = vpop.f32.mrf.mxu0
    %v4575 = vadd.f32 %v4534, %v4574
    %v4576 = vpop.f32.mrf.mxu0
    %4577 = vdwg.mxu0
    %v4578 = vadd.f32 %v4572, %v2596
    %v4579 = vadd.f32 %v4575, %v2597
    %s4580 = scalar_lea.vmem [#allocation9], 1
    %v4581 = vld [vmem:[%s4580] sm:$0x1]
    %s4582 = scalar_lea.vmem [#allocation10], 1
    %v4583 = vld [vmem:[%s4582] sm:$0x1]
    %v4584 = vmul.f32 %v4578, %v236
    %v4585 = vmul.f32 %v4579, %v236
    %4586 = vadd.xlane.f32.xlu0 %v4584
    %v4587 = vpop.xlane.xlu0 %4586
    %4588 = vadd.xlane.f32.xlu0 %v4585
    %v4589 = vpop.xlane.xlu0 %4588
    %v4590 = vmul.f32 %v4587, 0.03125
    %v4591 = vmul.f32 %v4589, 0.03125
    %v4592 = vsub.f32 %v4578, %v4590
    %v4593 = vsub.f32 %v4579, %v4591
    %v4594 = vmul.f32 %v4592, %v236
    %v4595 = vmul.f32 %v4593, %v236
    %v4596 = vmul.f32 %v4594, %v4594
    %v4597 = vmul.f32 %v4595, %v4595
    %4598 = vadd.xlane.f32.xlu0 %v4596
    %v4599 = vpop.xlane.xlu0 %4598
    %4600 = vadd.xlane.f32.xlu0 %v4597
    %v4601 = vpop.xlane.xlu0 %4600
    %v4602 = vmul.f32 %v4599, 0.03125
    %v4603 = vmul.f32 %v4601, 0.03125
    %v4604 = vadd.f32 %v4602, 1e-12
    %v4605 = vadd.f32 %v4603, 1e-12
    %v4606 = vrsqrt.pop %v4604
    %v4607 = vrsqrt.pop %v4605
    %v4608 = vmul.f32 %v4594, %v4606
    %v4609 = vmul.f32 %v4595, %v4607
    %v4611 = vlaneseq
    %v4612 = vshrl.u32 %v4611, 7
    %v4613 = vsub.s32 0, %v4612
    %v4614 = vrot.slane %v4581, %v4613
    %v4616 = vmul.f32 %v4608, %v4614
    %v4617 = vmul.f32 %v4609, %v4614
    %v4619 = vlaneseq
    %v4620 = vshrl.u32 %v4619, 7
    %v4621 = vsub.s32 0, %v4620
    %v4622 = vrot.slane %v4583, %v4621
    %v4624 = vadd.f32 %v4616, %v4622
    %v4625 = vadd.f32 %v4617, %v4622
    %v4626 = vpack.c.bf16 %v4625, %v4624
    %s4627 = scalar_lea.vmem [#allocation12], 64
    %v4628 = vld [vmem:[%s4627] sm:$0xf]
    %v4629 = vld [vmem:[%s4627 + $0x4] sm:$0xf]
    %v4630 = vld [vmem:[%s4627 + $0x8] sm:$0xf]
    %v4631 = vld [vmem:[%s4627 + $0xc] sm:$0xf]
    %v4632 = vld [vmem:[%s4627 + $0x10] sm:$0xf]
    %v4633 = vld [vmem:[%s4627 + $0x14] sm:$0xf]
    %v4634 = vld [vmem:[%s4627 + $0x18] sm:$0xf]
    %v4635 = vld [vmem:[%s4627 + $0x1c] sm:$0xf]
    %v4636 = vld [vmem:[%s4627 + $0x20] sm:$0xf]
    %v4637 = vld [vmem:[%s4627 + $0x24] sm:$0xf]
    %v4638 = vld [vmem:[%s4627 + $0x28] sm:$0xf]
    %v4639 = vld [vmem:[%s4627 + $0x2c] sm:$0xf]
    %v4640 = vld [vmem:[%s4627 + $0x30] sm:$0xf]
    %v4641 = vld [vmem:[%s4627 + $0x34] sm:$0xf]
    %v4642 = vld [vmem:[%s4627 + $0x38] sm:$0xf]
    %v4643 = vld [vmem:[%s4627 + $0x3c] sm:$0xf]
    %s4644 = scalar_lea.vmem [#allocation13], 1
    %v4645 = vld [vmem:[%s4644] sm:$0x1]
    %v4647 = vlaneseq
    %v4648 = vshrl.u32 %v4647, 7
    %v4649 = vsub.s32 0, %v4648
    %v4650 = vrot.slane %v4645, %v4649
    %v4668 = vunpack.c.l.b16 %v4628
    %v4669 = vunpack.c.l.b16 %v4629
    %v4670 = vunpack.c.l.b16 %v4630
    %v4671 = vunpack.c.l.b16 %v4631
    %v4672 = vunpack.c.l.b16 %v4632
    %v4673 = vunpack.c.l.b16 %v4633
    %v4674 = vunpack.c.l.b16 %v4634
    %v4675 = vunpack.c.l.b16 %v4635
    %v4676 = vunpack.c.l.b16 %v4636
    %v4677 = vunpack.c.l.b16 %v4637
    %v4678 = vunpack.c.l.b16 %v4638
    %v4679 = vunpack.c.l.b16 %v4639
    %v4680 = vunpack.c.l.b16 %v4640
    %v4681 = vunpack.c.l.b16 %v4641
    %v4682 = vunpack.c.l.b16 %v4642
    %v4683 = vunpack.c.l.b16 %v4643
    %v4684 = vpack.c.b16 %v4669, %v4668
    %v4685 = vpack.c.b16 %v4671, %v4670
    %v4686 = vpack.c.b16 %v4673, %v4672
    %v4687 = vpack.c.b16 %v4675, %v4674
    %v4688 = vpack.c.b16 %v4677, %v4676
    %v4689 = vpack.c.b16 %v4679, %v4678
    %v4690 = vpack.c.b16 %v4681, %v4680
    %v4691 = vpack.c.b16 %v4683, %v4682
    %4700 = vmatprep.subr.bf16.mxu0 0
    %4701 = vmatpush1.bf16.msra.mxu0 %v4691
    %4702 = vmatprep.subr.bf16.mxu0 0
    %4703 = vmatpush1.bf16.msra.mxu0 %v4690
    %4704 = vmatprep.subr.bf16.mxu0 0
    %4705 = vmatpush1.bf16.msra.mxu0 %v4689
    %4706 = vmatprep.subr.bf16.mxu0 0
    %4707 = vmatpush1.bf16.msra.mxu0 %v4688
    %4708 = vmatprep.subr.bf16.mxu0 0
    %4709 = vmatpush1.bf16.msra.mxu0 %v4687
    %4710 = vmatprep.subr.bf16.mxu0 0
    %4711 = vmatpush1.bf16.msra.mxu0 %v4686
    %4712 = vmatprep.subr.bf16.mxu0 0
    %4713 = vmatpush1.bf16.msra.mxu0 %v4685
    %4714 = vmatprep.subr.bf16.mxu0 0
    %4715 = vmatpush1.bf16.msra.mxu0 %v4684
    %4716 = vmatprep.subr.bf16.mxu0 0
    %4717 = vmatpush2.bf16.msra.mxu0 0
    %4718 = vmatprep.subr.bf16.mxu0 0
    %4719 = vmatpush2.bf16.msra.mxu0 0
    %4720 = vmatprep.subr.bf16.mxu0 0
    %4721 = vmatpush2.bf16.msra.mxu0 0
    %4722 = vmatprep.subr.bf16.mxu0 0
    %4723 = vmatpush2.bf16.msra.mxu0 0
    %4724 = vmatprep.subr.bf16.mxu0 0
    %4725 = vmatpush2.bf16.msra.mxu0 0
    %4726 = vmatprep.subr.bf16.mxu0 0
    %4727 = vmatpush2.bf16.msra.mxu0 0
    %4728 = vmatprep.subr.bf16.mxu0 0
    %4729 = vmatpush2.bf16.msra.mxu0 0
    %4730 = vmatprep.subr.bf16.mxu0 0
    %4731 = vmatpush2.bf16.msra.mxu0 0
    %4732 = vmatprep.mubr.bf16.mxu0 0
    %4733 = vmatmul.mubr.bf16.gmra.mxu0 %v4626
    %v4734 = vpop.f32.mrf.mxu0
    %v4735 = vadd.f32 %v4650, %v4734
    %v4736 = vpop.f32.mrf.mxu0
    %v4737 = vpop.f32.mrf.mxu0
    %v4738 = vadd.f32 %v4650, %v4737
    %v4739 = vpop.f32.mrf.mxu0
    %4740 = vdwg.mxu0
    %v4741 = vmul.f32 %v4735, 0.5
    %v4742 = vmul.f32 %v4738, 0.5
    %v4743 = vmul.f32 %v4735, 0.044715
    %v4744 = vmul.f32 %v4738, 0.044715
    %v4745 = vmul.f32 %v4743, %v4735
    %v4746 = vmul.f32 %v4744, %v4738
    %v4747 = vmul.f32 %v4745, %v4735
    %v4748 = vmul.f32 %v4746, %v4738
    %v4749 = vadd.f32 %v4735, %v4747
    %v4750 = vadd.f32 %v4738, %v4748
    %v4751 = vmul.f32 %v4749, 0.7978846
    %v4752 = vmul.f32 %v4750, 0.7978846
    %v4753 = vtanh.pop %v4751
    %v4754 = vtanh.pop %v4752
    %v4755 = vadd.f32 %v4753, 1.0
    %v4756 = vadd.f32 %v4754, 1.0
    %v4757 = vmul.f32 %v4741, %v4755
    %v4758 = vmul.f32 %v4742, %v4756
    %v4759 = vpack.c.bf16 %v4758, %v4757
    %s4760 = scalar_lea.vmem [#allocation15], 64
    %v4761 = vld [vmem:[%s4760] sm:$0xf]
    %v4762 = vld [vmem:[%s4760 + $0x4] sm:$0xf]
    %v4763 = vld [vmem:[%s4760 + $0x8] sm:$0xf]
    %v4764 = vld [vmem:[%s4760 + $0xc] sm:$0xf]
    %v4765 = vld [vmem:[%s4760 + $0x10] sm:$0xf]
    %v4766 = vld [vmem:[%s4760 + $0x14] sm:$0xf]
    %v4767 = vld [vmem:[%s4760 + $0x18] sm:$0xf]
    %v4768 = vld [vmem:[%s4760 + $0x1c] sm:$0xf]
    %v4769 = vld [vmem:[%s4760 + $0x20] sm:$0xf]
    %v4770 = vld [vmem:[%s4760 + $0x24] sm:$0xf]
    %v4771 = vld [vmem:[%s4760 + $0x28] sm:$0xf]
    %v4772 = vld [vmem:[%s4760 + $0x2c] sm:$0xf]
    %v4773 = vld [vmem:[%s4760 + $0x30] sm:$0xf]
    %v4774 = vld [vmem:[%s4760 + $0x34] sm:$0xf]
    %v4775 = vld [vmem:[%s4760 + $0x38] sm:$0xf]
    %v4776 = vld [vmem:[%s4760 + $0x3c] sm:$0xf]
    %s4777 = scalar_lea.vmem [#allocation16], 1
    %v4778 = vld [vmem:[%s4777] sm:$0x1]
    %v4780 = vlaneseq
    %v4781 = vshrl.u32 %v4780, 7
    %v4782 = vsub.s32 0, %v4781
    %v4783 = vrot.slane %v4778, %v4782
    %v4801 = vunpack.c.l.b16 %v4761
    %v4802 = vunpack.c.l.b16 %v4762
    %v4803 = vunpack.c.l.b16 %v4763
    %v4804 = vunpack.c.l.b16 %v4764
    %v4805 = vunpack.c.l.b16 %v4765
    %v4806 = vunpack.c.l.b16 %v4766
    %v4807 = vunpack.c.l.b16 %v4767
    %v4808 = vunpack.c.l.b16 %v4768
    %v4809 = vunpack.c.l.b16 %v4769
    %v4810 = vunpack.c.l.b16 %v4770
    %v4811 = vunpack.c.l.b16 %v4771
    %v4812 = vunpack.c.l.b16 %v4772
    %v4813 = vunpack.c.l.b16 %v4773
    %v4814 = vunpack.c.l.b16 %v4774
    %v4815 = vunpack.c.l.b16 %v4775
    %v4816 = vunpack.c.l.b16 %v4776
    %v4817 = vpack.c.b16 %v4802, %v4801
    %v4818 = vpack.c.b16 %v4804, %v4803
    %v4819 = vpack.c.b16 %v4806, %v4805
    %v4820 = vpack.c.b16 %v4808, %v4807
    %v4821 = vpack.c.b16 %v4810, %v4809
    %v4822 = vpack.c.b16 %v4812, %v4811
    %v4823 = vpack.c.b16 %v4814, %v4813
    %v4824 = vpack.c.b16 %v4816, %v4815
    %4833 = vmatprep.subr.bf16.mxu0 0
    %4834 = vmatpush1.bf16.msra.mxu0 %v4824
    %4835 = vmatprep.subr.bf16.mxu0 0
    %4836 = vmatpush1.bf16.msra.mxu0 %v4823
    %4837 = vmatprep.subr.bf16.mxu0 0
    %4838 = vmatpush1.bf16.msra.mxu0 %v4822
    %4839 = vmatprep.subr.bf16.mxu0 0
    %4840 = vmatpush1.bf16.msra.mxu0 %v4821
    %4841 = vmatprep.subr.bf16.mxu0 0
    %4842 = vmatpush1.bf16.msra.mxu0 %v4820
    %4843 = vmatprep.subr.bf16.mxu0 0
    %4844 = vmatpush1.bf16.msra.mxu0 %v4819
    %4845 = vmatprep.subr.bf16.mxu0 0
    %4846 = vmatpush1.bf16.msra.mxu0 %v4818
    %4847 = vmatprep.subr.bf16.mxu0 0
    %4848 = vmatpush1.bf16.msra.mxu0 %v4817
    %4849 = vmatprep.subr.bf16.mxu0 0
    %4850 = vmatpush2.bf16.msra.mxu0 0
    %4851 = vmatprep.subr.bf16.mxu0 0
    %4852 = vmatpush2.bf16.msra.mxu0 0
    %4853 = vmatprep.subr.bf16.mxu0 0
    %4854 = vmatpush2.bf16.msra.mxu0 0
    %4855 = vmatprep.subr.bf16.mxu0 0
    %4856 = vmatpush2.bf16.msra.mxu0 0
    %4857 = vmatprep.subr.bf16.mxu0 0
    %4858 = vmatpush2.bf16.msra.mxu0 0
    %4859 = vmatprep.subr.bf16.mxu0 0
    %4860 = vmatpush2.bf16.msra.mxu0 0
    %4861 = vmatprep.subr.bf16.mxu0 0
    %4862 = vmatpush2.bf16.msra.mxu0 0
    %4863 = vmatprep.subr.bf16.mxu0 0
    %4864 = vmatpush2.bf16.msra.mxu0 0
    %4865 = vmatprep.mubr.bf16.mxu0 0
    %4866 = vmatmul.mubr.bf16.gmra.mxu0 %v4759
    %v4867 = vpop.f32.mrf.mxu0
    %v4868 = vadd.f32 %v4783, %v4867
    %v4869 = vpop.f32.mrf.mxu0
    %v4870 = vpop.f32.mrf.mxu0
    %v4871 = vadd.f32 %v4783, %v4870
    %v4872 = vpop.f32.mrf.mxu0
    %4873 = vdwg.mxu0
    %v4874 = vadd.f32 %v4868, %v4624
    %v4875 = vadd.f32 %v4871, %v4625
    %s4876 = scalar_lea.vmem [#allocation18], 1
    %v4877 = vld [vmem:[%s4876] sm:$0x1]
    %s4878 = scalar_lea.vmem [#allocation19], 1
    %v4879 = vld [vmem:[%s4878] sm:$0x1]
    %v4880 = vmul.f32 %v4874, %v236
    %v4881 = vmul.f32 %v4875, %v236
    %4882 = vadd.xlane.f32.xlu0 %v4880
    %v4883 = vpop.xlane.xlu0 %4882
    %4884 = vadd.xlane.f32.xlu0 %v4881
    %v4885 = vpop.xlane.xlu0 %4884
    %v4886 = vmul.f32 %v4883, 0.03125
    %v4887 = vmul.f32 %v4885, 0.03125
    %v4888 = vsub.f32 %v4874, %v4886
    %v4889 = vsub.f32 %v4875, %v4887
    %v4890 = vmul.f32 %v4888, %v236
    %v4891 = vmul.f32 %v4889, %v236
    %v4892 = vmul.f32 %v4890, %v4890
    %v4893 = vmul.f32 %v4891, %v4891
    %4894 = vadd.xlane.f32.xlu0 %v4892
    %v4895 = vpop.xlane.xlu0 %4894
    %4896 = vadd.xlane.f32.xlu0 %v4893
    %v4897 = vpop.xlane.xlu0 %4896
    %v4898 = vmul.f32 %v4895, 0.03125
    %v4899 = vmul.f32 %v4897, 0.03125
    %v4900 = vadd.f32 %v4898, 1e-12
    %v4901 = vadd.f32 %v4899, 1e-12
    %v4902 = vrsqrt.pop %v4900
    %v4903 = vrsqrt.pop %v4901
    %v4904 = vmul.f32 %v4890, %v4902
    %v4905 = vmul.f32 %v4891, %v4903
    %v4907 = vlaneseq
    %v4908 = vshrl.u32 %v4907, 7
    %v4909 = vsub.s32 0, %v4908
    %v4910 = vrot.slane %v4877, %v4909
    %v4912 = vmul.f32 %v4904, %v4910
    %v4913 = vmul.f32 %v4905, %v4910
    %v4915 = vlaneseq
    %v4916 = vshrl.u32 %v4915, 7
    %v4917 = vsub.s32 0, %v4916
    %v4918 = vrot.slane %v4879, %v4917
    %v4920 = vadd.f32 %v4912, %v4918
    %v4921 = vadd.f32 %v4913, %v4918
    %v4922 = vpack.c.bf16 %v4921, %v4920
    %v4923 = vld [vmem:[%s16] sm:$0xf]
    %v4924 = vld [vmem:[%s16 + $0x4] sm:$0xf]
    %v4925 = vld [vmem:[%s16 + $0x8] sm:$0xf]
    %v4926 = vld [vmem:[%s16 + $0xc] sm:$0xf]
    %v4927 = vld [vmem:[%s16 + $0x10] sm:$0xf]
    %v4928 = vld [vmem:[%s16 + $0x14] sm:$0xf]
    %v4929 = vld [vmem:[%s16 + $0x18] sm:$0xf]
    %v4930 = vld [vmem:[%s16 + $0x1c] sm:$0xf]
    %v4931 = vld [vmem:[%s16 + $0x20] sm:$0xf]
    %v4932 = vld [vmem:[%s16 + $0x24] sm:$0xf]
    %v4933 = vld [vmem:[%s16 + $0x28] sm:$0xf]
    %v4934 = vld [vmem:[%s16 + $0x2c] sm:$0xf]
    %v4935 = vld [vmem:[%s16 + $0x30] sm:$0xf]
    %v4936 = vld [vmem:[%s16 + $0x34] sm:$0xf]
    %v4937 = vld [vmem:[%s16 + $0x38] sm:$0xf]
    %v4938 = vld [vmem:[%s16 + $0x3c] sm:$0xf]
    %v4939 = vld [vmem:[#allocation21] sm:$0x1]
    %v4941 = vlaneseq
    %v4942 = vshrl.u32 %v4941, 7
    %v4943 = vsub.s32 0, %v4942
    %v4944 = vrot.slane %v4939, %v4943
    %v4962 = vunpack.c.l.b16 %v4923
    %v4963 = vunpack.c.l.b16 %v4924
    %v4964 = vunpack.c.l.b16 %v4925
    %v4965 = vunpack.c.l.b16 %v4926
    %v4966 = vunpack.c.l.b16 %v4927
    %v4967 = vunpack.c.l.b16 %v4928
    %v4968 = vunpack.c.l.b16 %v4929
    %v4969 = vunpack.c.l.b16 %v4930
    %v4970 = vunpack.c.l.b16 %v4931
    %v4971 = vunpack.c.l.b16 %v4932
    %v4972 = vunpack.c.l.b16 %v4933
    %v4973 = vunpack.c.l.b16 %v4934
    %v4974 = vunpack.c.l.b16 %v4935
    %v4975 = vunpack.c.l.b16 %v4936
    %v4976 = vunpack.c.l.b16 %v4937
    %v4977 = vunpack.c.l.b16 %v4938
    %v4978 = vpack.c.b16 %v4963, %v4962
    %v4979 = vpack.c.b16 %v4965, %v4964
    %v4980 = vpack.c.b16 %v4967, %v4966
    %v4981 = vpack.c.b16 %v4969, %v4968
    %v4982 = vpack.c.b16 %v4971, %v4970
    %v4983 = vpack.c.b16 %v4973, %v4972
    %v4984 = vpack.c.b16 %v4975, %v4974
    %v4985 = vpack.c.b16 %v4977, %v4976
    %4994 = vmatprep.subr.bf16.mxu0 0
    %4995 = vmatpush1.bf16.msra.mxu0 %v4985
    %4996 = vmatprep.subr.bf16.mxu0 0
    %4997 = vmatpush1.bf16.msra.mxu0 %v4984
    %4998 = vmatprep.subr.bf16.mxu0 0
    %4999 = vmatpush1.bf16.msra.mxu0 %v4983
    %5000 = vmatprep.subr.bf16.mxu0 0
    %5001 = vmatpush1.bf16.msra.mxu0 %v4982
    %5002 = vmatprep.subr.bf16.mxu0 0
    %5003 = vmatpush1.bf16.msra.mxu0 %v4981
    %5004 = vmatprep.subr.bf16.mxu0 0
    %5005 = vmatpush1.bf16.msra.mxu0 %v4980
    %5006 = vmatprep.subr.bf16.mxu0 0
    %5007 = vmatpush1.bf16.msra.mxu0 %v4979
    %5008 = vmatprep.subr.bf16.mxu0 0
    %5009 = vmatpush1.bf16.msra.mxu0 %v4978
    %5010 = vmatprep.subr.bf16.mxu0 0
    %5011 = vmatpush2.bf16.msra.mxu0 0
    %5012 = vmatprep.subr.bf16.mxu0 0
    %5013 = vmatpush2.bf16.msra.mxu0 0
    %5014 = vmatprep.subr.bf16.mxu0 0
    %5015 = vmatpush2.bf16.msra.mxu0 0
    %5016 = vmatprep.subr.bf16.mxu0 0
    %5017 = vmatpush2.bf16.msra.mxu0 0
    %5018 = vmatprep.subr.bf16.mxu0 0
    %5019 = vmatpush2.bf16.msra.mxu0 0
    %5020 = vmatprep.subr.bf16.mxu0 0
    %5021 = vmatpush2.bf16.msra.mxu0 0
    %5022 = vmatprep.subr.bf16.mxu0 0
    %5023 = vmatpush2.bf16.msra.mxu0 0
    %5024 = vmatprep.subr.bf16.mxu0 0
    %5025 = vmatpush2.bf16.msra.mxu0 0
    %5026 = vmatprep.mubr.bf16.mxu0 0
    %5027 = vmatmul.mubr.bf16.gmra.mxu0 %v4922
    %v5028 = vpop.f32.mrf.mxu0
    %v5029 = vadd.f32 %v4944, %v5028
    %v5030 = vpop.f32.mrf.mxu0
    %v5031 = vpop.f32.mrf.mxu0
    %v5032 = vadd.f32 %v4944, %v5031
    %v5033 = vpop.f32.mrf.mxu0
    %5034 = vdwg.mxu0
    %5035 = vst [vmem:[%s18] sm:$0xff] %v5029
    %5036 = vst [vmem:[%s18 + $0x8] sm:$0xff] %v5032
    // Predicated region
    $region126: #{pipeline_parallel_bert_forward.1} parent=1 // pred_check
      _
    $region127: #{pipeline_parallel_bert_forward.1} parent=1 // pred_check_branch
      %5038 = sbr.rel (0) target = $region129
    $region128: #{pipeline_parallel_bert_forward.1} parent=1 // pred_region
      _
    $region129: #{pipeline_parallel_bert_forward.1} parent=1 // pred_fallthru
      _
    // Predicated region
    $region130: #{pipeline_parallel_bert_forward.1} parent=1 // pred_check
      _
    $region131: #{pipeline_parallel_bert_forward.1} parent=1 // pred_check_branch
      %5040 = sbr.rel (0) target = $region133
    $region132: #{pipeline_parallel_bert_forward.1} parent=1 // pred_region
      _
    $region133: #{pipeline_parallel_bert_forward.1} parent=1 // pred_fallthru
      _
    %5041 = vsyncpa [#allocation3], 1
    %5042 = vsyncpa [#allocation5], 1
    %5043 = vsyncpa [#allocation8], 1
    %5044 = vsyncpa [#allocation11], 1
    %5045 = vsyncpa [#allocation14], 1
    %5046 = vsyncpa [#allocation17], 1
    %5047 = vsyncpa [#allocation20], 1

</llo_original>
